<compile_context>
chip_gen: v7x
topology: tpu7x:2x2x1
jax: 0.10.0
libtpu: 0.0.40
codegen_flags: <defaults>
</compile_context>

<pallas_src>
import functools

import jax
import jax.numpy as jnp
from jax import lax
from jax.experimental import pallas as pl
from jax.experimental.pallas import tpu as pltpu


_VMEM_BUDGET_BYTES = 24 * 1024 * 1024     # per-step working set (v7x-safe)
_VMEM_LIMIT_BYTES = 32 * 1024 * 1024      # scoped VMEM request (<= all gens)


def _convlstm_kernel(cols_ref, c_ref, w_ref, peep_if_ref, wco_ref, out_ref, *,
                     CH):
    # One fused conv-as-matmul for all 4 gates (+ folded bias) of this tile:
    #   (TR, KCp) bf16 @ (KCp, 4*CH) bf16 -> (TR, 4*CH) f32 on the MXU.
    acc = jnp.dot(cols_ref[...], w_ref[...],
                  preferred_element_type=jnp.float32)

    c_prev = c_ref[...]                                     # (TR, CH)  f32
    # i/f peepholes + sigmoid at 2*CH lane width: one mul/add/sigmoid stream
    # for both gates instead of two lane-sparse (TR, CH) streams.
    c2 = jnp.concatenate([c_prev, c_prev], axis=-1)         # (TR, 2*CH)
    sig_if = jax.nn.sigmoid(acc[:, :2 * CH] + c2 * peep_if_ref[...])
    ci = sig_if[:, :CH]
    cf = sig_if[:, CH:]

    gc = acc[:, 2 * CH:3 * CH]
    go = acc[:, 3 * CH:]
    cc = cf * c_prev + ci * jnp.tanh(gc)
    # o-gate peephole uses the NEW cell state, so it cannot be pre-fused.
    co = jax.nn.sigmoid(go + cc * wco_ref[...])

    # Lane-fused store: [ch | cc] in a single (TR, 2*CH) block.
    out_ref[...] = jnp.concatenate([co * jnp.tanh(cc), cc], axis=-1)


def _im2col_taps(a_nhwc, K):
    """K*K shifted 'same'-padding views of (B, H, W, C), tap order (u, v)."""
    B, H, W, C = a_nhwc.shape
    p = (K - 1) // 2
    ap = jnp.pad(a_nhwc, ((0, 0), (p, p), (p, p), (0, 0)))
    return [ap[:, u:u + H, v:v + W, :] for u in range(K) for v in range(K)]


def _divisors(n):
    ds = set()
    i = 1
    while i * i <= n:
        if n % i == 0:
            ds.add(i)
            ds.add(n // i)
        i += 1
    return sorted(ds, reverse=True)


def _tensorcore_count():
    """Best-effort TensorCores-per-chip (2 on v7x-class parts, else 1)."""
    try:
        kind = jax.devices()[0].device_kind.lower()
    except Exception:
        return 1
    return 2 if "v7" in kind else 1


def _pick_row_tile(rows, KCp, CH, min_steps):
    """Largest row tile dividing `rows` whose double-buffered per-step VMEM
    footprint fits the budget, while giving at least `min_steps` grid steps."""
    def step_bytes(tr):
        cols_b = tr * KCp * 2                            # bf16 columns
        vec_b = tr * (CH + 2 * CH + CH + 2 * CH) * 4     # c, [Wci|Wcf], Wco, out
        w_b = KCp * 4 * CH * 2                           # fused bf16 weights
        return 2 * (cols_b + vec_b) + 2 * w_b            # double-buffered

    divs = _divisors(rows)                               # descending
    for ms in (min_steps, 1):
        for align in (16, 8):                            # bf16 sublane tile 1st
            for t in divs:
                if t % align or rows // t < ms:
                    continue
                if step_bytes(t) > _VMEM_BUDGET_BYTES:
                    continue
                return t
    for t in reversed(divs):                             # ascending fallback
        if t % 8 == 0:
            return t
    return rows


def conv_lstm_cell_forward(x_nhwc, h_nhwc, c_nhwc, wx, wh, bias,
                           wci, wcf, wco):
    """One ConvLSTMCell step.

    Args:
      x_nhwc: (B, H, W, Cin) input.
      h_nhwc, c_nhwc: (B, H, W, CH) previous hidden / cell state.
      wx: (K, K, Cin, 4*CH) HWIO conv weights, gates [i|f|c|o] on last axis.
      wh: (K, K, CH, 4*CH)  HWIO conv weights, gates [i|f|c|o] on last axis.
      bias: (4*CH,) bias of the Wx* convs (Wh* convs have no bias).
      wci, wcf, wco: (H, W, CH) peephole weights.
    Returns (ch, cc), each (B, H, W, CH) float32 in NHWC.
    """
    B, H, W, Cin = x_nhwc.shape
    CH = h_nhwc.shape[-1]
    K = wx.shape[0]
    assert wx.shape == (K, K, Cin, 4 * CH)
    assert wh.shape == (K, K, CH, 4 * CH)
    assert bias.shape == (4 * CH,)
    assert K % 2 == 1                       # 'same' padding assumes odd kernel
    assert (H * W) % 8 == 0

    rows = B * H * W                        # batch folded into the row axis
    KC = K * K * (Cin + CH)
    KCp = ((KC + 1 + 127) // 128) * 128     # lane-dense contraction, >=1 spare
    pad_extra = KCp - KC                    # spare rows (bias + zeros)

    # im2col in bf16 (MXU-native operands), built directly at KCp width with a
    # 1.0 column at index KC that activates the bias row of the fused weights.
    parts = (_im2col_taps(x_nhwc.astype(jnp.bfloat16), K)
             + _im2col_taps(h_nhwc.astype(jnp.bfloat16), K)
             + [jnp.ones((B, H, W, 1), jnp.bfloat16)])
    if pad_extra > 1:
        parts.append(jnp.zeros((B, H, W, pad_extra - 1), jnp.bfloat16))
    cols = jnp.concatenate(parts, axis=-1).reshape(rows, KCp)

    # Fuse x/h weights (contraction axis) and gates (lane axis); fold the bias
    # into contraction row KC.
    w_parts = [wx.reshape(K * K * Cin, 4 * CH).astype(jnp.float32),
               wh.reshape(K * K * CH, 4 * CH).astype(jnp.float32),
               bias.astype(jnp.float32).reshape(1, 4 * CH)]
    if pad_extra > 1:
        w_parts.append(jnp.zeros((pad_extra - 1, 4 * CH), jnp.float32))
    w_all = jnp.concatenate(w_parts, axis=0).astype(jnp.bfloat16)

    c2d = c_nhwc.astype(jnp.float32).reshape(rows, CH)
    # Peepholes broadcast over batch so a row tile may span batch elements.
    peep_if = jnp.concatenate([wci, wcf], axis=-1).astype(jnp.float32)
    peep_if = jnp.broadcast_to(peep_if.reshape(1, H * W, 2 * CH),
                               (B, H * W, 2 * CH)).reshape(rows, 2 * CH)
    wco2d = jnp.broadcast_to(wco.astype(jnp.float32).reshape(1, H * W, CH),
                             (B, H * W, CH)).reshape(rows, CH)

    TR = _pick_row_tile(rows, KCp, CH, min_steps=_tensorcore_count())
    n_steps = rows // TR

    kernel = functools.partial(_convlstm_kernel, CH=CH)
    row_blk = lambda i: (i, 0)
    shared = lambda i: (0, 0)

    out2d = pl.pallas_call(
        kernel,
        out_shape=jax.ShapeDtypeStruct((rows, 2 * CH), jnp.float32),
        grid=(n_steps,),
        in_specs=[
            pl.BlockSpec((TR, KCp), row_blk),           # fused x|h|bias columns
            pl.BlockSpec((TR, CH), row_blk),            # c (prev)
            pl.BlockSpec((KCp, 4 * CH), shared),        # fused weights + bias
            pl.BlockSpec((TR, 2 * CH), row_blk),        # [Wci | Wcf]
            pl.BlockSpec((TR, CH), row_blk),            # Wco
        ],
        out_specs=pl.BlockSpec((TR, 2 * CH), row_blk),  # [ch | cc]
        compiler_params=pltpu.CompilerParams(
            dimension_semantics=("parallel",),
            vmem_limit_bytes=_VMEM_LIMIT_BYTES),
    )(cols, c2d, w_all, peep_if, wco2d)

    ch = out2d[:, :CH].reshape(B, H, W, CH)
    cc = out2d[:, CH:].reshape(B, H, W, CH)
    return ch, cc


def _ref_forward(x_nhwc, h, c, gate_wx, gate_wh, gate_b, wci, wcf, wco,
                 conv_dtype=jnp.float32, conv_precision=None,
                 bias_dtype=jnp.float32):
    """Pure-JAX reference matching the PyTorch forward (NHWC layout)."""
    def conv(inp, w_hwio):
        return lax.conv_general_dilated(
            inp.astype(conv_dtype), w_hwio.astype(conv_dtype),
            window_strides=(1, 1), padding="SAME",
            dimension_numbers=("NHWC", "HWIO", "NHWC"),
            preferred_element_type=jnp.float32,
            precision=conv_precision)

    qb = lambda b: jnp.asarray(b).astype(bias_dtype).astype(jnp.float32)
    wxi, wxf, wxc, wxo = gate_wx
    whi, whf, whc, who = gate_wh
    bi, bf_, bc, bo = gate_b
    ci = jax.nn.sigmoid(conv(x_nhwc, wxi) + qb(bi) + conv(h, whi) + c * wci)
    cf = jax.nn.sigmoid(conv(x_nhwc, wxf) + qb(bf_) + conv(h, whf) + c * wcf)
    cc = cf * c + ci * jnp.tanh(conv(x_nhwc, wxc) + qb(bc) + conv(h, whc))
    co = jax.nn.sigmoid(conv(x_nhwc, wxo) + qb(bo) + conv(h, who) + cc * wco)
    ch = co * jnp.tanh(cc)
    return ch, cc


if __name__ == "__main__":
    B, Cin, H, W = 2, 4, 16, 16     # PyTorch input x: (B, Cin, H, W) NCHW
    CH, K = 32, 3                   # hidden_channels (even), kernel_size

    root = jax.random.PRNGKey(0)
    ks = jax.random.split(root, 16)

    def uconv(key, cout, cin):
        bound = 1.0 / float((cin * K * K) ** 0.5)   # PyTorch default bound
        return jax.random.uniform(key, (cout, cin, K, K), jnp.float32,
                                  -bound, bound)

    def ubias(key, cin):
        bound = 1.0 / float((cin * K * K) ** 0.5)
        return jax.random.uniform(key, (CH,), jnp.float32, -bound, bound)

    # PyTorch-shaped parameters (OIHW), one per gate: Wxi/Wxf/Wxc/Wxo, Whi/...
    wx_oihw = [uconv(ks[i], CH, Cin) for i in range(4)]
    wh_oihw = [uconv(ks[4 + i], CH, CH) for i in range(4)]
    bx = [ubias(ks[8 + i], Cin) for i in range(4)]

    to_hwio = lambda w: jnp.transpose(w, (2, 3, 1, 0))     # OIHW -> HWIO
    gate_wx = [to_hwio(w) for w in wx_oihw]                # (K, K, Cin, CH)
    gate_wh = [to_hwio(w) for w in wh_oihw]                # (K, K, CH,  CH)

    wx = jnp.concatenate(gate_wx, axis=-1)                 # (K, K, Cin, 4*CH)
    wh = jnp.concatenate(gate_wh, axis=-1)                 # (K, K, CH,  4*CH)
    bias = jnp.concatenate(bx, axis=0)                     # (4*CH,)

    # Peephole weights Wci/Wcf/Wco: the PyTorch module lazily creates zeros.
    wci = jnp.zeros((H, W, CH), jnp.float32)
    wcf = jnp.zeros((H, W, CH), jnp.float32)
    wco = jnp.zeros((H, W, CH), jnp.float32)

    x_nchw = jax.random.normal(ks[12], (B, Cin, H, W), jnp.float32)
    x = jnp.transpose(x_nchw, (0, 2, 3, 1))                # NCHW -> NHWC

    # First forward: prev_hidden is None -> h = c = 0 (matches the module).
    h0 = jnp.zeros((B, H, W, CH), jnp.float32)
    c0 = jnp.zeros((B, H, W, CH), jnp.float32)

    fwd = jax.jit(conv_lstm_cell_forward)
    ch1, cc1 = fwd(x, h0, c0, wx, wh, bias, wci, wcf, wco)
    # Second forward with prev_hidden = (ch1, cc1), like the stateful module.
    ch2, cc2 = fwd(x, ch1, cc1, wx, wh, bias, wci, wcf, wco)
    jax.block_until_ready((ch1, cc1, ch2, cc2))

    # (a) Tight check vs a reference using the same bf16 MXU operands (and
    #     bf16-rounded bias, since the kernel folds the bias into the bf16
    #     contraction) with f32 accumulation.
    b_ch1, b_cc1 = _ref_forward(x, h0, c0, gate_wx, gate_wh, bx,
                                wci, wcf, wco, conv_dtype=jnp.bfloat16,
                                bias_dtype=jnp.bfloat16)
    b_ch2, b_cc2 = _ref_forward(x, b_ch1, b_cc1, gate_wx, gate_wh, bx,
                                wci, wcf, wco, conv_dtype=jnp.bfloat16,
                                bias_dtype=jnp.bfloat16)
    for got, want in ((ch1, b_ch1), (cc1, b_cc1), (ch2, b_ch2), (cc2, b_cc2)):
        assert jnp.allclose(got, want, atol=2e-3, rtol=2e-3), \
            float(jnp.max(jnp.abs(got - want)))

    # (b) Loose sanity check vs a full-f32 reference of the PyTorch forward
    #     (bf16 MXU operands introduce ~1e-3-level quantization).
    r_ch1, r_cc1 = _ref_forward(x, h0, c0, gate_wx, gate_wh, bx,
                                wci, wcf, wco,
                                conv_precision=lax.Precision.HIGHEST)
    r_ch2, r_cc2 = _ref_forward(x, r_ch1, r_cc1, gate_wx, gate_wh, bx,
                                wci, wcf, wco,
                                conv_precision=lax.Precision.HIGHEST)
    for got, want in ((ch1, r_ch1), (cc1, r_cc1), (ch2, r_ch2), (cc2, r_cc2)):
        assert jnp.allclose(got, want, atol=5e-2, rtol=5e-2), \
            float(jnp.max(jnp.abs(got - want)))

    # (c) Extra check with non-zero peepholes (as after training) so the
    #     Wci/Wcf/Wco paths are exercised, same bf16 operand convention.
    wci_r = 0.1 * jax.random.normal(ks[13], (H, W, CH), jnp.float32)
    wcf_r = 0.1 * jax.random.normal(ks[14], (H, W, CH), jnp.float32)
    wco_r = 0.1 * jax.random.normal(ks[15], (H, W, CH), jnp.float32)
    chp, ccp = fwd(x, ch1, cc1, wx, wh, bias, wci_r, wcf_r, wco_r)
    p_ch, p_cc = _ref_forward(x, ch1, cc1, gate_wx, gate_wh, bx,
                              wci_r, wcf_r, wco_r, conv_dtype=jnp.bfloat16,
                              bias_dtype=jnp.bfloat16)
    jax.block_until_ready((chp, ccp))
    for got, want in ((chp, p_ch), (ccp, p_cc)):
        assert jnp.allclose(got, want, atol=2e-3, rtol=2e-3), \
            float(jnp.max(jnp.abs(got - want)))

    print("KERNEL_OK")
</pallas_src>

<mosaic_0001>
module attributes {stable_mosaic.version = 11 : i64} {
  func.func @_convlstm_kernel(%arg0: i32, %arg1: memref<512x384xbf16, #tpu.memory_space<vmem>>, %arg2: memref<512x32xf32, #tpu.memory_space<vmem>>, %arg3: memref<384x128xbf16, #tpu.memory_space<vmem>>, %arg4: memref<512x64xf32, #tpu.memory_space<vmem>>, %arg5: memref<512x32xf32, #tpu.memory_space<vmem>>, %arg6: memref<512x64xf32, #tpu.memory_space<vmem>>) attributes {dimension_semantics = [#tpu.dimension_semantics<parallel>], iteration_bounds = array<i64: 1>, scalar_prefetch = 0 : i64, scratch_operands = 0 : i64, tpu.core_type = #tpu.core_type<tc>, window_params = [{transform_indices = @transform_0, window_bounds = array<i64: 512, 384>}, {transform_indices = @transform_1, window_bounds = array<i64: 512, 32>}, {pipeline_mode = #tpu.pipeline_mode<synchronous>, transform_indices = @transform_2, window_bounds = array<i64: 384, 128>}, {transform_indices = @transform_3, window_bounds = array<i64: 512, 64>}, {transform_indices = @transform_4, window_bounds = array<i64: 512, 32>}, {transform_indices = @transform_5, window_bounds = array<i64: 512, 64>}]} {
    %c0 = arith.constant 0 : index
    %c0_0 = arith.constant 0 : index
    %0 = vector.load %arg1[%c0, %c0_0] : memref<512x384xbf16, #tpu.memory_space<vmem>>, vector<512x384xbf16>
    %c0_1 = arith.constant 0 : index
    %c0_2 = arith.constant 0 : index
    %1 = vector.load %arg3[%c0_1, %c0_2] : memref<384x128xbf16, #tpu.memory_space<vmem>>, vector<384x128xbf16>
    %cst = arith.constant dense<0.000000e+00> : vector<512x128xf32>
    %2 = tpu.matmul %0, %1, %cst {dimension_numbers = #tpu.dot_dimension_numbers<[1], [0], [0], [1], [0, 0, 1, 1], [], []>} : vector<512x384xbf16>, vector<384x128xbf16>, vector<512x128xf32> -> vector<512x128xf32>
    %c0_3 = arith.constant 0 : index
    %c0_4 = arith.constant 0 : index
    %3 = vector.load %arg2[%c0_3, %c0_4] : memref<512x32xf32, #tpu.memory_space<vmem>>, vector<512x32xf32>
    %4 = tpu.concatenate %3, %3 in 1 : vector<512x32xf32>, vector<512x32xf32> -> vector<512x64xf32>
    %5 = vector.extract_strided_slice %2 {offsets = [0, 0], sizes = [512, 64], strides = [1, 1]} : vector<512x128xf32> to vector<512x64xf32>
    %c0_5 = arith.constant 0 : index
    %c0_6 = arith.constant 0 : index
    %6 = vector.load %arg4[%c0_5, %c0_6] : memref<512x64xf32, #tpu.memory_space<vmem>>, vector<512x64xf32>
    %7 = arith.mulf %4, %6 : vector<512x64xf32>
    %8 = arith.addf %5, %7 : vector<512x64xf32>
    %9 = arith.negf %8 : vector<512x64xf32>
    %10 = math.exp %9 : vector<512x64xf32>
    %cst_7 = arith.constant 1.000000e+00 : f32
    %11 = vector.broadcast %cst_7 : f32 to vector<512x64xf32>
    %12 = arith.addf %11, %10 : vector<512x64xf32>
    %13 = arith.divf %11, %12 : vector<512x64xf32>
    %14 = vector.extract_strided_slice %13 {offsets = [0, 0], sizes = [512, 32], strides = [1, 1]} : vector<512x64xf32> to vector<512x32xf32>
    %15 = vector.extract_strided_slice %13 {offsets = [0, 32], sizes = [512, 32], strides = [1, 1]} : vector<512x64xf32> to vector<512x32xf32>
    %16 = vector.extract_strided_slice %2 {offsets = [0, 64], sizes = [512, 32], strides = [1, 1]} : vector<512x128xf32> to vector<512x32xf32>
    %17 = vector.extract_strided_slice %2 {offsets = [0, 96], sizes = [512, 32], strides = [1, 1]} : vector<512x128xf32> to vector<512x32xf32>
    %18 = arith.mulf %15, %3 : vector<512x32xf32>
    %19 = math.tanh %16 : vector<512x32xf32>
    %20 = arith.mulf %14, %19 : vector<512x32xf32>
    %21 = arith.addf %18, %20 : vector<512x32xf32>
    %c0_8 = arith.constant 0 : index
    %c0_9 = arith.constant 0 : index
    %22 = vector.load %arg5[%c0_8, %c0_9] : memref<512x32xf32, #tpu.memory_space<vmem>>, vector<512x32xf32>
    %23 = arith.mulf %21, %22 : vector<512x32xf32>
    %24 = arith.addf %17, %23 : vector<512x32xf32>
    %25 = arith.negf %24 : vector<512x32xf32>
    %26 = math.exp %25 : vector<512x32xf32>
    %cst_10 = arith.constant 1.000000e+00 : f32
    %27 = vector.broadcast %cst_10 : f32 to vector<512x32xf32>
    %28 = arith.addf %27, %26 : vector<512x32xf32>
    %29 = arith.divf %27, %28 : vector<512x32xf32>
    %30 = math.tanh %21 : vector<512x32xf32>
    %31 = arith.mulf %29, %30 : vector<512x32xf32>
    %32 = tpu.concatenate %31, %21 in 1 : vector<512x32xf32>, vector<512x32xf32> -> vector<512x64xf32>
    %c0_11 = arith.constant 0 : index
    %c0_12 = arith.constant 0 : index
    %33 = vector.load %arg6[%c0_11, %c0_12] : memref<512x64xf32, #tpu.memory_space<vmem>>, vector<512x64xf32>
    tpu.vector_store %arg6[%c0_11, %c0_12], %32 {strides = array<i32>} : memref<512x64xf32, #tpu.memory_space<vmem>>, vector<512x64xf32>,
    return
  }
  func.func @transform_0(%arg0: i32) -> (i32, i32) {
    %c0_i32 = arith.constant 0 : i32
    %c0_i32_0 = arith.constant 0 : i32
    return %arg0, %c0_i32 : i32, i32
  }
  func.func @transform_1(%arg0: i32) -> (i32, i32) {
    %c0_i32 = arith.constant 0 : i32
    %c0_i32_0 = arith.constant 0 : i32
    return %arg0, %c0_i32 : i32, i32
  }
  func.func @transform_2(%arg0: i32) -> (i32, i32) {
    %c0_i32 = arith.constant 0 : i32
    %c0_i32_0 = arith.constant 0 : i32
    %c0_i32_1 = arith.constant 0 : i32
    return %c0_i32, %c0_i32_0 : i32, i32
  }
  func.func @transform_3(%arg0: i32) -> (i32, i32) {
    %c0_i32 = arith.constant 0 : i32
    %c0_i32_0 = arith.constant 0 : i32
    return %arg0, %c0_i32 : i32, i32
  }
  func.func @transform_4(%arg0: i32) -> (i32, i32) {
    %c0_i32 = arith.constant 0 : i32
    %c0_i32_0 = arith.constant 0 : i32
    return %arg0, %c0_i32 : i32, i32
  }
  func.func @transform_5(%arg0: i32) -> (i32, i32) {
    %c0_i32 = arith.constant 0 : i32
    %c0_i32_0 = arith.constant 0 : i32
    return %arg0, %c0_i32 : i32, i32
  }
}

</mosaic_0001>

<llo_original>
// kernel: conv_lstm_cell_forward.1
$region0: #{conv_lstm_cell_forward.1}
  #allocation0 [shape = 'u32[]', space=smem, size = 0x4, offset = 0x4, fixed_abs, tag = 'smem constant byte address 0x4 - core index']
  #allocation1 [shape = 'u32[144,128]{1,0:T(1,128)}', space=vmem, size = 0x12000, scoped, tag = 'internal scratch']
  %s0 = inlined_call_operand.vmem [shape: bf16[512,384], index: 0, kind: input, shape index: {}]
  %s1 = inlined_call_operand.vmem [shape: f32[512,32], index: 1, kind: input, shape index: {}]
  %s2 = inlined_call_operand.vmem [shape: bf16[384,128], index: 2, kind: input, shape index: {}]
  %s3 = inlined_call_operand.vmem [shape: f32[512,64], index: 3, kind: input, shape index: {}]
  %s4 = inlined_call_operand.vmem [shape: f32[512,32], index: 4, kind: input, shape index: {}]
  %s5 = inlined_call_operand.vmem [shape: f32[512,64], index: 5, kind: output, shape index: {}]
  %s6 = sld [smem:[#allocation0]]
  $region30: #{conv_lstm_cell_forward.1} parent=0
    _
  %s8 = ssub.s32 1, %s6
  %s9 = scalar_select 0, %s8, %s6
  // Predicated region
  $region2: #{conv_lstm_cell_forward.1} parent=0 // pred_check
    _
  $region3: #{conv_lstm_cell_forward.1} parent=0 // pred_check_branch
    %11 = sbr.rel (0) target = $region5
  $region4: #{conv_lstm_cell_forward.1} parent=0 // pred_region
    _
  $region5: #{conv_lstm_cell_forward.1} parent=0 // pred_fallthru
    _
  // Predicated region
  $region6: #{conv_lstm_cell_forward.1} parent=0 // pred_check
    _
  $region7: #{conv_lstm_cell_forward.1} parent=0 // pred_check_branch
    %13 = sbr.rel (0) target = $region9
  $region8: #{conv_lstm_cell_forward.1} parent=0 // pred_region
    _
  $region9: #{conv_lstm_cell_forward.1} parent=0 // pred_fallthru
    _
  // Predicated region
  $region10: #{conv_lstm_cell_forward.1} parent=0 // pred_check
    _
  $region11: #{conv_lstm_cell_forward.1} parent=0 // pred_check_branch
    %15 = sbr.rel (0) target = $region13
  $region12: #{conv_lstm_cell_forward.1} parent=0 // pred_region
    _
  $region13: #{conv_lstm_cell_forward.1} parent=0 // pred_fallthru
    _
  // Predicated region
  $region14: #{conv_lstm_cell_forward.1} parent=0 // pred_check
    _
  $region15: #{conv_lstm_cell_forward.1} parent=0 // pred_check_branch
    %17 = sbr.rel (0) target = $region17
  $region16: #{conv_lstm_cell_forward.1} parent=0 // pred_region
    _
  $region17: #{conv_lstm_cell_forward.1} parent=0 // pred_fallthru
    _
  // Predicated region
  $region18: #{conv_lstm_cell_forward.1} parent=0 // pred_check
    _
  $region19: #{conv_lstm_cell_forward.1} parent=0 // pred_check_branch
    %19 = sbr.rel (0) target = $region21
  $region20: #{conv_lstm_cell_forward.1} parent=0 // pred_region
    _
  $region21: #{conv_lstm_cell_forward.1} parent=0 // pred_fallthru
    _
  %v21 = vld [vmem:[%s0] sm:$0xff]
  %v22 = vld [vmem:[%s0 + $0x8] sm:$0xf]
  %v23 = vld [vmem:[%s0 + $0xc] sm:$0xff]
  %v24 = vld [vmem:[%s0 + $0x14] sm:$0xf]
  %v25 = vld [vmem:[%s0 + $0x18] sm:$0xff]
  %v26 = vld [vmem:[%s0 + $0x20] sm:$0xf]
  %v27 = vld [vmem:[%s0 + $0x24] sm:$0xff]
  %v28 = vld [vmem:[%s0 + $0x2c] sm:$0xf]
  %v29 = vld [vmem:[%s0 + $0x30] sm:$0xff]
  %v30 = vld [vmem:[%s0 + $0x38] sm:$0xf]
  %v31 = vld [vmem:[%s0 + $0x3c] sm:$0xff]
  %v32 = vld [vmem:[%s0 + $0x44] sm:$0xf]
  %v33 = vld [vmem:[%s0 + $0x48] sm:$0xff]
  %v34 = vld [vmem:[%s0 + $0x50] sm:$0xf]
  %v35 = vld [vmem:[%s0 + $0x54] sm:$0xff]
  %v36 = vld [vmem:[%s0 + $0x5c] sm:$0xf]
  %v37 = vld [vmem:[%s0 + $0x60] sm:$0xff]
  %v38 = vld [vmem:[%s0 + $0x68] sm:$0xf]
  %v39 = vld [vmem:[%s0 + $0x6c] sm:$0xff]
  %v40 = vld [vmem:[%s0 + $0x74] sm:$0xf]
  %v41 = vld [vmem:[%s0 + $0x78] sm:$0xff]
  %v42 = vld [vmem:[%s0 + $0x80] sm:$0xf]
  %v43 = vld [vmem:[%s0 + $0x84] sm:$0xff]
  %v44 = vld [vmem:[%s0 + $0x8c] sm:$0xf]
  %v45 = vld [vmem:[%s0 + $0x90] sm:$0xff]
  %v46 = vld [vmem:[%s0 + $0x98] sm:$0xf]
  %v47 = vld [vmem:[%s0 + $0x9c] sm:$0xff]
  %v48 = vld [vmem:[%s0 + $0xa4] sm:$0xf]
  %v49 = vld [vmem:[%s0 + $0xa8] sm:$0xff]
  %v50 = vld [vmem:[%s0 + $0xb0] sm:$0xf]
  %v51 = vld [vmem:[%s0 + $0xb4] sm:$0xff]
  %v52 = vld [vmem:[%s0 + $0xbc] sm:$0xf]
  %v53 = vld [vmem:[%s0 + $0xc0] sm:$0xff]
  %v54 = vld [vmem:[%s0 + $0xc8] sm:$0xf]
  %v55 = vld [vmem:[%s0 + $0xcc] sm:$0xff]
  %v56 = vld [vmem:[%s0 + $0xd4] sm:$0xf]
  %v57 = vld [vmem:[%s0 + $0xd8] sm:$0xff]
  %v58 = vld [vmem:[%s0 + $0xe0] sm:$0xf]
  %v59 = vld [vmem:[%s0 + $0xe4] sm:$0xff]
  %v60 = vld [vmem:[%s0 + $0xec] sm:$0xf]
  %v61 = vld [vmem:[%s0 + $0xf0] sm:$0xff]
  %v62 = vld [vmem:[%s0 + $0xf8] sm:$0xf]
  %v63 = vld [vmem:[%s0 + $0xfc] sm:$0xff]
  %v64 = vld [vmem:[%s0 + $0x104] sm:$0xf]
  %v65 = vld [vmem:[%s0 + $0x108] sm:$0xff]
  %v66 = vld [vmem:[%s0 + $0x110] sm:$0xf]
  %v67 = vld [vmem:[%s0 + $0x114] sm:$0xff]
  %v68 = vld [vmem:[%s0 + $0x11c] sm:$0xf]
  %v69 = vld [vmem:[%s0 + $0x120] sm:$0xff]
  %v70 = vld [vmem:[%s0 + $0x128] sm:$0xf]
  %v71 = vld [vmem:[%s0 + $0x12c] sm:$0xff]
  %v72 = vld [vmem:[%s0 + $0x134] sm:$0xf]
  %v73 = vld [vmem:[%s0 + $0x138] sm:$0xff]
  %v74 = vld [vmem:[%s0 + $0x140] sm:$0xf]
  %v75 = vld [vmem:[%s0 + $0x144] sm:$0xff]
  %v76 = vld [vmem:[%s0 + $0x14c] sm:$0xf]
  %v77 = vld [vmem:[%s0 + $0x150] sm:$0xff]
  %v78 = vld [vmem:[%s0 + $0x158] sm:$0xf]
  %v79 = vld [vmem:[%s0 + $0x15c] sm:$0xff]
  %v80 = vld [vmem:[%s0 + $0x164] sm:$0xf]
  %v81 = vld [vmem:[%s0 + $0x168] sm:$0xff]
  %v82 = vld [vmem:[%s0 + $0x170] sm:$0xf]
  %v83 = vld [vmem:[%s0 + $0x174] sm:$0xff]
  %v84 = vld [vmem:[%s0 + $0x17c] sm:$0xf]
  %v85 = vld [vmem:[%s0 + $0x180] sm:$0xff]
  %v86 = vld [vmem:[%s0 + $0x188] sm:$0xf]
  %v87 = vld [vmem:[%s0 + $0x18c] sm:$0xff]
  %v88 = vld [vmem:[%s0 + $0x194] sm:$0xf]
  %v89 = vld [vmem:[%s0 + $0x198] sm:$0xff]
  %v90 = vld [vmem:[%s0 + $0x1a0] sm:$0xf]
  %v91 = vld [vmem:[%s0 + $0x1a4] sm:$0xff]
  %v92 = vld [vmem:[%s0 + $0x1ac] sm:$0xf]
  %v93 = vld [vmem:[%s0 + $0x1b0] sm:$0xff]
  %v94 = vld [vmem:[%s0 + $0x1b8] sm:$0xf]
  %v95 = vld [vmem:[%s0 + $0x1bc] sm:$0xff]
  %v96 = vld [vmem:[%s0 + $0x1c4] sm:$0xf]
  %v97 = vld [vmem:[%s0 + $0x1c8] sm:$0xff]
  %v98 = vld [vmem:[%s0 + $0x1d0] sm:$0xf]
  %v99 = vld [vmem:[%s0 + $0x1d4] sm:$0xff]
  %v100 = vld [vmem:[%s0 + $0x1dc] sm:$0xf]
  %v101 = vld [vmem:[%s0 + $0x1e0] sm:$0xff]
  %v102 = vld [vmem:[%s0 + $0x1e8] sm:$0xf]
  %v103 = vld [vmem:[%s0 + $0x1ec] sm:$0xff]
  %v104 = vld [vmem:[%s0 + $0x1f4] sm:$0xf]
  %v105 = vld [vmem:[%s0 + $0x1f8] sm:$0xff]
  %v106 = vld [vmem:[%s0 + $0x200] sm:$0xf]
  %v107 = vld [vmem:[%s0 + $0x204] sm:$0xff]
  %v108 = vld [vmem:[%s0 + $0x20c] sm:$0xf]
  %v109 = vld [vmem:[%s0 + $0x210] sm:$0xff]
  %v110 = vld [vmem:[%s0 + $0x218] sm:$0xf]
  %v111 = vld [vmem:[%s0 + $0x21c] sm:$0xff]
  %v112 = vld [vmem:[%s0 + $0x224] sm:$0xf]
  %v113 = vld [vmem:[%s0 + $0x228] sm:$0xff]
  %v114 = vld [vmem:[%s0 + $0x230] sm:$0xf]
  %v115 = vld [vmem:[%s0 + $0x234] sm:$0xff]
  %v116 = vld [vmem:[%s0 + $0x23c] sm:$0xf]
  %v117 = vld [vmem:[%s0 + $0x240] sm:$0xff]
  %v118 = vld [vmem:[%s0 + $0x248] sm:$0xf]
  %v119 = vld [vmem:[%s0 + $0x24c] sm:$0xff]
  %v120 = vld [vmem:[%s0 + $0x254] sm:$0xf]
  %v121 = vld [vmem:[%s0 + $0x258] sm:$0xff]
  %v122 = vld [vmem:[%s0 + $0x260] sm:$0xf]
  %v123 = vld [vmem:[%s0 + $0x264] sm:$0xff]
  %v124 = vld [vmem:[%s0 + $0x26c] sm:$0xf]
  %v125 = vld [vmem:[%s0 + $0x270] sm:$0xff]
  %v126 = vld [vmem:[%s0 + $0x278] sm:$0xf]
  %v127 = vld [vmem:[%s0 + $0x27c] sm:$0xff]
  %v128 = vld [vmem:[%s0 + $0x284] sm:$0xf]
  %v129 = vld [vmem:[%s0 + $0x288] sm:$0xff]
  %v130 = vld [vmem:[%s0 + $0x290] sm:$0xf]
  %v131 = vld [vmem:[%s0 + $0x294] sm:$0xff]
  %v132 = vld [vmem:[%s0 + $0x29c] sm:$0xf]
  %v133 = vld [vmem:[%s0 + $0x2a0] sm:$0xff]
  %v134 = vld [vmem:[%s0 + $0x2a8] sm:$0xf]
  %v135 = vld [vmem:[%s0 + $0x2ac] sm:$0xff]
  %v136 = vld [vmem:[%s0 + $0x2b4] sm:$0xf]
  %v137 = vld [vmem:[%s0 + $0x2b8] sm:$0xff]
  %v138 = vld [vmem:[%s0 + $0x2c0] sm:$0xf]
  %v139 = vld [vmem:[%s0 + $0x2c4] sm:$0xff]
  %v140 = vld [vmem:[%s0 + $0x2cc] sm:$0xf]
  %v141 = vld [vmem:[%s0 + $0x2d0] sm:$0xff]
  %v142 = vld [vmem:[%s0 + $0x2d8] sm:$0xf]
  %v143 = vld [vmem:[%s0 + $0x2dc] sm:$0xff]
  %v144 = vld [vmem:[%s0 + $0x2e4] sm:$0xf]
  %v145 = vld [vmem:[%s0 + $0x2e8] sm:$0xff]
  %v146 = vld [vmem:[%s0 + $0x2f0] sm:$0xf]
  %v147 = vld [vmem:[%s0 + $0x2f4] sm:$0xff]
  %v148 = vld [vmem:[%s0 + $0x2fc] sm:$0xf]
  %v149 = vld [vmem:[%s2] sm:$0xf]
  %v150 = vld [vmem:[%s2 + $0x4] sm:$0xf]
  %v151 = vld [vmem:[%s2 + $0x8] sm:$0xf]
  %v152 = vld [vmem:[%s2 + $0xc] sm:$0xf]
  %v153 = vld [vmem:[%s2 + $0x10] sm:$0xf]
  %v154 = vld [vmem:[%s2 + $0x14] sm:$0xf]
  %v155 = vld [vmem:[%s2 + $0x18] sm:$0xf]
  %v156 = vld [vmem:[%s2 + $0x1c] sm:$0xf]
  %v157 = vld [vmem:[%s2 + $0x20] sm:$0xf]
  %v158 = vld [vmem:[%s2 + $0x24] sm:$0xf]
  %v159 = vld [vmem:[%s2 + $0x28] sm:$0xf]
  %v160 = vld [vmem:[%s2 + $0x2c] sm:$0xf]
  %v161 = vld [vmem:[%s2 + $0x30] sm:$0xf]
  %v162 = vld [vmem:[%s2 + $0x34] sm:$0xf]
  %v163 = vld [vmem:[%s2 + $0x38] sm:$0xf]
  %v164 = vld [vmem:[%s2 + $0x3c] sm:$0xf]
  %v165 = vld [vmem:[%s2 + $0x40] sm:$0xf]
  %v166 = vld [vmem:[%s2 + $0x44] sm:$0xf]
  %v167 = vld [vmem:[%s2 + $0x48] sm:$0xf]
  %v168 = vld [vmem:[%s2 + $0x4c] sm:$0xf]
  %v169 = vld [vmem:[%s2 + $0x50] sm:$0xf]
  %v170 = vld [vmem:[%s2 + $0x54] sm:$0xf]
  %v171 = vld [vmem:[%s2 + $0x58] sm:$0xf]
  %v172 = vld [vmem:[%s2 + $0x5c] sm:$0xf]
  %v173 = vld [vmem:[%s2 + $0x60] sm:$0xf]
  %v174 = vld [vmem:[%s2 + $0x64] sm:$0xf]
  %v175 = vld [vmem:[%s2 + $0x68] sm:$0xf]
  %v176 = vld [vmem:[%s2 + $0x6c] sm:$0xf]
  %v177 = vld [vmem:[%s2 + $0x70] sm:$0xf]
  %v178 = vld [vmem:[%s2 + $0x74] sm:$0xf]
  %v179 = vld [vmem:[%s2 + $0x78] sm:$0xf]
  %v180 = vld [vmem:[%s2 + $0x7c] sm:$0xf]
  %v181 = vld [vmem:[%s2 + $0x80] sm:$0xf]
  %v182 = vld [vmem:[%s2 + $0x84] sm:$0xf]
  %v183 = vld [vmem:[%s2 + $0x88] sm:$0xf]
  %v184 = vld [vmem:[%s2 + $0x8c] sm:$0xf]
  %v185 = vld [vmem:[%s2 + $0x90] sm:$0xf]
  %v186 = vld [vmem:[%s2 + $0x94] sm:$0xf]
  %v187 = vld [vmem:[%s2 + $0x98] sm:$0xf]
  %v188 = vld [vmem:[%s2 + $0x9c] sm:$0xf]
  %v189 = vld [vmem:[%s2 + $0xa0] sm:$0xf]
  %v190 = vld [vmem:[%s2 + $0xa4] sm:$0xf]
  %v191 = vld [vmem:[%s2 + $0xa8] sm:$0xf]
  %v192 = vld [vmem:[%s2 + $0xac] sm:$0xf]
  %v193 = vld [vmem:[%s2 + $0xb0] sm:$0xf]
  %v194 = vld [vmem:[%s2 + $0xb4] sm:$0xf]
  %v195 = vld [vmem:[%s2 + $0xb8] sm:$0xf]
  %v196 = vld [vmem:[%s2 + $0xbc] sm:$0xf]
  %v325 = vunpack.c.l.b16 %v21
  %v326 = vunpack.c.h.b16 %v21
  %v327 = vunpack.c.l.b16 %v22
  %v328 = vunpack.c.l.b16 %v23
  %v329 = vunpack.c.h.b16 %v23
  %v330 = vunpack.c.l.b16 %v24
  %v331 = vunpack.c.l.b16 %v25
  %v332 = vunpack.c.h.b16 %v25
  %v333 = vunpack.c.l.b16 %v26
  %v334 = vunpack.c.l.b16 %v27
  %v335 = vunpack.c.h.b16 %v27
  %v336 = vunpack.c.l.b16 %v28
  %v337 = vunpack.c.l.b16 %v29
  %v338 = vunpack.c.h.b16 %v29
  %v339 = vunpack.c.l.b16 %v30
  %v340 = vunpack.c.l.b16 %v31
  %v341 = vunpack.c.h.b16 %v31
  %v342 = vunpack.c.l.b16 %v32
  %v343 = vunpack.c.l.b16 %v33
  %v344 = vunpack.c.h.b16 %v33
  %v345 = vunpack.c.l.b16 %v34
  %v346 = vunpack.c.l.b16 %v35
  %v347 = vunpack.c.h.b16 %v35
  %v348 = vunpack.c.l.b16 %v36
  %v349 = vunpack.c.l.b16 %v37
  %v350 = vunpack.c.h.b16 %v37
  %v351 = vunpack.c.l.b16 %v38
  %v352 = vunpack.c.l.b16 %v39
  %v353 = vunpack.c.h.b16 %v39
  %v354 = vunpack.c.l.b16 %v40
  %v355 = vunpack.c.l.b16 %v41
  %v356 = vunpack.c.h.b16 %v41
  %v357 = vunpack.c.l.b16 %v42
  %v358 = vunpack.c.l.b16 %v43
  %v359 = vunpack.c.h.b16 %v43
  %v360 = vunpack.c.l.b16 %v44
  %v361 = vunpack.c.l.b16 %v45
  %v362 = vunpack.c.h.b16 %v45
  %v363 = vunpack.c.l.b16 %v46
  %v364 = vunpack.c.l.b16 %v47
  %v365 = vunpack.c.h.b16 %v47
  %v366 = vunpack.c.l.b16 %v48
  %v367 = vunpack.c.l.b16 %v49
  %v368 = vunpack.c.h.b16 %v49
  %v369 = vunpack.c.l.b16 %v50
  %v370 = vunpack.c.l.b16 %v51
  %v371 = vunpack.c.h.b16 %v51
  %v372 = vunpack.c.l.b16 %v52
  %v373 = vunpack.c.l.b16 %v53
  %v374 = vunpack.c.h.b16 %v53
  %v375 = vunpack.c.l.b16 %v54
  %v376 = vunpack.c.l.b16 %v55
  %v377 = vunpack.c.h.b16 %v55
  %v378 = vunpack.c.l.b16 %v56
  %v379 = vunpack.c.l.b16 %v57
  %v380 = vunpack.c.h.b16 %v57
  %v381 = vunpack.c.l.b16 %v58
  %v382 = vunpack.c.l.b16 %v59
  %v383 = vunpack.c.h.b16 %v59
  %v384 = vunpack.c.l.b16 %v60
  %v385 = vunpack.c.l.b16 %v61
  %v386 = vunpack.c.h.b16 %v61
  %v387 = vunpack.c.l.b16 %v62
  %v388 = vunpack.c.l.b16 %v63
  %v389 = vunpack.c.h.b16 %v63
  %v390 = vunpack.c.l.b16 %v64
  %v391 = vunpack.c.l.b16 %v65
  %v392 = vunpack.c.h.b16 %v65
  %v393 = vunpack.c.l.b16 %v66
  %v394 = vunpack.c.l.b16 %v67
  %v395 = vunpack.c.h.b16 %v67
  %v396 = vunpack.c.l.b16 %v68
  %v397 = vunpack.c.l.b16 %v69
  %v398 = vunpack.c.h.b16 %v69
  %v399 = vunpack.c.l.b16 %v70
  %v400 = vunpack.c.l.b16 %v71
  %v401 = vunpack.c.h.b16 %v71
  %v402 = vunpack.c.l.b16 %v72
  %v403 = vunpack.c.l.b16 %v73
  %v404 = vunpack.c.h.b16 %v73
  %v405 = vunpack.c.l.b16 %v74
  %v406 = vunpack.c.l.b16 %v75
  %v407 = vunpack.c.h.b16 %v75
  %v408 = vunpack.c.l.b16 %v76
  %v409 = vunpack.c.l.b16 %v77
  %v410 = vunpack.c.h.b16 %v77
  %v411 = vunpack.c.l.b16 %v78
  %v412 = vunpack.c.l.b16 %v79
  %v413 = vunpack.c.h.b16 %v79
  %v414 = vunpack.c.l.b16 %v80
  %v415 = vunpack.c.l.b16 %v81
  %v416 = vunpack.c.h.b16 %v81
  %v417 = vunpack.c.l.b16 %v82
  %v418 = vunpack.c.l.b16 %v83
  %v419 = vunpack.c.h.b16 %v83
  %v420 = vunpack.c.l.b16 %v84
  %v421 = vunpack.c.l.b16 %v85
  %v422 = vunpack.c.h.b16 %v85
  %v423 = vunpack.c.l.b16 %v86
  %v424 = vunpack.c.l.b16 %v87
  %v425 = vunpack.c.h.b16 %v87
  %v426 = vunpack.c.l.b16 %v88
  %v427 = vunpack.c.l.b16 %v89
  %v428 = vunpack.c.h.b16 %v89
  %v429 = vunpack.c.l.b16 %v90
  %v430 = vunpack.c.l.b16 %v91
  %v431 = vunpack.c.h.b16 %v91
  %v432 = vunpack.c.l.b16 %v92
  %v433 = vunpack.c.l.b16 %v93
  %v434 = vunpack.c.h.b16 %v93
  %v435 = vunpack.c.l.b16 %v94
  %v436 = vunpack.c.l.b16 %v95
  %v437 = vunpack.c.h.b16 %v95
  %v438 = vunpack.c.l.b16 %v96
  %v439 = vunpack.c.l.b16 %v97
  %v440 = vunpack.c.h.b16 %v97
  %v441 = vunpack.c.l.b16 %v98
  %v442 = vunpack.c.l.b16 %v99
  %v443 = vunpack.c.h.b16 %v99
  %v444 = vunpack.c.l.b16 %v100
  %v445 = vunpack.c.l.b16 %v101
  %v446 = vunpack.c.h.b16 %v101
  %v447 = vunpack.c.l.b16 %v102
  %v448 = vunpack.c.l.b16 %v103
  %v449 = vunpack.c.h.b16 %v103
  %v450 = vunpack.c.l.b16 %v104
  %v451 = vunpack.c.l.b16 %v105
  %v452 = vunpack.c.h.b16 %v105
  %v453 = vunpack.c.l.b16 %v106
  %v454 = vunpack.c.l.b16 %v107
  %v455 = vunpack.c.h.b16 %v107
  %v456 = vunpack.c.l.b16 %v108
  %v457 = vunpack.c.l.b16 %v109
  %v458 = vunpack.c.h.b16 %v109
  %v459 = vunpack.c.l.b16 %v110
  %v460 = vunpack.c.l.b16 %v111
  %v461 = vunpack.c.h.b16 %v111
  %v462 = vunpack.c.l.b16 %v112
  %v463 = vunpack.c.l.b16 %v113
  %v464 = vunpack.c.h.b16 %v113
  %v465 = vunpack.c.l.b16 %v114
  %v466 = vunpack.c.l.b16 %v115
  %v467 = vunpack.c.h.b16 %v115
  %v468 = vunpack.c.l.b16 %v116
  %v469 = vunpack.c.l.b16 %v117
  %v470 = vunpack.c.h.b16 %v117
  %v471 = vunpack.c.l.b16 %v118
  %v472 = vunpack.c.l.b16 %v119
  %v473 = vunpack.c.h.b16 %v119
  %v474 = vunpack.c.l.b16 %v120
  %v475 = vunpack.c.l.b16 %v121
  %v476 = vunpack.c.h.b16 %v121
  %v477 = vunpack.c.l.b16 %v122
  %v478 = vunpack.c.l.b16 %v123
  %v479 = vunpack.c.h.b16 %v123
  %v480 = vunpack.c.l.b16 %v124
  %v481 = vunpack.c.l.b16 %v125
  %v482 = vunpack.c.h.b16 %v125
  %v483 = vunpack.c.l.b16 %v126
  %v484 = vunpack.c.l.b16 %v127
  %v485 = vunpack.c.h.b16 %v127
  %v486 = vunpack.c.l.b16 %v128
  %v487 = vunpack.c.l.b16 %v129
  %v488 = vunpack.c.h.b16 %v129
  %v489 = vunpack.c.l.b16 %v130
  %v490 = vunpack.c.l.b16 %v131
  %v491 = vunpack.c.h.b16 %v131
  %v492 = vunpack.c.l.b16 %v132
  %v493 = vunpack.c.l.b16 %v133
  %v494 = vunpack.c.h.b16 %v133
  %v495 = vunpack.c.l.b16 %v134
  %v496 = vunpack.c.l.b16 %v135
  %v497 = vunpack.c.h.b16 %v135
  %v498 = vunpack.c.l.b16 %v136
  %v499 = vunpack.c.l.b16 %v137
  %v500 = vunpack.c.h.b16 %v137
  %v501 = vunpack.c.l.b16 %v138
  %v502 = vunpack.c.l.b16 %v139
  %v503 = vunpack.c.h.b16 %v139
  %v504 = vunpack.c.l.b16 %v140
  %v505 = vunpack.c.l.b16 %v141
  %v506 = vunpack.c.h.b16 %v141
  %v507 = vunpack.c.l.b16 %v142
  %v508 = vunpack.c.l.b16 %v143
  %v509 = vunpack.c.h.b16 %v143
  %v510 = vunpack.c.l.b16 %v144
  %v511 = vunpack.c.l.b16 %v145
  %v512 = vunpack.c.h.b16 %v145
  %v513 = vunpack.c.l.b16 %v146
  %v514 = vunpack.c.l.b16 %v147
  %v515 = vunpack.c.h.b16 %v147
  %v516 = vunpack.c.l.b16 %v148
  %v517 = vpack.c.b16 %v328, %v325
  %v518 = vpack.c.b16 %v329, %v326
  %v519 = vpack.c.b16 %v330, %v327
  %v520 = vpack.c.b16 %v334, %v331
  %v521 = vpack.c.b16 %v335, %v332
  %v522 = vpack.c.b16 %v336, %v333
  %v523 = vpack.c.b16 %v340, %v337
  %v524 = vpack.c.b16 %v341, %v338
  %v525 = vpack.c.b16 %v342, %v339
  %v526 = vpack.c.b16 %v346, %v343
  %v527 = vpack.c.b16 %v347, %v344
  %v528 = vpack.c.b16 %v348, %v345
  %v529 = vpack.c.b16 %v352, %v349
  %v530 = vpack.c.b16 %v353, %v350
  %v531 = vpack.c.b16 %v354, %v351
  %v532 = vpack.c.b16 %v358, %v355
  %v533 = vpack.c.b16 %v359, %v356
  %v534 = vpack.c.b16 %v360, %v357
  %v535 = vpack.c.b16 %v364, %v361
  %v536 = vpack.c.b16 %v365, %v362
  %v537 = vpack.c.b16 %v366, %v363
  %v538 = vpack.c.b16 %v370, %v367
  %v539 = vpack.c.b16 %v371, %v368
  %v540 = vpack.c.b16 %v372, %v369
  %v541 = vpack.c.b16 %v376, %v373
  %v542 = vpack.c.b16 %v377, %v374
  %v543 = vpack.c.b16 %v378, %v375
  %v544 = vpack.c.b16 %v382, %v379
  %v545 = vpack.c.b16 %v383, %v380
  %v546 = vpack.c.b16 %v384, %v381
  %v547 = vpack.c.b16 %v388, %v385
  %v548 = vpack.c.b16 %v389, %v386
  %v549 = vpack.c.b16 %v390, %v387
  %v550 = vpack.c.b16 %v394, %v391
  %v551 = vpack.c.b16 %v395, %v392
  %v552 = vpack.c.b16 %v396, %v393
  %v553 = vpack.c.b16 %v400, %v397
  %v554 = vpack.c.b16 %v401, %v398
  %v555 = vpack.c.b16 %v402, %v399
  %v556 = vpack.c.b16 %v406, %v403
  %v557 = vpack.c.b16 %v407, %v404
  %v558 = vpack.c.b16 %v408, %v405
  %v559 = vpack.c.b16 %v412, %v409
  %v560 = vpack.c.b16 %v413, %v410
  %v561 = vpack.c.b16 %v414, %v411
  %v562 = vpack.c.b16 %v418, %v415
  %v563 = vpack.c.b16 %v419, %v416
  %v564 = vpack.c.b16 %v420, %v417
  %v565 = vpack.c.b16 %v424, %v421
  %v566 = vpack.c.b16 %v425, %v422
  %v567 = vpack.c.b16 %v426, %v423
  %v568 = vpack.c.b16 %v430, %v427
  %v569 = vpack.c.b16 %v431, %v428
  %v570 = vpack.c.b16 %v432, %v429
  %v571 = vpack.c.b16 %v436, %v433
  %v572 = vpack.c.b16 %v437, %v434
  %v573 = vpack.c.b16 %v438, %v435
  %v574 = vpack.c.b16 %v442, %v439
  %v575 = vpack.c.b16 %v443, %v440
  %v576 = vpack.c.b16 %v444, %v441
  %v577 = vpack.c.b16 %v448, %v445
  %v578 = vpack.c.b16 %v449, %v446
  %v579 = vpack.c.b16 %v450, %v447
  %v580 = vpack.c.b16 %v454, %v451
  %v581 = vpack.c.b16 %v455, %v452
  %v582 = vpack.c.b16 %v456, %v453
  %v583 = vpack.c.b16 %v460, %v457
  %v584 = vpack.c.b16 %v461, %v458
  %v585 = vpack.c.b16 %v462, %v459
  %v586 = vpack.c.b16 %v466, %v463
  %v587 = vpack.c.b16 %v467, %v464
  %v588 = vpack.c.b16 %v468, %v465
  %v589 = vpack.c.b16 %v472, %v469
  %v590 = vpack.c.b16 %v473, %v470
  %v591 = vpack.c.b16 %v474, %v471
  %v592 = vpack.c.b16 %v478, %v475
  %v593 = vpack.c.b16 %v479, %v476
  %v594 = vpack.c.b16 %v480, %v477
  %v595 = vpack.c.b16 %v484, %v481
  %v596 = vpack.c.b16 %v485, %v482
  %v597 = vpack.c.b16 %v486, %v483
  %v598 = vpack.c.b16 %v490, %v487
  %v599 = vpack.c.b16 %v491, %v488
  %v600 = vpack.c.b16 %v492, %v489
  %v601 = vpack.c.b16 %v496, %v493
  %v602 = vpack.c.b16 %v497, %v494
  %v603 = vpack.c.b16 %v498, %v495
  %v604 = vpack.c.b16 %v502, %v499
  %v605 = vpack.c.b16 %v503, %v500
  %v606 = vpack.c.b16 %v504, %v501
  %v607 = vpack.c.b16 %v508, %v505
  %v608 = vpack.c.b16 %v509, %v506
  %v609 = vpack.c.b16 %v510, %v507
  %v610 = vpack.c.b16 %v514, %v511
  %v611 = vpack.c.b16 %v515, %v512
  %v612 = vpack.c.b16 %v516, %v513
  %v757 = vunpack.c.l.b16 %v149
  %v758 = vunpack.c.l.b16 %v150
  %v759 = vunpack.c.l.b16 %v151
  %v760 = vunpack.c.l.b16 %v152
  %v761 = vunpack.c.l.b16 %v153
  %v762 = vunpack.c.l.b16 %v154
  %v763 = vunpack.c.l.b16 %v155
  %v764 = vunpack.c.l.b16 %v156
  %v765 = vunpack.c.l.b16 %v157
  %v766 = vunpack.c.l.b16 %v158
  %v767 = vunpack.c.l.b16 %v159
  %v768 = vunpack.c.l.b16 %v160
  %v769 = vunpack.c.l.b16 %v161
  %v770 = vunpack.c.l.b16 %v162
  %v771 = vunpack.c.l.b16 %v163
  %v772 = vunpack.c.l.b16 %v164
  %v773 = vunpack.c.l.b16 %v165
  %v774 = vunpack.c.l.b16 %v166
  %v775 = vunpack.c.l.b16 %v167
  %v776 = vunpack.c.l.b16 %v168
  %v777 = vunpack.c.l.b16 %v169
  %v778 = vunpack.c.l.b16 %v170
  %v779 = vunpack.c.l.b16 %v171
  %v780 = vunpack.c.l.b16 %v172
  %v781 = vunpack.c.l.b16 %v173
  %v782 = vunpack.c.l.b16 %v174
  %v783 = vunpack.c.l.b16 %v175
  %v784 = vunpack.c.l.b16 %v176
  %v785 = vunpack.c.l.b16 %v177
  %v786 = vunpack.c.l.b16 %v178
  %v787 = vunpack.c.l.b16 %v179
  %v788 = vunpack.c.l.b16 %v180
  %v789 = vunpack.c.l.b16 %v181
  %v790 = vunpack.c.l.b16 %v182
  %v791 = vunpack.c.l.b16 %v183
  %v792 = vunpack.c.l.b16 %v184
  %v793 = vunpack.c.l.b16 %v185
  %v794 = vunpack.c.l.b16 %v186
  %v795 = vunpack.c.l.b16 %v187
  %v796 = vunpack.c.l.b16 %v188
  %v797 = vunpack.c.l.b16 %v189
  %v798 = vunpack.c.l.b16 %v190
  %v799 = vunpack.c.l.b16 %v191
  %v800 = vunpack.c.l.b16 %v192
  %v801 = vunpack.c.l.b16 %v193
  %v802 = vunpack.c.l.b16 %v194
  %v803 = vunpack.c.l.b16 %v195
  %v804 = vunpack.c.l.b16 %v196
  %v805 = vpack.c.b16 %v758, %v757
  %v806 = vpack.c.b16 %v760, %v759
  %v807 = vpack.c.b16 %v762, %v761
  %v808 = vpack.c.b16 %v764, %v763
  %v809 = vpack.c.b16 %v766, %v765
  %v810 = vpack.c.b16 %v768, %v767
  %v811 = vpack.c.b16 %v770, %v769
  %v812 = vpack.c.b16 %v772, %v771
  %v813 = vpack.c.b16 %v774, %v773
  %v814 = vpack.c.b16 %v776, %v775
  %v815 = vpack.c.b16 %v778, %v777
  %v816 = vpack.c.b16 %v780, %v779
  %v817 = vpack.c.b16 %v782, %v781
  %v818 = vpack.c.b16 %v784, %v783
  %v819 = vpack.c.b16 %v786, %v785
  %v820 = vpack.c.b16 %v788, %v787
  %v821 = vpack.c.b16 %v790, %v789
  %v822 = vpack.c.b16 %v792, %v791
  %v823 = vpack.c.b16 %v794, %v793
  %v824 = vpack.c.b16 %v796, %v795
  %v825 = vpack.c.b16 %v798, %v797
  %v826 = vpack.c.b16 %v800, %v799
  %v827 = vpack.c.b16 %v802, %v801
  %v828 = vpack.c.b16 %v804, %v803
  %853 = vmatprep.subr.bf16.mxu0 0
  %854 = vmatpush1.bf16.msra.mxu0 %v805
  %855 = vmatprep.subr.bf16.mxu0 0
  %856 = vmatpush1.bf16.msra.mxu0 %v806
  %857 = vmatprep.subr.bf16.mxu0 0
  %858 = vmatpush1.bf16.msra.mxu0 %v807
  %859 = vmatprep.subr.bf16.mxu0 0
  %860 = vmatpush1.bf16.msra.mxu0 %v808
  %861 = vmatprep.subr.bf16.mxu0 0
  %862 = vmatpush1.bf16.msra.mxu0 %v809
  %863 = vmatprep.subr.bf16.mxu0 0
  %864 = vmatpush1.bf16.msra.mxu0 %v810
  %865 = vmatprep.subr.bf16.mxu0 0
  %866 = vmatpush1.bf16.msra.mxu0 %v811
  %867 = vmatprep.subr.bf16.mxu0 0
  %868 = vmatpush1.bf16.msra.mxu0 %v812
  %869 = vmatprep.subr.bf16.mxu0 0
  %870 = vmatpush1.bf16.msra.mxu0 %v813
  %871 = vmatprep.subr.bf16.mxu0 0
  %872 = vmatpush1.bf16.msra.mxu0 %v814
  %873 = vmatprep.subr.bf16.mxu0 0
  %874 = vmatpush1.bf16.msra.mxu0 %v815
  %875 = vmatprep.subr.bf16.mxu0 0
  %876 = vmatpush1.bf16.msra.mxu0 %v816
  %877 = vmatprep.subr.bf16.mxu0 0
  %878 = vmatpush1.bf16.msra.mxu0 %v817
  %879 = vmatprep.subr.bf16.mxu0 0
  %880 = vmatpush1.bf16.msra.mxu0 %v818
  %881 = vmatprep.subr.bf16.mxu0 0
  %882 = vmatpush1.bf16.msra.mxu0 %v819
  %883 = vmatprep.subr.bf16.mxu0 0
  %884 = vmatpush1.bf16.msra.mxu0 %v820
  %885 = vmatprep.mubr.bf16.mxu0 %v518
  %886 = vmatmul.mubr.bf16.gmra.mrb[0].mxu0 %v517
  %v887 = vpop.f32.mrb[0].mxu0
  %v888 = vadd.f32 0.0, %v887
  %v889 = vpop.f32.mrb[0].mxu0
  %v890 = vpop.f32.mrb[0].mxu0
  %v891 = vadd.f32 0.0, %v890
  %v892 = vpop.f32.mrb[0].mxu0
  %893 = vmatprep.mubr.bf16.mxu0 %v521
  %894 = vmatmul.mubr.bf16.gmra.mrb[0].mxu0 %v520
  %v895 = vpop.f32.mrb[0].mxu0
  %v896 = vadd.f32 0.0, %v895
  %v897 = vpop.f32.mrb[0].mxu0
  %v898 = vpop.f32.mrb[0].mxu0
  %v899 = vadd.f32 0.0, %v898
  %v900 = vpop.f32.mrb[0].mxu0
  %901 = vmatprep.mubr.bf16.mxu0 %v524
  %902 = vmatmul.mubr.bf16.gmra.mrb[0].mxu0 %v523
  %v903 = vpop.f32.mrb[0].mxu0
  %v904 = vadd.f32 0.0, %v903
  %v905 = vpop.f32.mrb[0].mxu0
  %v906 = vpop.f32.mrb[0].mxu0
  %v907 = vadd.f32 0.0, %v906
  %v908 = vpop.f32.mrb[0].mxu0
  %909 = vmatprep.mubr.bf16.mxu0 %v527
  %910 = vmatmul.mubr.bf16.gmra.mrb[0].mxu0 %v526
  %v911 = vpop.f32.mrb[0].mxu0
  %v912 = vadd.f32 0.0, %v911
  %v913 = vpop.f32.mrb[0].mxu0
  %v914 = vpop.f32.mrb[0].mxu0
  %v915 = vadd.f32 0.0, %v914
  %v916 = vpop.f32.mrb[0].mxu0
  %917 = vmatprep.mubr.bf16.mxu0 %v530
  %918 = vmatmul.mubr.bf16.gmra.mrb[0].mxu0 %v529
  %v919 = vpop.f32.mrb[0].mxu0
  %v920 = vadd.f32 0.0, %v919
  %v921 = vpop.f32.mrb[0].mxu0
  %v922 = vpop.f32.mrb[0].mxu0
  %v923 = vadd.f32 0.0, %v922
  %v924 = vpop.f32.mrb[0].mxu0
  %925 = vmatprep.mubr.bf16.mxu0 %v533
  %926 = vmatmul.mubr.bf16.gmra.mrb[0].mxu0 %v532
  %v927 = vpop.f32.mrb[0].mxu0
  %v928 = vadd.f32 0.0, %v927
  %v929 = vpop.f32.mrb[0].mxu0
  %v930 = vpop.f32.mrb[0].mxu0
  %v931 = vadd.f32 0.0, %v930
  %v932 = vpop.f32.mrb[0].mxu0
  %933 = vmatprep.mubr.bf16.mxu0 %v536
  %934 = vmatmul.mubr.bf16.gmra.mrb[0].mxu0 %v535
  %v935 = vpop.f32.mrb[0].mxu0
  %v936 = vadd.f32 0.0, %v935
  %v937 = vpop.f32.mrb[0].mxu0
  %v938 = vpop.f32.mrb[0].mxu0
  %v939 = vadd.f32 0.0, %v938
  %v940 = vpop.f32.mrb[0].mxu0
  %941 = vmatprep.mubr.bf16.mxu0 %v539
  %942 = vmatmul.mubr.bf16.gmra.mrb[0].mxu0 %v538
  %v943 = vpop.f32.mrb[0].mxu0
  %v944 = vadd.f32 0.0, %v943
  %v945 = vpop.f32.mrb[0].mxu0
  %v946 = vpop.f32.mrb[0].mxu0
  %v947 = vadd.f32 0.0, %v946
  %v948 = vpop.f32.mrb[0].mxu0
  %949 = vmatprep.mubr.bf16.mxu0 %v542
  %950 = vmatmul.mubr.bf16.gmra.mrb[0].mxu0 %v541
  %v951 = vpop.f32.mrb[0].mxu0
  %v952 = vadd.f32 0.0, %v951
  %v953 = vpop.f32.mrb[0].mxu0
  %v954 = vpop.f32.mrb[0].mxu0
  %v955 = vadd.f32 0.0, %v954
  %v956 = vpop.f32.mrb[0].mxu0
  %957 = vmatprep.mubr.bf16.mxu0 %v545
  %958 = vmatmul.mubr.bf16.gmra.mrb[0].mxu0 %v544
  %v959 = vpop.f32.mrb[0].mxu0
  %v960 = vadd.f32 0.0, %v959
  %v961 = vpop.f32.mrb[0].mxu0
  %v962 = vpop.f32.mrb[0].mxu0
  %v963 = vadd.f32 0.0, %v962
  %v964 = vpop.f32.mrb[0].mxu0
  %965 = vmatprep.mubr.bf16.mxu0 %v548
  %966 = vmatmul.mubr.bf16.gmra.mrb[0].mxu0 %v547
  %v967 = vpop.f32.mrb[0].mxu0
  %v968 = vadd.f32 0.0, %v967
  %v969 = vpop.f32.mrb[0].mxu0
  %v970 = vpop.f32.mrb[0].mxu0
  %v971 = vadd.f32 0.0, %v970
  %v972 = vpop.f32.mrb[0].mxu0
  %973 = vmatprep.mubr.bf16.mxu0 %v551
  %974 = vmatmul.mubr.bf16.gmra.mrb[0].mxu0 %v550
  %v975 = vpop.f32.mrb[0].mxu0
  %v976 = vadd.f32 0.0, %v975
  %v977 = vpop.f32.mrb[0].mxu0
  %v978 = vpop.f32.mrb[0].mxu0
  %v979 = vadd.f32 0.0, %v978
  %v980 = vpop.f32.mrb[0].mxu0
  %981 = vmatprep.mubr.bf16.mxu0 %v554
  %982 = vmatmul.mubr.bf16.gmra.mrb[0].mxu0 %v553
  %v983 = vpop.f32.mrb[0].mxu0
  %v984 = vadd.f32 0.0, %v983
  %v985 = vpop.f32.mrb[0].mxu0
  %v986 = vpop.f32.mrb[0].mxu0
  %v987 = vadd.f32 0.0, %v986
  %v988 = vpop.f32.mrb[0].mxu0
  %989 = vmatprep.mubr.bf16.mxu0 %v557
  %990 = vmatmul.mubr.bf16.gmra.mrb[0].mxu0 %v556
  %v991 = vpop.f32.mrb[0].mxu0
  %v992 = vadd.f32 0.0, %v991
  %v993 = vpop.f32.mrb[0].mxu0
  %v994 = vpop.f32.mrb[0].mxu0
  %v995 = vadd.f32 0.0, %v994
  %v996 = vpop.f32.mrb[0].mxu0
  %997 = vmatprep.mubr.bf16.mxu0 %v560
  %998 = vmatmul.mubr.bf16.gmra.mrb[0].mxu0 %v559
  %v999 = vpop.f32.mrb[0].mxu0
  %v1000 = vadd.f32 0.0, %v999
  %v1001 = vpop.f32.mrb[0].mxu0
  %v1002 = vpop.f32.mrb[0].mxu0
  %v1003 = vadd.f32 0.0, %v1002
  %v1004 = vpop.f32.mrb[0].mxu0
  %1005 = vmatprep.mubr.bf16.mxu0 %v563
  %1006 = vmatmul.mubr.bf16.gmra.mrb[0].mxu0 %v562
  %v1007 = vpop.f32.mrb[0].mxu0
  %v1008 = vadd.f32 0.0, %v1007
  %v1009 = vpop.f32.mrb[0].mxu0
  %v1010 = vpop.f32.mrb[0].mxu0
  %v1011 = vadd.f32 0.0, %v1010
  %v1012 = vpop.f32.mrb[0].mxu0
  %1013 = vmatprep.mubr.bf16.mxu0 %v566
  %1014 = vmatmul.mubr.bf16.gmra.mrb[0].mxu0 %v565
  %v1015 = vpop.f32.mrb[0].mxu0
  %v1016 = vadd.f32 0.0, %v1015
  %v1017 = vpop.f32.mrb[0].mxu0
  %v1018 = vpop.f32.mrb[0].mxu0
  %v1019 = vadd.f32 0.0, %v1018
  %v1020 = vpop.f32.mrb[0].mxu0
  %1021 = vmatprep.mubr.bf16.mxu0 %v569
  %1022 = vmatmul.mubr.bf16.gmra.mrb[0].mxu0 %v568
  %v1023 = vpop.f32.mrb[0].mxu0
  %v1024 = vadd.f32 0.0, %v1023
  %v1025 = vpop.f32.mrb[0].mxu0
  %v1026 = vpop.f32.mrb[0].mxu0
  %v1027 = vadd.f32 0.0, %v1026
  %v1028 = vpop.f32.mrb[0].mxu0
  %1029 = vmatprep.mubr.bf16.mxu0 %v572
  %1030 = vmatmul.mubr.bf16.gmra.mrb[0].mxu0 %v571
  %v1031 = vpop.f32.mrb[0].mxu0
  %v1032 = vadd.f32 0.0, %v1031
  %v1033 = vpop.f32.mrb[0].mxu0
  %v1034 = vpop.f32.mrb[0].mxu0
  %v1035 = vadd.f32 0.0, %v1034
  %v1036 = vpop.f32.mrb[0].mxu0
  %1037 = vmatprep.mubr.bf16.mxu0 %v575
  %1038 = vmatmul.mubr.bf16.gmra.mrb[0].mxu0 %v574
  %v1039 = vpop.f32.mrb[0].mxu0
  %v1040 = vadd.f32 0.0, %v1039
  %v1041 = vpop.f32.mrb[0].mxu0
  %v1042 = vpop.f32.mrb[0].mxu0
  %v1043 = vadd.f32 0.0, %v1042
  %v1044 = vpop.f32.mrb[0].mxu0
  %1045 = vmatprep.mubr.bf16.mxu0 %v578
  %1046 = vmatmul.mubr.bf16.gmra.mrb[0].mxu0 %v577
  %v1047 = vpop.f32.mrb[0].mxu0
  %v1048 = vadd.f32 0.0, %v1047
  %v1049 = vpop.f32.mrb[0].mxu0
  %v1050 = vpop.f32.mrb[0].mxu0
  %v1051 = vadd.f32 0.0, %v1050
  %v1052 = vpop.f32.mrb[0].mxu0
  %1053 = vmatprep.mubr.bf16.mxu0 %v581
  %1054 = vmatmul.mubr.bf16.gmra.mrb[0].mxu0 %v580
  %v1055 = vpop.f32.mrb[0].mxu0
  %v1056 = vadd.f32 0.0, %v1055
  %v1057 = vpop.f32.mrb[0].mxu0
  %v1058 = vpop.f32.mrb[0].mxu0
  %v1059 = vadd.f32 0.0, %v1058
  %v1060 = vpop.f32.mrb[0].mxu0
  %1061 = vmatprep.mubr.bf16.mxu0 %v584
  %1062 = vmatmul.mubr.bf16.gmra.mrb[0].mxu0 %v583
  %v1063 = vpop.f32.mrb[0].mxu0
  %v1064 = vadd.f32 0.0, %v1063
  %v1065 = vpop.f32.mrb[0].mxu0
  %v1066 = vpop.f32.mrb[0].mxu0
  %v1067 = vadd.f32 0.0, %v1066
  %v1068 = vpop.f32.mrb[0].mxu0
  %1069 = vmatprep.mubr.bf16.mxu0 %v587
  %1070 = vmatmul.mubr.bf16.gmra.mrb[0].mxu0 %v586
  %v1071 = vpop.f32.mrb[0].mxu0
  %v1072 = vadd.f32 0.0, %v1071
  %v1073 = vpop.f32.mrb[0].mxu0
  %v1074 = vpop.f32.mrb[0].mxu0
  %v1075 = vadd.f32 0.0, %v1074
  %v1076 = vpop.f32.mrb[0].mxu0
  %1077 = vmatprep.mubr.bf16.mxu0 %v590
  %1078 = vmatmul.mubr.bf16.gmra.mrb[0].mxu0 %v589
  %v1079 = vpop.f32.mrb[0].mxu0
  %v1080 = vadd.f32 0.0, %v1079
  %v1081 = vpop.f32.mrb[0].mxu0
  %v1082 = vpop.f32.mrb[0].mxu0
  %v1083 = vadd.f32 0.0, %v1082
  %v1084 = vpop.f32.mrb[0].mxu0
  %1085 = vmatprep.mubr.bf16.mxu0 %v593
  %1086 = vmatmul.mubr.bf16.gmra.mrb[0].mxu0 %v592
  %v1087 = vpop.f32.mrb[0].mxu0
  %v1088 = vadd.f32 0.0, %v1087
  %v1089 = vpop.f32.mrb[0].mxu0
  %v1090 = vpop.f32.mrb[0].mxu0
  %v1091 = vadd.f32 0.0, %v1090
  %v1092 = vpop.f32.mrb[0].mxu0
  %1093 = vmatprep.mubr.bf16.mxu0 %v596
  %1094 = vmatmul.mubr.bf16.gmra.mrb[0].mxu0 %v595
  %v1095 = vpop.f32.mrb[0].mxu0
  %v1096 = vadd.f32 0.0, %v1095
  %v1097 = vpop.f32.mrb[0].mxu0
  %v1098 = vpop.f32.mrb[0].mxu0
  %v1099 = vadd.f32 0.0, %v1098
  %v1100 = vpop.f32.mrb[0].mxu0
  %1101 = vmatprep.mubr.bf16.mxu0 %v599
  %1102 = vmatmul.mubr.bf16.gmra.mrb[0].mxu0 %v598
  %v1103 = vpop.f32.mrb[0].mxu0
  %v1104 = vadd.f32 0.0, %v1103
  %v1105 = vpop.f32.mrb[0].mxu0
  %v1106 = vpop.f32.mrb[0].mxu0
  %v1107 = vadd.f32 0.0, %v1106
  %v1108 = vpop.f32.mrb[0].mxu0
  %1109 = vmatprep.mubr.bf16.mxu0 %v602
  %1110 = vmatmul.mubr.bf16.gmra.mrb[0].mxu0 %v601
  %v1111 = vpop.f32.mrb[0].mxu0
  %v1112 = vadd.f32 0.0, %v1111
  %v1113 = vpop.f32.mrb[0].mxu0
  %v1114 = vpop.f32.mrb[0].mxu0
  %v1115 = vadd.f32 0.0, %v1114
  %v1116 = vpop.f32.mrb[0].mxu0
  %1117 = vmatprep.mubr.bf16.mxu0 %v605
  %1118 = vmatmul.mubr.bf16.gmra.mrb[0].mxu0 %v604
  %v1119 = vpop.f32.mrb[0].mxu0
  %v1120 = vadd.f32 0.0, %v1119
  %v1121 = vpop.f32.mrb[0].mxu0
  %v1122 = vpop.f32.mrb[0].mxu0
  %v1123 = vadd.f32 0.0, %v1122
  %v1124 = vpop.f32.mrb[0].mxu0
  %1125 = vmatprep.mubr.bf16.mxu0 %v608
  %1126 = vmatmul.mubr.bf16.gmra.mrb[0].mxu0 %v607
  %v1127 = vpop.f32.mrb[0].mxu0
  %v1128 = vadd.f32 0.0, %v1127
  %v1129 = vpop.f32.mrb[0].mxu0
  %v1130 = vpop.f32.mrb[0].mxu0
  %v1131 = vadd.f32 0.0, %v1130
  %v1132 = vpop.f32.mrb[0].mxu0
  %1133 = vmatprep.mubr.bf16.mxu0 %v611
  %1134 = vmatmul.mubr.bf16.gmra.mrb[0].mxu0 %v610
  %v1135 = vpop.f32.mrb[0].mxu0
  %v1136 = vadd.f32 0.0, %v1135
  %v1137 = vpop.f32.mrb[0].mxu0
  %v1138 = vpop.f32.mrb[0].mxu0
  %v1139 = vadd.f32 0.0, %v1138
  %v1140 = vpop.f32.mrb[0].mxu0
  %1141 = vdwg.mxu0
  %1142 = vmatprep.subr.bf16.mxu0 0
  %1143 = vmatpush1.bf16.msra.mxu0 %v821
  %1144 = vmatprep.subr.bf16.mxu0 0
  %1145 = vmatpush1.bf16.msra.mxu0 %v822
  %1146 = vmatprep.subr.bf16.mxu0 0
  %1147 = vmatpush1.bf16.msra.mxu0 %v823
  %1148 = vmatprep.subr.bf16.mxu0 0
  %1149 = vmatpush1.bf16.msra.mxu0 %v824
  %1150 = vmatprep.subr.bf16.mxu0 0
  %1151 = vmatpush1.bf16.msra.mxu0 %v825
  %1152 = vmatprep.subr.bf16.mxu0 0
  %1153 = vmatpush1.bf16.msra.mxu0 %v826
  %1154 = vmatprep.subr.bf16.mxu0 0
  %1155 = vmatpush1.bf16.msra.mxu0 %v827
  %1156 = vmatprep.subr.bf16.mxu0 0
  %1157 = vmatpush1.bf16.msra.mxu0 %v828
  %1158 = vmatprep.subr.bf16.mxu0 0
  %1159 = vmatpush1.bf16.msra.mxu0 0
  %1160 = vmatprep.subr.bf16.mxu0 0
  %1161 = vmatpush1.bf16.msra.mxu0 0
  %1162 = vmatprep.subr.bf16.mxu0 0
  %1163 = vmatpush1.bf16.msra.mxu0 0
  %1164 = vmatprep.subr.bf16.mxu0 0
  %1165 = vmatpush1.bf16.msra.mxu0 0
  %1166 = vmatprep.subr.bf16.mxu0 0
  %1167 = vmatpush1.bf16.msra.mxu0 0
  %1168 = vmatprep.subr.bf16.mxu0 0
  %1169 = vmatpush1.bf16.msra.mxu0 0
  %1170 = vmatprep.subr.bf16.mxu0 0
  %1171 = vmatpush1.bf16.msra.mxu0 0
  %1172 = vmatprep.subr.bf16.mxu0 0
  %1173 = vmatpush1.bf16.msra.mxu0 0
  %1174 = vmatprep.mubr.bf16.mxu0 0
  %1175 = vmatmul.mubr.bf16.gmra.mrb[0].mxu0 %v519
  %v1176 = vpop.f32.mrb[0].mxu0
  %v1177 = vadd.f32 %v888, %v1176
  %v1178 = vpop.f32.mrb[0].mxu0
  %v1179 = vpop.f32.mrb[0].mxu0
  %v1180 = vadd.f32 %v891, %v1179
  %v1181 = vpop.f32.mrb[0].mxu0
  %1182 = vmatprep.mubr.bf16.mxu0 0
  %1183 = vmatmul.mubr.bf16.gmra.mrb[0].mxu0 %v522
  %v1184 = vpop.f32.mrb[0].mxu0
  %v1185 = vadd.f32 %v896, %v1184
  %v1186 = vpop.f32.mrb[0].mxu0
  %v1187 = vpop.f32.mrb[0].mxu0
  %v1188 = vadd.f32 %v899, %v1187
  %v1189 = vpop.f32.mrb[0].mxu0
  %1190 = vmatprep.mubr.bf16.mxu0 0
  %1191 = vmatmul.mubr.bf16.gmra.mrb[0].mxu0 %v525
  %v1192 = vpop.f32.mrb[0].mxu0
  %v1193 = vadd.f32 %v904, %v1192
  %v1194 = vpop.f32.mrb[0].mxu0
  %v1195 = vpop.f32.mrb[0].mxu0
  %v1196 = vadd.f32 %v907, %v1195
  %v1197 = vpop.f32.mrb[0].mxu0
  %1198 = vmatprep.mubr.bf16.mxu0 0
  %1199 = vmatmul.mubr.bf16.gmra.mrb[0].mxu0 %v528
  %v1200 = vpop.f32.mrb[0].mxu0
  %v1201 = vadd.f32 %v912, %v1200
  %v1202 = vpop.f32.mrb[0].mxu0
  %v1203 = vpop.f32.mrb[0].mxu0
  %v1204 = vadd.f32 %v915, %v1203
  %v1205 = vpop.f32.mrb[0].mxu0
  %1206 = vmatprep.mubr.bf16.mxu0 0
  %1207 = vmatmul.mubr.bf16.gmra.mrb[0].mxu0 %v531
  %v1208 = vpop.f32.mrb[0].mxu0
  %v1209 = vadd.f32 %v920, %v1208
  %v1210 = vpop.f32.mrb[0].mxu0
  %v1211 = vpop.f32.mrb[0].mxu0
  %v1212 = vadd.f32 %v923, %v1211
  %v1213 = vpop.f32.mrb[0].mxu0
  %1214 = vmatprep.mubr.bf16.mxu0 0
  %1215 = vmatmul.mubr.bf16.gmra.mrb[0].mxu0 %v534
  %v1216 = vpop.f32.mrb[0].mxu0
  %v1217 = vadd.f32 %v928, %v1216
  %v1218 = vpop.f32.mrb[0].mxu0
  %v1219 = vpop.f32.mrb[0].mxu0
  %v1220 = vadd.f32 %v931, %v1219
  %v1221 = vpop.f32.mrb[0].mxu0
  %1222 = vmatprep.mubr.bf16.mxu0 0
  %1223 = vmatmul.mubr.bf16.gmra.mrb[0].mxu0 %v537
  %v1224 = vpop.f32.mrb[0].mxu0
  %v1225 = vadd.f32 %v936, %v1224
  %v1226 = vpop.f32.mrb[0].mxu0
  %v1227 = vpop.f32.mrb[0].mxu0
  %v1228 = vadd.f32 %v939, %v1227
  %v1229 = vpop.f32.mrb[0].mxu0
  %1230 = vmatprep.mubr.bf16.mxu0 0
  %1231 = vmatmul.mubr.bf16.gmra.mrb[0].mxu0 %v540
  %v1232 = vpop.f32.mrb[0].mxu0
  %v1233 = vadd.f32 %v944, %v1232
  %v1234 = vpop.f32.mrb[0].mxu0
  %v1235 = vpop.f32.mrb[0].mxu0
  %v1236 = vadd.f32 %v947, %v1235
  %v1237 = vpop.f32.mrb[0].mxu0
  %1238 = vmatprep.mubr.bf16.mxu0 0
  %1239 = vmatmul.mubr.bf16.gmra.mrb[0].mxu0 %v543
  %v1240 = vpop.f32.mrb[0].mxu0
  %v1241 = vadd.f32 %v952, %v1240
  %v1242 = vpop.f32.mrb[0].mxu0
  %v1243 = vpop.f32.mrb[0].mxu0
  %v1244 = vadd.f32 %v955, %v1243
  %v1245 = vpop.f32.mrb[0].mxu0
  %1246 = vmatprep.mubr.bf16.mxu0 0
  %1247 = vmatmul.mubr.bf16.gmra.mrb[0].mxu0 %v546
  %v1248 = vpop.f32.mrb[0].mxu0
  %v1249 = vadd.f32 %v960, %v1248
  %v1250 = vpop.f32.mrb[0].mxu0
  %v1251 = vpop.f32.mrb[0].mxu0
  %v1252 = vadd.f32 %v963, %v1251
  %v1253 = vpop.f32.mrb[0].mxu0
  %1254 = vmatprep.mubr.bf16.mxu0 0
  %1255 = vmatmul.mubr.bf16.gmra.mrb[0].mxu0 %v549
  %v1256 = vpop.f32.mrb[0].mxu0
  %v1257 = vadd.f32 %v968, %v1256
  %v1258 = vpop.f32.mrb[0].mxu0
  %v1259 = vpop.f32.mrb[0].mxu0
  %v1260 = vadd.f32 %v971, %v1259
  %v1261 = vpop.f32.mrb[0].mxu0
  %1262 = vmatprep.mubr.bf16.mxu0 0
  %1263 = vmatmul.mubr.bf16.gmra.mrb[0].mxu0 %v552
  %v1264 = vpop.f32.mrb[0].mxu0
  %v1265 = vadd.f32 %v976, %v1264
  %v1266 = vpop.f32.mrb[0].mxu0
  %v1267 = vpop.f32.mrb[0].mxu0
  %v1268 = vadd.f32 %v979, %v1267
  %v1269 = vpop.f32.mrb[0].mxu0
  %1270 = vmatprep.mubr.bf16.mxu0 0
  %1271 = vmatmul.mubr.bf16.gmra.mrb[0].mxu0 %v555
  %v1272 = vpop.f32.mrb[0].mxu0
  %v1273 = vadd.f32 %v984, %v1272
  %v1274 = vpop.f32.mrb[0].mxu0
  %v1275 = vpop.f32.mrb[0].mxu0
  %v1276 = vadd.f32 %v987, %v1275
  %v1277 = vpop.f32.mrb[0].mxu0
  %1278 = vmatprep.mubr.bf16.mxu0 0
  %1279 = vmatmul.mubr.bf16.gmra.mrb[0].mxu0 %v558
  %v1280 = vpop.f32.mrb[0].mxu0
  %v1281 = vadd.f32 %v992, %v1280
  %v1282 = vpop.f32.mrb[0].mxu0
  %v1283 = vpop.f32.mrb[0].mxu0
  %v1284 = vadd.f32 %v995, %v1283
  %v1285 = vpop.f32.mrb[0].mxu0
  %1286 = vmatprep.mubr.bf16.mxu0 0
  %1287 = vmatmul.mubr.bf16.gmra.mrb[0].mxu0 %v561
  %v1288 = vpop.f32.mrb[0].mxu0
  %v1289 = vadd.f32 %v1000, %v1288
  %v1290 = vpop.f32.mrb[0].mxu0
  %v1291 = vpop.f32.mrb[0].mxu0
  %v1292 = vadd.f32 %v1003, %v1291
  %v1293 = vpop.f32.mrb[0].mxu0
  %1294 = vmatprep.mubr.bf16.mxu0 0
  %1295 = vmatmul.mubr.bf16.gmra.mrb[0].mxu0 %v564
  %v1296 = vpop.f32.mrb[0].mxu0
  %v1297 = vadd.f32 %v1008, %v1296
  %v1298 = vpop.f32.mrb[0].mxu0
  %v1299 = vpop.f32.mrb[0].mxu0
  %v1300 = vadd.f32 %v1011, %v1299
  %v1301 = vpop.f32.mrb[0].mxu0
  %1302 = vmatprep.mubr.bf16.mxu0 0
  %1303 = vmatmul.mubr.bf16.gmra.mrb[0].mxu0 %v567
  %v1304 = vpop.f32.mrb[0].mxu0
  %v1305 = vadd.f32 %v1016, %v1304
  %v1306 = vpop.f32.mrb[0].mxu0
  %v1307 = vpop.f32.mrb[0].mxu0
  %v1308 = vadd.f32 %v1019, %v1307
  %v1309 = vpop.f32.mrb[0].mxu0
  %1310 = vmatprep.mubr.bf16.mxu0 0
  %1311 = vmatmul.mubr.bf16.gmra.mrb[0].mxu0 %v570
  %v1312 = vpop.f32.mrb[0].mxu0
  %v1313 = vadd.f32 %v1024, %v1312
  %v1314 = vpop.f32.mrb[0].mxu0
  %v1315 = vpop.f32.mrb[0].mxu0
  %v1316 = vadd.f32 %v1027, %v1315
  %v1317 = vpop.f32.mrb[0].mxu0
  %1318 = vmatprep.mubr.bf16.mxu0 0
  %1319 = vmatmul.mubr.bf16.gmra.mrb[0].mxu0 %v573
  %v1320 = vpop.f32.mrb[0].mxu0
  %v1321 = vadd.f32 %v1032, %v1320
  %v1322 = vpop.f32.mrb[0].mxu0
  %v1323 = vpop.f32.mrb[0].mxu0
  %v1324 = vadd.f32 %v1035, %v1323
  %v1325 = vpop.f32.mrb[0].mxu0
  %1326 = vmatprep.mubr.bf16.mxu0 0
  %1327 = vmatmul.mubr.bf16.gmra.mrb[0].mxu0 %v576
  %v1328 = vpop.f32.mrb[0].mxu0
  %v1329 = vadd.f32 %v1040, %v1328
  %v1330 = vpop.f32.mrb[0].mxu0
  %v1331 = vpop.f32.mrb[0].mxu0
  %v1332 = vadd.f32 %v1043, %v1331
  %v1333 = vpop.f32.mrb[0].mxu0
  %1334 = vmatprep.mubr.bf16.mxu0 0
  %1335 = vmatmul.mubr.bf16.gmra.mrb[0].mxu0 %v579
  %v1336 = vpop.f32.mrb[0].mxu0
  %v1337 = vadd.f32 %v1048, %v1336
  %v1338 = vpop.f32.mrb[0].mxu0
  %v1339 = vpop.f32.mrb[0].mxu0
  %v1340 = vadd.f32 %v1051, %v1339
  %v1341 = vpop.f32.mrb[0].mxu0
  %1342 = vmatprep.mubr.bf16.mxu0 0
  %1343 = vmatmul.mubr.bf16.gmra.mrb[0].mxu0 %v582
  %v1344 = vpop.f32.mrb[0].mxu0
  %v1345 = vadd.f32 %v1056, %v1344
  %v1346 = vpop.f32.mrb[0].mxu0
  %v1347 = vpop.f32.mrb[0].mxu0
  %v1348 = vadd.f32 %v1059, %v1347
  %v1349 = vpop.f32.mrb[0].mxu0
  %1350 = vmatprep.mubr.bf16.mxu0 0
  %1351 = vmatmul.mubr.bf16.gmra.mrb[0].mxu0 %v585
  %v1352 = vpop.f32.mrb[0].mxu0
  %v1353 = vadd.f32 %v1064, %v1352
  %v1354 = vpop.f32.mrb[0].mxu0
  %v1355 = vpop.f32.mrb[0].mxu0
  %v1356 = vadd.f32 %v1067, %v1355
  %v1357 = vpop.f32.mrb[0].mxu0
  %1358 = vmatprep.mubr.bf16.mxu0 0
  %1359 = vmatmul.mubr.bf16.gmra.mrb[0].mxu0 %v588
  %v1360 = vpop.f32.mrb[0].mxu0
  %v1361 = vadd.f32 %v1072, %v1360
  %v1362 = vpop.f32.mrb[0].mxu0
  %v1363 = vpop.f32.mrb[0].mxu0
  %v1364 = vadd.f32 %v1075, %v1363
  %v1365 = vpop.f32.mrb[0].mxu0
  %1366 = vmatprep.mubr.bf16.mxu0 0
  %1367 = vmatmul.mubr.bf16.gmra.mrb[0].mxu0 %v591
  %v1368 = vpop.f32.mrb[0].mxu0
  %v1369 = vadd.f32 %v1080, %v1368
  %v1370 = vpop.f32.mrb[0].mxu0
  %v1371 = vpop.f32.mrb[0].mxu0
  %v1372 = vadd.f32 %v1083, %v1371
  %v1373 = vpop.f32.mrb[0].mxu0
  %1374 = vmatprep.mubr.bf16.mxu0 0
  %1375 = vmatmul.mubr.bf16.gmra.mrb[0].mxu0 %v594
  %v1376 = vpop.f32.mrb[0].mxu0
  %v1377 = vadd.f32 %v1088, %v1376
  %v1378 = vpop.f32.mrb[0].mxu0
  %v1379 = vpop.f32.mrb[0].mxu0
  %v1380 = vadd.f32 %v1091, %v1379
  %v1381 = vpop.f32.mrb[0].mxu0
  %1382 = vmatprep.mubr.bf16.mxu0 0
  %1383 = vmatmul.mubr.bf16.gmra.mrb[0].mxu0 %v597
  %v1384 = vpop.f32.mrb[0].mxu0
  %v1385 = vadd.f32 %v1096, %v1384
  %v1386 = vpop.f32.mrb[0].mxu0
  %v1387 = vpop.f32.mrb[0].mxu0
  %v1388 = vadd.f32 %v1099, %v1387
  %v1389 = vpop.f32.mrb[0].mxu0
  %1390 = vmatprep.mubr.bf16.mxu0 0
  %1391 = vmatmul.mubr.bf16.gmra.mrb[0].mxu0 %v600
  %v1392 = vpop.f32.mrb[0].mxu0
  %v1393 = vadd.f32 %v1104, %v1392
  %v1394 = vpop.f32.mrb[0].mxu0
  %v1395 = vpop.f32.mrb[0].mxu0
  %v1396 = vadd.f32 %v1107, %v1395
  %v1397 = vpop.f32.mrb[0].mxu0
  %1398 = vmatprep.mubr.bf16.mxu0 0
  %1399 = vmatmul.mubr.bf16.gmra.mrb[0].mxu0 %v603
  %v1400 = vpop.f32.mrb[0].mxu0
  %v1401 = vadd.f32 %v1112, %v1400
  %v1402 = vpop.f32.mrb[0].mxu0
  %v1403 = vpop.f32.mrb[0].mxu0
  %v1404 = vadd.f32 %v1115, %v1403
  %v1405 = vpop.f32.mrb[0].mxu0
  %1406 = vmatprep.mubr.bf16.mxu0 0
  %1407 = vmatmul.mubr.bf16.gmra.mrb[0].mxu0 %v606
  %v1408 = vpop.f32.mrb[0].mxu0
  %v1409 = vadd.f32 %v1120, %v1408
  %v1410 = vpop.f32.mrb[0].mxu0
  %v1411 = vpop.f32.mrb[0].mxu0
  %v1412 = vadd.f32 %v1123, %v1411
  %v1413 = vpop.f32.mrb[0].mxu0
  %1414 = vmatprep.mubr.bf16.mxu0 0
  %1415 = vmatmul.mubr.bf16.gmra.mrb[0].mxu0 %v609
  %v1416 = vpop.f32.mrb[0].mxu0
  %v1417 = vadd.f32 %v1128, %v1416
  %v1418 = vpop.f32.mrb[0].mxu0
  %v1419 = vpop.f32.mrb[0].mxu0
  %v1420 = vadd.f32 %v1131, %v1419
  %v1421 = vpop.f32.mrb[0].mxu0
  %1422 = vmatprep.mubr.bf16.mxu0 0
  %1423 = vmatmul.mubr.bf16.gmra.mrb[0].mxu0 %v612
  %v1424 = vpop.f32.mrb[0].mxu0
  %v1425 = vadd.f32 %v1136, %v1424
  %v1426 = vpop.f32.mrb[0].mxu0
  %v1427 = vpop.f32.mrb[0].mxu0
  %v1428 = vadd.f32 %v1139, %v1427
  %v1429 = vpop.f32.mrb[0].mxu0
  %1430 = vdwg.mxu0
  %v1431 = vld [vmem:[%s1] sm:$0xff]
  %v1432 = vld [vmem:[%s1 + $0x8] sm:$0xff]
  %v1433 = vld [vmem:[%s1 + $0x10] sm:$0xff]
  %v1434 = vld [vmem:[%s1 + $0x18] sm:$0xff]
  %v1435 = vld [vmem:[%s1 + $0x20] sm:$0xff]
  %v1436 = vld [vmem:[%s1 + $0x28] sm:$0xff]
  %v1437 = vld [vmem:[%s1 + $0x30] sm:$0xff]
  %v1438 = vld [vmem:[%s1 + $0x38] sm:$0xff]
  %v1439 = vld [vmem:[%s1 + $0x40] sm:$0xff]
  %v1440 = vld [vmem:[%s1 + $0x48] sm:$0xff]
  %v1441 = vld [vmem:[%s1 + $0x50] sm:$0xff]
  %v1442 = vld [vmem:[%s1 + $0x58] sm:$0xff]
  %v1443 = vld [vmem:[%s1 + $0x60] sm:$0xff]
  %v1444 = vld [vmem:[%s1 + $0x68] sm:$0xff]
  %v1445 = vld [vmem:[%s1 + $0x70] sm:$0xff]
  %v1446 = vld [vmem:[%s1 + $0x78] sm:$0xff]
  %v1447 = vld [vmem:[%s1 + $0x80] sm:$0xff]
  %v1448 = vld [vmem:[%s1 + $0x88] sm:$0xff]
  %v1449 = vld [vmem:[%s1 + $0x90] sm:$0xff]
  %v1450 = vld [vmem:[%s1 + $0x98] sm:$0xff]
  %v1451 = vld [vmem:[%s1 + $0xa0] sm:$0xff]
  %v1452 = vld [vmem:[%s1 + $0xa8] sm:$0xff]
  %v1453 = vld [vmem:[%s1 + $0xb0] sm:$0xff]
  %v1454 = vld [vmem:[%s1 + $0xb8] sm:$0xff]
  %v1455 = vld [vmem:[%s1 + $0xc0] sm:$0xff]
  %v1456 = vld [vmem:[%s1 + $0xc8] sm:$0xff]
  %v1457 = vld [vmem:[%s1 + $0xd0] sm:$0xff]
  %v1458 = vld [vmem:[%s1 + $0xd8] sm:$0xff]
  %v1459 = vld [vmem:[%s1 + $0xe0] sm:$0xff]
  %v1460 = vld [vmem:[%s1 + $0xe8] sm:$0xff]
  %v1461 = vld [vmem:[%s1 + $0xf0] sm:$0xff]
  %v1462 = vld [vmem:[%s1 + $0xf8] sm:$0xff]
  %v1463 = vld [vmem:[%s1 + $0x100] sm:$0xff]
  %v1464 = vld [vmem:[%s1 + $0x108] sm:$0xff]
  %v1465 = vld [vmem:[%s1 + $0x110] sm:$0xff]
  %v1466 = vld [vmem:[%s1 + $0x118] sm:$0xff]
  %v1467 = vld [vmem:[%s1 + $0x120] sm:$0xff]
  %v1468 = vld [vmem:[%s1 + $0x128] sm:$0xff]
  %v1469 = vld [vmem:[%s1 + $0x130] sm:$0xff]
  %v1470 = vld [vmem:[%s1 + $0x138] sm:$0xff]
  %v1471 = vld [vmem:[%s1 + $0x140] sm:$0xff]
  %v1472 = vld [vmem:[%s1 + $0x148] sm:$0xff]
  %v1473 = vld [vmem:[%s1 + $0x150] sm:$0xff]
  %v1474 = vld [vmem:[%s1 + $0x158] sm:$0xff]
  %v1475 = vld [vmem:[%s1 + $0x160] sm:$0xff]
  %v1476 = vld [vmem:[%s1 + $0x168] sm:$0xff]
  %v1477 = vld [vmem:[%s1 + $0x170] sm:$0xff]
  %v1478 = vld [vmem:[%s1 + $0x178] sm:$0xff]
  %v1479 = vld [vmem:[%s1 + $0x180] sm:$0xff]
  %v1480 = vld [vmem:[%s1 + $0x188] sm:$0xff]
  %v1481 = vld [vmem:[%s1 + $0x190] sm:$0xff]
  %v1482 = vld [vmem:[%s1 + $0x198] sm:$0xff]
  %v1483 = vld [vmem:[%s1 + $0x1a0] sm:$0xff]
  %v1484 = vld [vmem:[%s1 + $0x1a8] sm:$0xff]
  %v1485 = vld [vmem:[%s1 + $0x1b0] sm:$0xff]
  %v1486 = vld [vmem:[%s1 + $0x1b8] sm:$0xff]
  %v1487 = vld [vmem:[%s1 + $0x1c0] sm:$0xff]
  %v1488 = vld [vmem:[%s1 + $0x1c8] sm:$0xff]
  %v1489 = vld [vmem:[%s1 + $0x1d0] sm:$0xff]
  %v1490 = vld [vmem:[%s1 + $0x1d8] sm:$0xff]
  %v1491 = vld [vmem:[%s1 + $0x1e0] sm:$0xff]
  %v1492 = vld [vmem:[%s1 + $0x1e8] sm:$0xff]
  %v1493 = vld [vmem:[%s1 + $0x1f0] sm:$0xff]
  %v1494 = vld [vmem:[%s1 + $0x1f8] sm:$0xff]
  %1559 = vrot.lane.b32.xlu0 %v1431, 32
  %v1560 = vpop.permute.xlu0 %1559
  %1561 = vrot.lane.b32.xlu0 %v1432, 32
  %v1562 = vpop.permute.xlu0 %1561
  %1563 = vrot.lane.b32.xlu0 %v1433, 32
  %v1564 = vpop.permute.xlu0 %1563
  %1565 = vrot.lane.b32.xlu0 %v1434, 32
  %v1566 = vpop.permute.xlu0 %1565
  %1567 = vrot.lane.b32.xlu0 %v1435, 32
  %v1568 = vpop.permute.xlu0 %1567
  %1569 = vrot.lane.b32.xlu0 %v1436, 32
  %v1570 = vpop.permute.xlu0 %1569
  %1571 = vrot.lane.b32.xlu0 %v1437, 32
  %v1572 = vpop.permute.xlu0 %1571
  %1573 = vrot.lane.b32.xlu0 %v1438, 32
  %v1574 = vpop.permute.xlu0 %1573
  %1575 = vrot.lane.b32.xlu0 %v1439, 32
  %v1576 = vpop.permute.xlu0 %1575
  %1577 = vrot.lane.b32.xlu0 %v1440, 32
  %v1578 = vpop.permute.xlu0 %1577
  %1579 = vrot.lane.b32.xlu0 %v1441, 32
  %v1580 = vpop.permute.xlu0 %1579
  %1581 = vrot.lane.b32.xlu0 %v1442, 32
  %v1582 = vpop.permute.xlu0 %1581
  %1583 = vrot.lane.b32.xlu0 %v1443, 32
  %v1584 = vpop.permute.xlu0 %1583
  %1585 = vrot.lane.b32.xlu0 %v1444, 32
  %v1586 = vpop.permute.xlu0 %1585
  %1587 = vrot.lane.b32.xlu0 %v1445, 32
  %v1588 = vpop.permute.xlu0 %1587
  %1589 = vrot.lane.b32.xlu0 %v1446, 32
  %v1590 = vpop.permute.xlu0 %1589
  %1591 = vrot.lane.b32.xlu0 %v1447, 32
  %v1592 = vpop.permute.xlu0 %1591
  %1593 = vrot.lane.b32.xlu0 %v1448, 32
  %v1594 = vpop.permute.xlu0 %1593
  %1595 = vrot.lane.b32.xlu0 %v1449, 32
  %v1596 = vpop.permute.xlu0 %1595
  %1597 = vrot.lane.b32.xlu0 %v1450, 32
  %v1598 = vpop.permute.xlu0 %1597
  %1599 = vrot.lane.b32.xlu0 %v1451, 32
  %v1600 = vpop.permute.xlu0 %1599
  %1601 = vrot.lane.b32.xlu0 %v1452, 32
  %v1602 = vpop.permute.xlu0 %1601
  %1603 = vrot.lane.b32.xlu0 %v1453, 32
  %v1604 = vpop.permute.xlu0 %1603
  %1605 = vrot.lane.b32.xlu0 %v1454, 32
  %v1606 = vpop.permute.xlu0 %1605
  %1607 = vrot.lane.b32.xlu0 %v1455, 32
  %v1608 = vpop.permute.xlu0 %1607
  %1609 = vrot.lane.b32.xlu0 %v1456, 32
  %v1610 = vpop.permute.xlu0 %1609
  %1611 = vrot.lane.b32.xlu0 %v1457, 32
  %v1612 = vpop.permute.xlu0 %1611
  %1613 = vrot.lane.b32.xlu0 %v1458, 32
  %v1614 = vpop.permute.xlu0 %1613
  %1615 = vrot.lane.b32.xlu0 %v1459, 32
  %v1616 = vpop.permute.xlu0 %1615
  %1617 = vrot.lane.b32.xlu0 %v1460, 32
  %v1618 = vpop.permute.xlu0 %1617
  %1619 = vrot.lane.b32.xlu0 %v1461, 32
  %v1620 = vpop.permute.xlu0 %1619
  %1621 = vrot.lane.b32.xlu0 %v1462, 32
  %v1622 = vpop.permute.xlu0 %1621
  %1623 = vrot.lane.b32.xlu0 %v1463, 32
  %v1624 = vpop.permute.xlu0 %1623
  %1625 = vrot.lane.b32.xlu0 %v1464, 32
  %v1626 = vpop.permute.xlu0 %1625
  %1627 = vrot.lane.b32.xlu0 %v1465, 32
  %v1628 = vpop.permute.xlu0 %1627
  %1629 = vrot.lane.b32.xlu0 %v1466, 32
  %v1630 = vpop.permute.xlu0 %1629
  %1631 = vrot.lane.b32.xlu0 %v1467, 32
  %v1632 = vpop.permute.xlu0 %1631
  %1633 = vrot.lane.b32.xlu0 %v1468, 32
  %v1634 = vpop.permute.xlu0 %1633
  %1635 = vrot.lane.b32.xlu0 %v1469, 32
  %v1636 = vpop.permute.xlu0 %1635
  %1637 = vrot.lane.b32.xlu0 %v1470, 32
  %v1638 = vpop.permute.xlu0 %1637
  %1639 = vrot.lane.b32.xlu0 %v1471, 32
  %v1640 = vpop.permute.xlu0 %1639
  %1641 = vrot.lane.b32.xlu0 %v1472, 32
  %v1642 = vpop.permute.xlu0 %1641
  %1643 = vrot.lane.b32.xlu0 %v1473, 32
  %v1644 = vpop.permute.xlu0 %1643
  %1645 = vrot.lane.b32.xlu0 %v1474, 32
  %v1646 = vpop.permute.xlu0 %1645
  %1647 = vrot.lane.b32.xlu0 %v1475, 32
  %v1648 = vpop.permute.xlu0 %1647
  %1649 = vrot.lane.b32.xlu0 %v1476, 32
  %v1650 = vpop.permute.xlu0 %1649
  %1651 = vrot.lane.b32.xlu0 %v1477, 32
  %v1652 = vpop.permute.xlu0 %1651
  %1653 = vrot.lane.b32.xlu0 %v1478, 32
  %v1654 = vpop.permute.xlu0 %1653
  %1655 = vrot.lane.b32.xlu0 %v1479, 32
  %v1656 = vpop.permute.xlu0 %1655
  %1657 = vrot.lane.b32.xlu0 %v1480, 32
  %v1658 = vpop.permute.xlu0 %1657
  %1659 = vrot.lane.b32.xlu0 %v1481, 32
  %v1660 = vpop.permute.xlu0 %1659
  %1661 = vrot.lane.b32.xlu0 %v1482, 32
  %v1662 = vpop.permute.xlu0 %1661
  %1663 = vrot.lane.b32.xlu0 %v1483, 32
  %v1664 = vpop.permute.xlu0 %1663
  %1665 = vrot.lane.b32.xlu0 %v1484, 32
  %v1666 = vpop.permute.xlu0 %1665
  %1667 = vrot.lane.b32.xlu0 %v1485, 32
  %v1668 = vpop.permute.xlu0 %1667
  %1669 = vrot.lane.b32.xlu0 %v1486, 32
  %v1670 = vpop.permute.xlu0 %1669
  %1671 = vrot.lane.b32.xlu0 %v1487, 32
  %v1672 = vpop.permute.xlu0 %1671
  %1673 = vrot.lane.b32.xlu0 %v1488, 32
  %v1674 = vpop.permute.xlu0 %1673
  %1675 = vrot.lane.b32.xlu0 %v1489, 32
  %v1676 = vpop.permute.xlu0 %1675
  %1677 = vrot.lane.b32.xlu0 %v1490, 32
  %v1678 = vpop.permute.xlu0 %1677
  %1679 = vrot.lane.b32.xlu0 %v1491, 32
  %v1680 = vpop.permute.xlu0 %1679
  %1681 = vrot.lane.b32.xlu0 %v1492, 32
  %v1682 = vpop.permute.xlu0 %1681
  %1683 = vrot.lane.b32.xlu0 %v1493, 32
  %v1684 = vpop.permute.xlu0 %1683
  %1685 = vrot.lane.b32.xlu0 %v1494, 32
  %v1686 = vpop.permute.xlu0 %1685
  %vm1751 = vcmask 261120
  %v1752 = vsel %vm1751, %v1431, %v1560
  %v1753 = vsel %vm1751, %v1432, %v1562
  %v1754 = vsel %vm1751, %v1433, %v1564
  %v1755 = vsel %vm1751, %v1434, %v1566
  %v1756 = vsel %vm1751, %v1435, %v1568
  %v1757 = vsel %vm1751, %v1436, %v1570
  %v1758 = vsel %vm1751, %v1437, %v1572
  %v1759 = vsel %vm1751, %v1438, %v1574
  %v1760 = vsel %vm1751, %v1439, %v1576
  %v1761 = vsel %vm1751, %v1440, %v1578
  %v1762 = vsel %vm1751, %v1441, %v1580
  %v1763 = vsel %vm1751, %v1442, %v1582
  %v1764 = vsel %vm1751, %v1443, %v1584
  %v1765 = vsel %vm1751, %v1444, %v1586
  %v1766 = vsel %vm1751, %v1445, %v1588
  %v1767 = vsel %vm1751, %v1446, %v1590
  %v1768 = vsel %vm1751, %v1447, %v1592
  %v1769 = vsel %vm1751, %v1448, %v1594
  %v1770 = vsel %vm1751, %v1449, %v1596
  %v1771 = vsel %vm1751, %v1450, %v1598
  %v1772 = vsel %vm1751, %v1451, %v1600
  %v1773 = vsel %vm1751, %v1452, %v1602
  %v1774 = vsel %vm1751, %v1453, %v1604
  %v1775 = vsel %vm1751, %v1454, %v1606
  %v1776 = vsel %vm1751, %v1455, %v1608
  %v1777 = vsel %vm1751, %v1456, %v1610
  %v1778 = vsel %vm1751, %v1457, %v1612
  %v1779 = vsel %vm1751, %v1458, %v1614
  %v1780 = vsel %vm1751, %v1459, %v1616
  %v1781 = vsel %vm1751, %v1460, %v1618
  %v1782 = vsel %vm1751, %v1461, %v1620
  %v1783 = vsel %vm1751, %v1462, %v1622
  %v1784 = vsel %vm1751, %v1463, %v1624
  %v1785 = vsel %vm1751, %v1464, %v1626
  %v1786 = vsel %vm1751, %v1465, %v1628
  %v1787 = vsel %vm1751, %v1466, %v1630
  %v1788 = vsel %vm1751, %v1467, %v1632
  %v1789 = vsel %vm1751, %v1468, %v1634
  %v1790 = vsel %vm1751, %v1469, %v1636
  %v1791 = vsel %vm1751, %v1470, %v1638
  %v1792 = vsel %vm1751, %v1471, %v1640
  %v1793 = vsel %vm1751, %v1472, %v1642
  %v1794 = vsel %vm1751, %v1473, %v1644
  %v1795 = vsel %vm1751, %v1474, %v1646
  %v1796 = vsel %vm1751, %v1475, %v1648
  %v1797 = vsel %vm1751, %v1476, %v1650
  %v1798 = vsel %vm1751, %v1477, %v1652
  %v1799 = vsel %vm1751, %v1478, %v1654
  %v1800 = vsel %vm1751, %v1479, %v1656
  %v1801 = vsel %vm1751, %v1480, %v1658
  %v1802 = vsel %vm1751, %v1481, %v1660
  %v1803 = vsel %vm1751, %v1482, %v1662
  %v1804 = vsel %vm1751, %v1483, %v1664
  %v1805 = vsel %vm1751, %v1484, %v1666
  %v1806 = vsel %vm1751, %v1485, %v1668
  %v1807 = vsel %vm1751, %v1486, %v1670
  %v1808 = vsel %vm1751, %v1487, %v1672
  %v1809 = vsel %vm1751, %v1488, %v1674
  %v1810 = vsel %vm1751, %v1489, %v1676
  %v1811 = vsel %vm1751, %v1490, %v1678
  %v1812 = vsel %vm1751, %v1491, %v1680
  %v1813 = vsel %vm1751, %v1492, %v1682
  %v1814 = vsel %vm1751, %v1493, %v1684
  %v1815 = vsel %vm1751, %v1494, %v1686
  %v1816 = vld [vmem:[%s3] sm:$0xff]
  %v1817 = vld [vmem:[%s3 + $0x8] sm:$0xff]
  %v1818 = vld [vmem:[%s3 + $0x10] sm:$0xff]
  %v1819 = vld [vmem:[%s3 + $0x18] sm:$0xff]
  %v1820 = vld [vmem:[%s3 + $0x20] sm:$0xff]
  %v1821 = vld [vmem:[%s3 + $0x28] sm:$0xff]
  %v1822 = vld [vmem:[%s3 + $0x30] sm:$0xff]
  %v1823 = vld [vmem:[%s3 + $0x38] sm:$0xff]
  %v1824 = vld [vmem:[%s3 + $0x40] sm:$0xff]
  %v1825 = vld [vmem:[%s3 + $0x48] sm:$0xff]
  %v1826 = vld [vmem:[%s3 + $0x50] sm:$0xff]
  %v1827 = vld [vmem:[%s3 + $0x58] sm:$0xff]
  %v1828 = vld [vmem:[%s3 + $0x60] sm:$0xff]
  %v1829 = vld [vmem:[%s3 + $0x68] sm:$0xff]
  %v1830 = vld [vmem:[%s3 + $0x70] sm:$0xff]
  %v1831 = vld [vmem:[%s3 + $0x78] sm:$0xff]
  %v1832 = vld [vmem:[%s3 + $0x80] sm:$0xff]
  %v1833 = vld [vmem:[%s3 + $0x88] sm:$0xff]
  %v1834 = vld [vmem:[%s3 + $0x90] sm:$0xff]
  %v1835 = vld [vmem:[%s3 + $0x98] sm:$0xff]
  %v1836 = vld [vmem:[%s3 + $0xa0] sm:$0xff]
  %v1837 = vld [vmem:[%s3 + $0xa8] sm:$0xff]
  %v1838 = vld [vmem:[%s3 + $0xb0] sm:$0xff]
  %v1839 = vld [vmem:[%s3 + $0xb8] sm:$0xff]
  %v1840 = vld [vmem:[%s3 + $0xc0] sm:$0xff]
  %v1841 = vld [vmem:[%s3 + $0xc8] sm:$0xff]
  %v1842 = vld [vmem:[%s3 + $0xd0] sm:$0xff]
  %v1843 = vld [vmem:[%s3 + $0xd8] sm:$0xff]
  %v1844 = vld [vmem:[%s3 + $0xe0] sm:$0xff]
  %v1845 = vld [vmem:[%s3 + $0xe8] sm:$0xff]
  %v1846 = vld [vmem:[%s3 + $0xf0] sm:$0xff]
  %v1847 = vld [vmem:[%s3 + $0xf8] sm:$0xff]
  %v1848 = vld [vmem:[%s3 + $0x100] sm:$0xff]
  %v1849 = vld [vmem:[%s3 + $0x108] sm:$0xff]
  %v1850 = vld [vmem:[%s3 + $0x110] sm:$0xff]
  %v1851 = vld [vmem:[%s3 + $0x118] sm:$0xff]
  %v1852 = vld [vmem:[%s3 + $0x120] sm:$0xff]
  %v1853 = vld [vmem:[%s3 + $0x128] sm:$0xff]
  %v1854 = vld [vmem:[%s3 + $0x130] sm:$0xff]
  %v1855 = vld [vmem:[%s3 + $0x138] sm:$0xff]
  %v1856 = vld [vmem:[%s3 + $0x140] sm:$0xff]
  %v1857 = vld [vmem:[%s3 + $0x148] sm:$0xff]
  %v1858 = vld [vmem:[%s3 + $0x150] sm:$0xff]
  %v1859 = vld [vmem:[%s3 + $0x158] sm:$0xff]
  %v1860 = vld [vmem:[%s3 + $0x160] sm:$0xff]
  %v1861 = vld [vmem:[%s3 + $0x168] sm:$0xff]
  %v1862 = vld [vmem:[%s3 + $0x170] sm:$0xff]
  %v1863 = vld [vmem:[%s3 + $0x178] sm:$0xff]
  %v1864 = vld [vmem:[%s3 + $0x180] sm:$0xff]
  %v1865 = vld [vmem:[%s3 + $0x188] sm:$0xff]
  %v1866 = vld [vmem:[%s3 + $0x190] sm:$0xff]
  %v1867 = vld [vmem:[%s3 + $0x198] sm:$0xff]
  %v1868 = vld [vmem:[%s3 + $0x1a0] sm:$0xff]
  %v1869 = vld [vmem:[%s3 + $0x1a8] sm:$0xff]
  %v1870 = vld [vmem:[%s3 + $0x1b0] sm:$0xff]
  %v1871 = vld [vmem:[%s3 + $0x1b8] sm:$0xff]
  %v1872 = vld [vmem:[%s3 + $0x1c0] sm:$0xff]
  %v1873 = vld [vmem:[%s3 + $0x1c8] sm:$0xff]
  %v1874 = vld [vmem:[%s3 + $0x1d0] sm:$0xff]
  %v1875 = vld [vmem:[%s3 + $0x1d8] sm:$0xff]
  %v1876 = vld [vmem:[%s3 + $0x1e0] sm:$0xff]
  %v1877 = vld [vmem:[%s3 + $0x1e8] sm:$0xff]
  %v1878 = vld [vmem:[%s3 + $0x1f0] sm:$0xff]
  %v1879 = vld [vmem:[%s3 + $0x1f8] sm:$0xff]
  %v1880 = vmul.f32 %v1752, %v1816
  %v1881 = vmul.f32 %v1753, %v1817
  %v1882 = vmul.f32 %v1754, %v1818
  %v1883 = vmul.f32 %v1755, %v1819
  %v1884 = vmul.f32 %v1756, %v1820
  %v1885 = vmul.f32 %v1757, %v1821
  %v1886 = vmul.f32 %v1758, %v1822
  %v1887 = vmul.f32 %v1759, %v1823
  %v1888 = vmul.f32 %v1760, %v1824
  %v1889 = vmul.f32 %v1761, %v1825
  %v1890 = vmul.f32 %v1762, %v1826
  %v1891 = vmul.f32 %v1763, %v1827
  %v1892 = vmul.f32 %v1764, %v1828
  %v1893 = vmul.f32 %v1765, %v1829
  %v1894 = vmul.f32 %v1766, %v1830
  %v1895 = vmul.f32 %v1767, %v1831
  %v1896 = vmul.f32 %v1768, %v1832
  %v1897 = vmul.f32 %v1769, %v1833
  %v1898 = vmul.f32 %v1770, %v1834
  %v1899 = vmul.f32 %v1771, %v1835
  %v1900 = vmul.f32 %v1772, %v1836
  %v1901 = vmul.f32 %v1773, %v1837
  %v1902 = vmul.f32 %v1774, %v1838
  %v1903 = vmul.f32 %v1775, %v1839
  %v1904 = vmul.f32 %v1776, %v1840
  %v1905 = vmul.f32 %v1777, %v1841
  %v1906 = vmul.f32 %v1778, %v1842
  %v1907 = vmul.f32 %v1779, %v1843
  %v1908 = vmul.f32 %v1780, %v1844
  %v1909 = vmul.f32 %v1781, %v1845
  %v1910 = vmul.f32 %v1782, %v1846
  %v1911 = vmul.f32 %v1783, %v1847
  %v1912 = vmul.f32 %v1784, %v1848
  %v1913 = vmul.f32 %v1785, %v1849
  %v1914 = vmul.f32 %v1786, %v1850
  %v1915 = vmul.f32 %v1787, %v1851
  %v1916 = vmul.f32 %v1788, %v1852
  %v1917 = vmul.f32 %v1789, %v1853
  %v1918 = vmul.f32 %v1790, %v1854
  %v1919 = vmul.f32 %v1791, %v1855
  %v1920 = vmul.f32 %v1792, %v1856
  %v1921 = vmul.f32 %v1793, %v1857
  %v1922 = vmul.f32 %v1794, %v1858
  %v1923 = vmul.f32 %v1795, %v1859
  %v1924 = vmul.f32 %v1796, %v1860
  %v1925 = vmul.f32 %v1797, %v1861
  %v1926 = vmul.f32 %v1798, %v1862
  %v1927 = vmul.f32 %v1799, %v1863
  %v1928 = vmul.f32 %v1800, %v1864
  %v1929 = vmul.f32 %v1801, %v1865
  %v1930 = vmul.f32 %v1802, %v1866
  %v1931 = vmul.f32 %v1803, %v1867
  %v1932 = vmul.f32 %v1804, %v1868
  %v1933 = vmul.f32 %v1805, %v1869
  %v1934 = vmul.f32 %v1806, %v1870
  %v1935 = vmul.f32 %v1807, %v1871
  %v1936 = vmul.f32 %v1808, %v1872
  %v1937 = vmul.f32 %v1809, %v1873
  %v1938 = vmul.f32 %v1810, %v1874
  %v1939 = vmul.f32 %v1811, %v1875
  %v1940 = vmul.f32 %v1812, %v1876
  %v1941 = vmul.f32 %v1813, %v1877
  %v1942 = vmul.f32 %v1814, %v1878
  %v1943 = vmul.f32 %v1815, %v1879
  %v1944 = vadd.f32 %v1177, %v1880
  %v1945 = vadd.f32 %v1180, %v1881
  %v1946 = vadd.f32 %v1185, %v1882
  %v1947 = vadd.f32 %v1188, %v1883
  %v1948 = vadd.f32 %v1193, %v1884
  %v1949 = vadd.f32 %v1196, %v1885
  %v1950 = vadd.f32 %v1201, %v1886
  %v1951 = vadd.f32 %v1204, %v1887
  %v1952 = vadd.f32 %v1209, %v1888
  %v1953 = vadd.f32 %v1212, %v1889
  %v1954 = vadd.f32 %v1217, %v1890
  %v1955 = vadd.f32 %v1220, %v1891
  %v1956 = vadd.f32 %v1225, %v1892
  %v1957 = vadd.f32 %v1228, %v1893
  %v1958 = vadd.f32 %v1233, %v1894
  %v1959 = vadd.f32 %v1236, %v1895
  %v1960 = vadd.f32 %v1241, %v1896
  %v1961 = vadd.f32 %v1244, %v1897
  %v1962 = vadd.f32 %v1249, %v1898
  %v1963 = vadd.f32 %v1252, %v1899
  %v1964 = vadd.f32 %v1257, %v1900
  %v1965 = vadd.f32 %v1260, %v1901
  %v1966 = vadd.f32 %v1265, %v1902
  %v1967 = vadd.f32 %v1268, %v1903
  %v1968 = vadd.f32 %v1273, %v1904
  %v1969 = vadd.f32 %v1276, %v1905
  %v1970 = vadd.f32 %v1281, %v1906
  %v1971 = vadd.f32 %v1284, %v1907
  %v1972 = vadd.f32 %v1289, %v1908
  %v1973 = vadd.f32 %v1292, %v1909
  %v1974 = vadd.f32 %v1297, %v1910
  %v1975 = vadd.f32 %v1300, %v1911
  %v1976 = vadd.f32 %v1305, %v1912
  %v1977 = vadd.f32 %v1308, %v1913
  %v1978 = vadd.f32 %v1313, %v1914
  %v1979 = vadd.f32 %v1316, %v1915
  %v1980 = vadd.f32 %v1321, %v1916
  %v1981 = vadd.f32 %v1324, %v1917
  %v1982 = vadd.f32 %v1329, %v1918
  %v1983 = vadd.f32 %v1332, %v1919
  %v1984 = vadd.f32 %v1337, %v1920
  %v1985 = vadd.f32 %v1340, %v1921
  %v1986 = vadd.f32 %v1345, %v1922
  %v1987 = vadd.f32 %v1348, %v1923
  %v1988 = vadd.f32 %v1353, %v1924
  %v1989 = vadd.f32 %v1356, %v1925
  %v1990 = vadd.f32 %v1361, %v1926
  %v1991 = vadd.f32 %v1364, %v1927
  %v1992 = vadd.f32 %v1369, %v1928
  %v1993 = vadd.f32 %v1372, %v1929
  %v1994 = vadd.f32 %v1377, %v1930
  %v1995 = vadd.f32 %v1380, %v1931
  %v1996 = vadd.f32 %v1385, %v1932
  %v1997 = vadd.f32 %v1388, %v1933
  %v1998 = vadd.f32 %v1393, %v1934
  %v1999 = vadd.f32 %v1396, %v1935
  %v2000 = vadd.f32 %v1401, %v1936
  %v2001 = vadd.f32 %v1404, %v1937
  %v2002 = vadd.f32 %v1409, %v1938
  %v2003 = vadd.f32 %v1412, %v1939
  %v2004 = vadd.f32 %v1417, %v1940
  %v2005 = vadd.f32 %v1420, %v1941
  %v2006 = vadd.f32 %v1425, %v1942
  %v2007 = vadd.f32 %v1428, %v1943
  %v2008 = vxor.u32 %v1944, 2147483648
  %v2009 = vxor.u32 %v1945, 2147483648
  %v2010 = vxor.u32 %v1946, 2147483648
  %v2011 = vxor.u32 %v1947, 2147483648
  %v2012 = vxor.u32 %v1948, 2147483648
  %v2013 = vxor.u32 %v1949, 2147483648
  %v2014 = vxor.u32 %v1950, 2147483648
  %v2015 = vxor.u32 %v1951, 2147483648
  %v2016 = vxor.u32 %v1952, 2147483648
  %v2017 = vxor.u32 %v1953, 2147483648
  %v2018 = vxor.u32 %v1954, 2147483648
  %v2019 = vxor.u32 %v1955, 2147483648
  %v2020 = vxor.u32 %v1956, 2147483648
  %v2021 = vxor.u32 %v1957, 2147483648
  %v2022 = vxor.u32 %v1958, 2147483648
  %v2023 = vxor.u32 %v1959, 2147483648
  %v2024 = vxor.u32 %v1960, 2147483648
  %v2025 = vxor.u32 %v1961, 2147483648
  %v2026 = vxor.u32 %v1962, 2147483648
  %v2027 = vxor.u32 %v1963, 2147483648
  %v2028 = vxor.u32 %v1964, 2147483648
  %v2029 = vxor.u32 %v1965, 2147483648
  %v2030 = vxor.u32 %v1966, 2147483648
  %v2031 = vxor.u32 %v1967, 2147483648
  %v2032 = vxor.u32 %v1968, 2147483648
  %v2033 = vxor.u32 %v1969, 2147483648
  %v2034 = vxor.u32 %v1970, 2147483648
  %v2035 = vxor.u32 %v1971, 2147483648
  %v2036 = vxor.u32 %v1972, 2147483648
  %v2037 = vxor.u32 %v1973, 2147483648
  %v2038 = vxor.u32 %v1974, 2147483648
  %v2039 = vxor.u32 %v1975, 2147483648
  %v2040 = vxor.u32 %v1976, 2147483648
  %v2041 = vxor.u32 %v1977, 2147483648
  %v2042 = vxor.u32 %v1978, 2147483648
  %v2043 = vxor.u32 %v1979, 2147483648
  %v2044 = vxor.u32 %v1980, 2147483648
  %v2045 = vxor.u32 %v1981, 2147483648
  %v2046 = vxor.u32 %v1982, 2147483648
  %v2047 = vxor.u32 %v1983, 2147483648
  %v2048 = vxor.u32 %v1984, 2147483648
  %v2049 = vxor.u32 %v1985, 2147483648
  %v2050 = vxor.u32 %v1986, 2147483648
  %v2051 = vxor.u32 %v1987, 2147483648
  %v2052 = vxor.u32 %v1988, 2147483648
  %v2053 = vxor.u32 %v1989, 2147483648
  %v2054 = vxor.u32 %v1990, 2147483648
  %v2055 = vxor.u32 %v1991, 2147483648
  %v2056 = vxor.u32 %v1992, 2147483648
  %v2057 = vxor.u32 %v1993, 2147483648
  %v2058 = vxor.u32 %v1994, 2147483648
  %v2059 = vxor.u32 %v1995, 2147483648
  %v2060 = vxor.u32 %v1996, 2147483648
  %v2061 = vxor.u32 %v1997, 2147483648
  %v2062 = vxor.u32 %v1998, 2147483648
  %v2063 = vxor.u32 %v1999, 2147483648
  %v2064 = vxor.u32 %v2000, 2147483648
  %v2065 = vxor.u32 %v2001, 2147483648
  %v2066 = vxor.u32 %v2002, 2147483648
  %v2067 = vxor.u32 %v2003, 2147483648
  %v2068 = vxor.u32 %v2004, 2147483648
  %v2069 = vxor.u32 %v2005, 2147483648
  %v2070 = vxor.u32 %v2006, 2147483648
  %v2071 = vxor.u32 %v2007, 2147483648
  %v2072 = vmul.f32 %v2008, 1.442695
  %v2073 = vpow.pop %v2072
  %v2074 = vmul.f32 %v2009, 1.442695
  %v2075 = vpow.pop %v2074
  %v2076 = vmul.f32 %v2010, 1.442695
  %v2077 = vpow.pop %v2076
  %v2078 = vmul.f32 %v2011, 1.442695
  %v2079 = vpow.pop %v2078
  %v2080 = vmul.f32 %v2012, 1.442695
  %v2081 = vpow.pop %v2080
  %v2082 = vmul.f32 %v2013, 1.442695
  %v2083 = vpow.pop %v2082
  %v2084 = vmul.f32 %v2014, 1.442695
  %v2085 = vpow.pop %v2084
  %v2086 = vmul.f32 %v2015, 1.442695
  %v2087 = vpow.pop %v2086
  %v2088 = vmul.f32 %v2016, 1.442695
  %v2089 = vpow.pop %v2088
  %v2090 = vmul.f32 %v2017, 1.442695
  %v2091 = vpow.pop %v2090
  %v2092 = vmul.f32 %v2018, 1.442695
  %v2093 = vpow.pop %v2092
  %v2094 = vmul.f32 %v2019, 1.442695
  %v2095 = vpow.pop %v2094
  %v2096 = vmul.f32 %v2020, 1.442695
  %v2097 = vpow.pop %v2096
  %v2098 = vmul.f32 %v2021, 1.442695
  %v2099 = vpow.pop %v2098
  %v2100 = vmul.f32 %v2022, 1.442695
  %v2101 = vpow.pop %v2100
  %v2102 = vmul.f32 %v2023, 1.442695
  %v2103 = vpow.pop %v2102
  %v2104 = vmul.f32 %v2024, 1.442695
  %v2105 = vpow.pop %v2104
  %v2106 = vmul.f32 %v2025, 1.442695
  %v2107 = vpow.pop %v2106
  %v2108 = vmul.f32 %v2026, 1.442695
  %v2109 = vpow.pop %v2108
  %v2110 = vmul.f32 %v2027, 1.442695
  %v2111 = vpow.pop %v2110
  %v2112 = vmul.f32 %v2028, 1.442695
  %v2113 = vpow.pop %v2112
  %v2114 = vmul.f32 %v2029, 1.442695
  %v2115 = vpow.pop %v2114
  %v2116 = vmul.f32 %v2030, 1.442695
  %v2117 = vpow.pop %v2116
  %v2118 = vmul.f32 %v2031, 1.442695
  %v2119 = vpow.pop %v2118
  %v2120 = vmul.f32 %v2032, 1.442695
  %v2121 = vpow.pop %v2120
  %v2122 = vmul.f32 %v2033, 1.442695
  %v2123 = vpow.pop %v2122
  %v2124 = vmul.f32 %v2034, 1.442695
  %v2125 = vpow.pop %v2124
  %v2126 = vmul.f32 %v2035, 1.442695
  %v2127 = vpow.pop %v2126
  %v2128 = vmul.f32 %v2036, 1.442695
  %v2129 = vpow.pop %v2128
  %v2130 = vmul.f32 %v2037, 1.442695
  %v2131 = vpow.pop %v2130
  %v2132 = vmul.f32 %v2038, 1.442695
  %v2133 = vpow.pop %v2132
  %v2134 = vmul.f32 %v2039, 1.442695
  %v2135 = vpow.pop %v2134
  %v2136 = vmul.f32 %v2040, 1.442695
  %v2137 = vpow.pop %v2136
  %v2138 = vmul.f32 %v2041, 1.442695
  %v2139 = vpow.pop %v2138
  %v2140 = vmul.f32 %v2042, 1.442695
  %v2141 = vpow.pop %v2140
  %v2142 = vmul.f32 %v2043, 1.442695
  %v2143 = vpow.pop %v2142
  %v2144 = vmul.f32 %v2044, 1.442695
  %v2145 = vpow.pop %v2144
  %v2146 = vmul.f32 %v2045, 1.442695
  %v2147 = vpow.pop %v2146
  %v2148 = vmul.f32 %v2046, 1.442695
  %v2149 = vpow.pop %v2148
  %v2150 = vmul.f32 %v2047, 1.442695
  %v2151 = vpow.pop %v2150
  %v2152 = vmul.f32 %v2048, 1.442695
  %v2153 = vpow.pop %v2152
  %v2154 = vmul.f32 %v2049, 1.442695
  %v2155 = vpow.pop %v2154
  %v2156 = vmul.f32 %v2050, 1.442695
  %v2157 = vpow.pop %v2156
  %v2158 = vmul.f32 %v2051, 1.442695
  %v2159 = vpow.pop %v2158
  %v2160 = vmul.f32 %v2052, 1.442695
  %v2161 = vpow.pop %v2160
  %v2162 = vmul.f32 %v2053, 1.442695
  %v2163 = vpow.pop %v2162
  %v2164 = vmul.f32 %v2054, 1.442695
  %v2165 = vpow.pop %v2164
  %v2166 = vmul.f32 %v2055, 1.442695
  %v2167 = vpow.pop %v2166
  %v2168 = vmul.f32 %v2056, 1.442695
  %v2169 = vpow.pop %v2168
  %v2170 = vmul.f32 %v2057, 1.442695
  %v2171 = vpow.pop %v2170
  %v2172 = vmul.f32 %v2058, 1.442695
  %v2173 = vpow.pop %v2172
  %v2174 = vmul.f32 %v2059, 1.442695
  %v2175 = vpow.pop %v2174
  %v2176 = vmul.f32 %v2060, 1.442695
  %v2177 = vpow.pop %v2176
  %v2178 = vmul.f32 %v2061, 1.442695
  %v2179 = vpow.pop %v2178
  %v2180 = vmul.f32 %v2062, 1.442695
  %v2181 = vpow.pop %v2180
  %v2182 = vmul.f32 %v2063, 1.442695
  %v2183 = vpow.pop %v2182
  %v2184 = vmul.f32 %v2064, 1.442695
  %v2185 = vpow.pop %v2184
  %v2186 = vmul.f32 %v2065, 1.442695
  %v2187 = vpow.pop %v2186
  %v2188 = vmul.f32 %v2066, 1.442695
  %v2189 = vpow.pop %v2188
  %v2190 = vmul.f32 %v2067, 1.442695
  %v2191 = vpow.pop %v2190
  %v2192 = vmul.f32 %v2068, 1.442695
  %v2193 = vpow.pop %v2192
  %v2194 = vmul.f32 %v2069, 1.442695
  %v2195 = vpow.pop %v2194
  %v2196 = vmul.f32 %v2070, 1.442695
  %v2197 = vpow.pop %v2196
  %v2198 = vmul.f32 %v2071, 1.442695
  %v2199 = vpow.pop %v2198
  %v2200 = vadd.f32 %v2073, 1.0
  %v2201 = vadd.f32 %v2075, 1.0
  %v2202 = vadd.f32 %v2077, 1.0
  %v2203 = vadd.f32 %v2079, 1.0
  %v2204 = vadd.f32 %v2081, 1.0
  %v2205 = vadd.f32 %v2083, 1.0
  %v2206 = vadd.f32 %v2085, 1.0
  %v2207 = vadd.f32 %v2087, 1.0
  %v2208 = vadd.f32 %v2089, 1.0
  %v2209 = vadd.f32 %v2091, 1.0
  %v2210 = vadd.f32 %v2093, 1.0
  %v2211 = vadd.f32 %v2095, 1.0
  %v2212 = vadd.f32 %v2097, 1.0
  %v2213 = vadd.f32 %v2099, 1.0
  %v2214 = vadd.f32 %v2101, 1.0
  %v2215 = vadd.f32 %v2103, 1.0
  %v2216 = vadd.f32 %v2105, 1.0
  %v2217 = vadd.f32 %v2107, 1.0
  %v2218 = vadd.f32 %v2109, 1.0
  %v2219 = vadd.f32 %v2111, 1.0
  %v2220 = vadd.f32 %v2113, 1.0
  %v2221 = vadd.f32 %v2115, 1.0
  %v2222 = vadd.f32 %v2117, 1.0
  %v2223 = vadd.f32 %v2119, 1.0
  %v2224 = vadd.f32 %v2121, 1.0
  %v2225 = vadd.f32 %v2123, 1.0
  %v2226 = vadd.f32 %v2125, 1.0
  %v2227 = vadd.f32 %v2127, 1.0
  %v2228 = vadd.f32 %v2129, 1.0
  %v2229 = vadd.f32 %v2131, 1.0
  %v2230 = vadd.f32 %v2133, 1.0
  %v2231 = vadd.f32 %v2135, 1.0
  %v2232 = vadd.f32 %v2137, 1.0
  %v2233 = vadd.f32 %v2139, 1.0
  %v2234 = vadd.f32 %v2141, 1.0
  %v2235 = vadd.f32 %v2143, 1.0
  %v2236 = vadd.f32 %v2145, 1.0
  %v2237 = vadd.f32 %v2147, 1.0
  %v2238 = vadd.f32 %v2149, 1.0
  %v2239 = vadd.f32 %v2151, 1.0
  %v2240 = vadd.f32 %v2153, 1.0
  %v2241 = vadd.f32 %v2155, 1.0
  %v2242 = vadd.f32 %v2157, 1.0
  %v2243 = vadd.f32 %v2159, 1.0
  %v2244 = vadd.f32 %v2161, 1.0
  %v2245 = vadd.f32 %v2163, 1.0
  %v2246 = vadd.f32 %v2165, 1.0
  %v2247 = vadd.f32 %v2167, 1.0
  %v2248 = vadd.f32 %v2169, 1.0
  %v2249 = vadd.f32 %v2171, 1.0
  %v2250 = vadd.f32 %v2173, 1.0
  %v2251 = vadd.f32 %v2175, 1.0
  %v2252 = vadd.f32 %v2177, 1.0
  %v2253 = vadd.f32 %v2179, 1.0
  %v2254 = vadd.f32 %v2181, 1.0
  %v2255 = vadd.f32 %v2183, 1.0
  %v2256 = vadd.f32 %v2185, 1.0
  %v2257 = vadd.f32 %v2187, 1.0
  %v2258 = vadd.f32 %v2189, 1.0
  %v2259 = vadd.f32 %v2191, 1.0
  %v2260 = vadd.f32 %v2193, 1.0
  %v2261 = vadd.f32 %v2195, 1.0
  %v2262 = vadd.f32 %v2197, 1.0
  %v2263 = vadd.f32 %v2199, 1.0
  %v2264 = vrcp.pop %v2200
  %v2265 = vmul.f32 1.0, %v2264
  %v2266 = vrcp.pop %v2201
  %v2267 = vmul.f32 1.0, %v2266
  %v2268 = vrcp.pop %v2202
  %v2269 = vmul.f32 1.0, %v2268
  %v2270 = vrcp.pop %v2203
  %v2271 = vmul.f32 1.0, %v2270
  %v2272 = vrcp.pop %v2204
  %v2273 = vmul.f32 1.0, %v2272
  %v2274 = vrcp.pop %v2205
  %v2275 = vmul.f32 1.0, %v2274
  %v2276 = vrcp.pop %v2206
  %v2277 = vmul.f32 1.0, %v2276
  %v2278 = vrcp.pop %v2207
  %v2279 = vmul.f32 1.0, %v2278
  %v2280 = vrcp.pop %v2208
  %v2281 = vmul.f32 1.0, %v2280
  %v2282 = vrcp.pop %v2209
  %v2283 = vmul.f32 1.0, %v2282
  %v2284 = vrcp.pop %v2210
  %v2285 = vmul.f32 1.0, %v2284
  %v2286 = vrcp.pop %v2211
  %v2287 = vmul.f32 1.0, %v2286
  %v2288 = vrcp.pop %v2212
  %v2289 = vmul.f32 1.0, %v2288
  %v2290 = vrcp.pop %v2213
  %v2291 = vmul.f32 1.0, %v2290
  %v2292 = vrcp.pop %v2214
  %v2293 = vmul.f32 1.0, %v2292
  %v2294 = vrcp.pop %v2215
  %v2295 = vmul.f32 1.0, %v2294
  %v2296 = vrcp.pop %v2216
  %v2297 = vmul.f32 1.0, %v2296
  %v2298 = vrcp.pop %v2217
  %v2299 = vmul.f32 1.0, %v2298
  %v2300 = vrcp.pop %v2218
  %v2301 = vmul.f32 1.0, %v2300
  %v2302 = vrcp.pop %v2219
  %v2303 = vmul.f32 1.0, %v2302
  %v2304 = vrcp.pop %v2220
  %v2305 = vmul.f32 1.0, %v2304
  %v2306 = vrcp.pop %v2221
  %v2307 = vmul.f32 1.0, %v2306
  %v2308 = vrcp.pop %v2222
  %v2309 = vmul.f32 1.0, %v2308
  %v2310 = vrcp.pop %v2223
  %v2311 = vmul.f32 1.0, %v2310
  %v2312 = vrcp.pop %v2224
  %v2313 = vmul.f32 1.0, %v2312
  %v2314 = vrcp.pop %v2225
  %v2315 = vmul.f32 1.0, %v2314
  %v2316 = vrcp.pop %v2226
  %v2317 = vmul.f32 1.0, %v2316
  %v2318 = vrcp.pop %v2227
  %v2319 = vmul.f32 1.0, %v2318
  %v2320 = vrcp.pop %v2228
  %v2321 = vmul.f32 1.0, %v2320
  %v2322 = vrcp.pop %v2229
  %v2323 = vmul.f32 1.0, %v2322
  %v2324 = vrcp.pop %v2230
  %v2325 = vmul.f32 1.0, %v2324
  %v2326 = vrcp.pop %v2231
  %v2327 = vmul.f32 1.0, %v2326
  %v2328 = vrcp.pop %v2232
  %v2329 = vmul.f32 1.0, %v2328
  %v2330 = vrcp.pop %v2233
  %v2331 = vmul.f32 1.0, %v2330
  %v2332 = vrcp.pop %v2234
  %v2333 = vmul.f32 1.0, %v2332
  %v2334 = vrcp.pop %v2235
  %v2335 = vmul.f32 1.0, %v2334
  %v2336 = vrcp.pop %v2236
  %v2337 = vmul.f32 1.0, %v2336
  %v2338 = vrcp.pop %v2237
  %v2339 = vmul.f32 1.0, %v2338
  %v2340 = vrcp.pop %v2238
  %v2341 = vmul.f32 1.0, %v2340
  %v2342 = vrcp.pop %v2239
  %v2343 = vmul.f32 1.0, %v2342
  %v2344 = vrcp.pop %v2240
  %v2345 = vmul.f32 1.0, %v2344
  %v2346 = vrcp.pop %v2241
  %v2347 = vmul.f32 1.0, %v2346
  %v2348 = vrcp.pop %v2242
  %v2349 = vmul.f32 1.0, %v2348
  %v2350 = vrcp.pop %v2243
  %v2351 = vmul.f32 1.0, %v2350
  %v2352 = vrcp.pop %v2244
  %v2353 = vmul.f32 1.0, %v2352
  %v2354 = vrcp.pop %v2245
  %v2355 = vmul.f32 1.0, %v2354
  %v2356 = vrcp.pop %v2246
  %v2357 = vmul.f32 1.0, %v2356
  %v2358 = vrcp.pop %v2247
  %v2359 = vmul.f32 1.0, %v2358
  %v2360 = vrcp.pop %v2248
  %v2361 = vmul.f32 1.0, %v2360
  %v2362 = vrcp.pop %v2249
  %v2363 = vmul.f32 1.0, %v2362
  %v2364 = vrcp.pop %v2250
  %v2365 = vmul.f32 1.0, %v2364
  %v2366 = vrcp.pop %v2251
  %v2367 = vmul.f32 1.0, %v2366
  %v2368 = vrcp.pop %v2252
  %v2369 = vmul.f32 1.0, %v2368
  %v2370 = vrcp.pop %v2253
  %v2371 = vmul.f32 1.0, %v2370
  %v2372 = vrcp.pop %v2254
  %v2373 = vmul.f32 1.0, %v2372
  %v2374 = vrcp.pop %v2255
  %v2375 = vmul.f32 1.0, %v2374
  %v2376 = vrcp.pop %v2256
  %v2377 = vmul.f32 1.0, %v2376
  %v2378 = vrcp.pop %v2257
  %v2379 = vmul.f32 1.0, %v2378
  %v2380 = vrcp.pop %v2258
  %v2381 = vmul.f32 1.0, %v2380
  %v2382 = vrcp.pop %v2259
  %v2383 = vmul.f32 1.0, %v2382
  %v2384 = vrcp.pop %v2260
  %v2385 = vmul.f32 1.0, %v2384
  %v2386 = vrcp.pop %v2261
  %v2387 = vmul.f32 1.0, %v2386
  %v2388 = vrcp.pop %v2262
  %v2389 = vmul.f32 1.0, %v2388
  %v2390 = vrcp.pop %v2263
  %v2391 = vmul.f32 1.0, %v2390
  %v2392 = vmul.f32 %v2265, %v1560
  %v2393 = vmul.f32 %v2267, %v1562
  %v2394 = vmul.f32 %v2269, %v1564
  %v2395 = vmul.f32 %v2271, %v1566
  %v2396 = vmul.f32 %v2273, %v1568
  %v2397 = vmul.f32 %v2275, %v1570
  %v2398 = vmul.f32 %v2277, %v1572
  %v2399 = vmul.f32 %v2279, %v1574
  %v2400 = vmul.f32 %v2281, %v1576
  %v2401 = vmul.f32 %v2283, %v1578
  %v2402 = vmul.f32 %v2285, %v1580
  %v2403 = vmul.f32 %v2287, %v1582
  %v2404 = vmul.f32 %v2289, %v1584
  %v2405 = vmul.f32 %v2291, %v1586
  %v2406 = vmul.f32 %v2293, %v1588
  %v2407 = vmul.f32 %v2295, %v1590
  %v2408 = vmul.f32 %v2297, %v1592
  %v2409 = vmul.f32 %v2299, %v1594
  %v2410 = vmul.f32 %v2301, %v1596
  %v2411 = vmul.f32 %v2303, %v1598
  %v2412 = vmul.f32 %v2305, %v1600
  %v2413 = vmul.f32 %v2307, %v1602
  %v2414 = vmul.f32 %v2309, %v1604
  %v2415 = vmul.f32 %v2311, %v1606
  %v2416 = vmul.f32 %v2313, %v1608
  %v2417 = vmul.f32 %v2315, %v1610
  %v2418 = vmul.f32 %v2317, %v1612
  %v2419 = vmul.f32 %v2319, %v1614
  %v2420 = vmul.f32 %v2321, %v1616
  %v2421 = vmul.f32 %v2323, %v1618
  %v2422 = vmul.f32 %v2325, %v1620
  %v2423 = vmul.f32 %v2327, %v1622
  %v2424 = vmul.f32 %v2329, %v1624
  %v2425 = vmul.f32 %v2331, %v1626
  %v2426 = vmul.f32 %v2333, %v1628
  %v2427 = vmul.f32 %v2335, %v1630
  %v2428 = vmul.f32 %v2337, %v1632
  %v2429 = vmul.f32 %v2339, %v1634
  %v2430 = vmul.f32 %v2341, %v1636
  %v2431 = vmul.f32 %v2343, %v1638
  %v2432 = vmul.f32 %v2345, %v1640
  %v2433 = vmul.f32 %v2347, %v1642
  %v2434 = vmul.f32 %v2349, %v1644
  %v2435 = vmul.f32 %v2351, %v1646
  %v2436 = vmul.f32 %v2353, %v1648
  %v2437 = vmul.f32 %v2355, %v1650
  %v2438 = vmul.f32 %v2357, %v1652
  %v2439 = vmul.f32 %v2359, %v1654
  %v2440 = vmul.f32 %v2361, %v1656
  %v2441 = vmul.f32 %v2363, %v1658
  %v2442 = vmul.f32 %v2365, %v1660
  %v2443 = vmul.f32 %v2367, %v1662
  %v2444 = vmul.f32 %v2369, %v1664
  %v2445 = vmul.f32 %v2371, %v1666
  %v2446 = vmul.f32 %v2373, %v1668
  %v2447 = vmul.f32 %v2375, %v1670
  %v2448 = vmul.f32 %v2377, %v1672
  %v2449 = vmul.f32 %v2379, %v1674
  %v2450 = vmul.f32 %v2381, %v1676
  %v2451 = vmul.f32 %v2383, %v1678
  %v2452 = vmul.f32 %v2385, %v1680
  %v2453 = vmul.f32 %v2387, %v1682
  %v2454 = vmul.f32 %v2389, %v1684
  %v2455 = vmul.f32 %v2391, %v1686
  %v2456 = vtanh.pop %v1177
  %v2457 = vtanh.pop %v1180
  %v2458 = vtanh.pop %v1185
  %v2459 = vtanh.pop %v1188
  %v2460 = vtanh.pop %v1193
  %v2461 = vtanh.pop %v1196
  %v2462 = vtanh.pop %v1201
  %v2463 = vtanh.pop %v1204
  %v2464 = vtanh.pop %v1209
  %v2465 = vtanh.pop %v1212
  %v2466 = vtanh.pop %v1217
  %v2467 = vtanh.pop %v1220
  %v2468 = vtanh.pop %v1225
  %v2469 = vtanh.pop %v1228
  %v2470 = vtanh.pop %v1233
  %v2471 = vtanh.pop %v1236
  %v2472 = vtanh.pop %v1241
  %v2473 = vtanh.pop %v1244
  %v2474 = vtanh.pop %v1249
  %v2475 = vtanh.pop %v1252
  %v2476 = vtanh.pop %v1257
  %v2477 = vtanh.pop %v1260
  %v2478 = vtanh.pop %v1265
  %v2479 = vtanh.pop %v1268
  %v2480 = vtanh.pop %v1273
  %v2481 = vtanh.pop %v1276
  %v2482 = vtanh.pop %v1281
  %v2483 = vtanh.pop %v1284
  %v2484 = vtanh.pop %v1289
  %v2485 = vtanh.pop %v1292
  %v2486 = vtanh.pop %v1297
  %v2487 = vtanh.pop %v1300
  %v2488 = vtanh.pop %v1305
  %v2489 = vtanh.pop %v1308
  %v2490 = vtanh.pop %v1313
  %v2491 = vtanh.pop %v1316
  %v2492 = vtanh.pop %v1321
  %v2493 = vtanh.pop %v1324
  %v2494 = vtanh.pop %v1329
  %v2495 = vtanh.pop %v1332
  %v2496 = vtanh.pop %v1337
  %v2497 = vtanh.pop %v1340
  %v2498 = vtanh.pop %v1345
  %v2499 = vtanh.pop %v1348
  %v2500 = vtanh.pop %v1353
  %v2501 = vtanh.pop %v1356
  %v2502 = vtanh.pop %v1361
  %v2503 = vtanh.pop %v1364
  %v2504 = vtanh.pop %v1369
  %v2505 = vtanh.pop %v1372
  %v2506 = vtanh.pop %v1377
  %v2507 = vtanh.pop %v1380
  %v2508 = vtanh.pop %v1385
  %v2509 = vtanh.pop %v1388
  %v2510 = vtanh.pop %v1393
  %v2511 = vtanh.pop %v1396
  %v2512 = vtanh.pop %v1401
  %v2513 = vtanh.pop %v1404
  %v2514 = vtanh.pop %v1409
  %v2515 = vtanh.pop %v1412
  %v2516 = vtanh.pop %v1417
  %v2517 = vtanh.pop %v1420
  %v2518 = vtanh.pop %v1425
  %v2519 = vtanh.pop %v1428
  %2584 = vrot.lane.b32.xlu0 %v2456, 64
  %v2585 = vpop.permute.xlu0 %2584
  %2586 = vrot.lane.b32.xlu0 %v2457, 64
  %v2587 = vpop.permute.xlu0 %2586
  %2588 = vrot.lane.b32.xlu0 %v2458, 64
  %v2589 = vpop.permute.xlu0 %2588
  %2590 = vrot.lane.b32.xlu0 %v2459, 64
  %v2591 = vpop.permute.xlu0 %2590
  %2592 = vrot.lane.b32.xlu0 %v2460, 64
  %v2593 = vpop.permute.xlu0 %2592
  %2594 = vrot.lane.b32.xlu0 %v2461, 64
  %v2595 = vpop.permute.xlu0 %2594
  %2596 = vrot.lane.b32.xlu0 %v2462, 64
  %v2597 = vpop.permute.xlu0 %2596
  %2598 = vrot.lane.b32.xlu0 %v2463, 64
  %v2599 = vpop.permute.xlu0 %2598
  %2600 = vrot.lane.b32.xlu0 %v2464, 64
  %v2601 = vpop.permute.xlu0 %2600
  %2602 = vrot.lane.b32.xlu0 %v2465, 64
  %v2603 = vpop.permute.xlu0 %2602
  %2604 = vrot.lane.b32.xlu0 %v2466, 64
  %v2605 = vpop.permute.xlu0 %2604
  %2606 = vrot.lane.b32.xlu0 %v2467, 64
  %v2607 = vpop.permute.xlu0 %2606
  %2608 = vrot.lane.b32.xlu0 %v2468, 64
  %v2609 = vpop.permute.xlu0 %2608
  %2610 = vrot.lane.b32.xlu0 %v2469, 64
  %v2611 = vpop.permute.xlu0 %2610
  %2612 = vrot.lane.b32.xlu0 %v2470, 64
  %v2613 = vpop.permute.xlu0 %2612
  %2614 = vrot.lane.b32.xlu0 %v2471, 64
  %v2615 = vpop.permute.xlu0 %2614
  %2616 = vrot.lane.b32.xlu0 %v2472, 64
  %v2617 = vpop.permute.xlu0 %2616
  %2618 = vrot.lane.b32.xlu0 %v2473, 64
  %v2619 = vpop.permute.xlu0 %2618
  %2620 = vrot.lane.b32.xlu0 %v2474, 64
  %v2621 = vpop.permute.xlu0 %2620
  %2622 = vrot.lane.b32.xlu0 %v2475, 64
  %v2623 = vpop.permute.xlu0 %2622
  %2624 = vrot.lane.b32.xlu0 %v2476, 64
  %v2625 = vpop.permute.xlu0 %2624
  %2626 = vrot.lane.b32.xlu0 %v2477, 64
  %v2627 = vpop.permute.xlu0 %2626
  %2628 = vrot.lane.b32.xlu0 %v2478, 64
  %v2629 = vpop.permute.xlu0 %2628
  %2630 = vrot.lane.b32.xlu0 %v2479, 64
  %v2631 = vpop.permute.xlu0 %2630
  %2632 = vrot.lane.b32.xlu0 %v2480, 64
  %v2633 = vpop.permute.xlu0 %2632
  %2634 = vrot.lane.b32.xlu0 %v2481, 64
  %v2635 = vpop.permute.xlu0 %2634
  %2636 = vrot.lane.b32.xlu0 %v2482, 64
  %v2637 = vpop.permute.xlu0 %2636
  %2638 = vrot.lane.b32.xlu0 %v2483, 64
  %v2639 = vpop.permute.xlu0 %2638
  %2640 = vrot.lane.b32.xlu0 %v2484, 64
  %v2641 = vpop.permute.xlu0 %2640
  %2642 = vrot.lane.b32.xlu0 %v2485, 64
  %v2643 = vpop.permute.xlu0 %2642
  %2644 = vrot.lane.b32.xlu0 %v2486, 64
  %v2645 = vpop.permute.xlu0 %2644
  %2646 = vrot.lane.b32.xlu0 %v2487, 64
  %v2647 = vpop.permute.xlu0 %2646
  %2648 = vrot.lane.b32.xlu0 %v2488, 64
  %v2649 = vpop.permute.xlu0 %2648
  %2650 = vrot.lane.b32.xlu0 %v2489, 64
  %v2651 = vpop.permute.xlu0 %2650
  %2652 = vrot.lane.b32.xlu0 %v2490, 64
  %v2653 = vpop.permute.xlu0 %2652
  %2654 = vrot.lane.b32.xlu0 %v2491, 64
  %v2655 = vpop.permute.xlu0 %2654
  %2656 = vrot.lane.b32.xlu0 %v2492, 64
  %v2657 = vpop.permute.xlu0 %2656
  %2658 = vrot.lane.b32.xlu0 %v2493, 64
  %v2659 = vpop.permute.xlu0 %2658
  %2660 = vrot.lane.b32.xlu0 %v2494, 64
  %v2661 = vpop.permute.xlu0 %2660
  %2662 = vrot.lane.b32.xlu0 %v2495, 64
  %v2663 = vpop.permute.xlu0 %2662
  %2664 = vrot.lane.b32.xlu0 %v2496, 64
  %v2665 = vpop.permute.xlu0 %2664
  %2666 = vrot.lane.b32.xlu0 %v2497, 64
  %v2667 = vpop.permute.xlu0 %2666
  %2668 = vrot.lane.b32.xlu0 %v2498, 64
  %v2669 = vpop.permute.xlu0 %2668
  %2670 = vrot.lane.b32.xlu0 %v2499, 64
  %v2671 = vpop.permute.xlu0 %2670
  %2672 = vrot.lane.b32.xlu0 %v2500, 64
  %v2673 = vpop.permute.xlu0 %2672
  %2674 = vrot.lane.b32.xlu0 %v2501, 64
  %v2675 = vpop.permute.xlu0 %2674
  %2676 = vrot.lane.b32.xlu0 %v2502, 64
  %v2677 = vpop.permute.xlu0 %2676
  %2678 = vrot.lane.b32.xlu0 %v2503, 64
  %v2679 = vpop.permute.xlu0 %2678
  %2680 = vrot.lane.b32.xlu0 %v2504, 64
  %v2681 = vpop.permute.xlu0 %2680
  %2682 = vrot.lane.b32.xlu0 %v2505, 64
  %v2683 = vpop.permute.xlu0 %2682
  %2684 = vrot.lane.b32.xlu0 %v2506, 64
  %v2685 = vpop.permute.xlu0 %2684
  %2686 = vrot.lane.b32.xlu0 %v2507, 64
  %v2687 = vpop.permute.xlu0 %2686
  %2688 = vrot.lane.b32.xlu0 %v2508, 64
  %v2689 = vpop.permute.xlu0 %2688
  %2690 = vrot.lane.b32.xlu0 %v2509, 64
  %v2691 = vpop.permute.xlu0 %2690
  %2692 = vrot.lane.b32.xlu0 %v2510, 64
  %v2693 = vpop.permute.xlu0 %2692
  %2694 = vrot.lane.b32.xlu0 %v2511, 64
  %v2695 = vpop.permute.xlu0 %2694
  %2696 = vrot.lane.b32.xlu0 %v2512, 64
  %v2697 = vpop.permute.xlu0 %2696
  %2698 = vrot.lane.b32.xlu0 %v2513, 64
  %v2699 = vpop.permute.xlu0 %2698
  %2700 = vrot.lane.b32.xlu0 %v2514, 64
  %v2701 = vpop.permute.xlu0 %2700
  %2702 = vrot.lane.b32.xlu0 %v2515, 64
  %v2703 = vpop.permute.xlu0 %2702
  %2704 = vrot.lane.b32.xlu0 %v2516, 64
  %v2705 = vpop.permute.xlu0 %2704
  %2706 = vrot.lane.b32.xlu0 %v2517, 64
  %v2707 = vpop.permute.xlu0 %2706
  %2708 = vrot.lane.b32.xlu0 %v2518, 64
  %v2709 = vpop.permute.xlu0 %2708
  %2710 = vrot.lane.b32.xlu0 %v2519, 64
  %v2711 = vpop.permute.xlu0 %2710
  %v2776 = vmul.f32 %v2265, %v2585
  %v2777 = vmul.f32 %v2267, %v2587
  %v2778 = vmul.f32 %v2269, %v2589
  %v2779 = vmul.f32 %v2271, %v2591
  %v2780 = vmul.f32 %v2273, %v2593
  %v2781 = vmul.f32 %v2275, %v2595
  %v2782 = vmul.f32 %v2277, %v2597
  %v2783 = vmul.f32 %v2279, %v2599
  %v2784 = vmul.f32 %v2281, %v2601
  %v2785 = vmul.f32 %v2283, %v2603
  %v2786 = vmul.f32 %v2285, %v2605
  %v2787 = vmul.f32 %v2287, %v2607
  %v2788 = vmul.f32 %v2289, %v2609
  %v2789 = vmul.f32 %v2291, %v2611
  %v2790 = vmul.f32 %v2293, %v2613
  %v2791 = vmul.f32 %v2295, %v2615
  %v2792 = vmul.f32 %v2297, %v2617
  %v2793 = vmul.f32 %v2299, %v2619
  %v2794 = vmul.f32 %v2301, %v2621
  %v2795 = vmul.f32 %v2303, %v2623
  %v2796 = vmul.f32 %v2305, %v2625
  %v2797 = vmul.f32 %v2307, %v2627
  %v2798 = vmul.f32 %v2309, %v2629
  %v2799 = vmul.f32 %v2311, %v2631
  %v2800 = vmul.f32 %v2313, %v2633
  %v2801 = vmul.f32 %v2315, %v2635
  %v2802 = vmul.f32 %v2317, %v2637
  %v2803 = vmul.f32 %v2319, %v2639
  %v2804 = vmul.f32 %v2321, %v2641
  %v2805 = vmul.f32 %v2323, %v2643
  %v2806 = vmul.f32 %v2325, %v2645
  %v2807 = vmul.f32 %v2327, %v2647
  %v2808 = vmul.f32 %v2329, %v2649
  %v2809 = vmul.f32 %v2331, %v2651
  %v2810 = vmul.f32 %v2333, %v2653
  %v2811 = vmul.f32 %v2335, %v2655
  %v2812 = vmul.f32 %v2337, %v2657
  %v2813 = vmul.f32 %v2339, %v2659
  %v2814 = vmul.f32 %v2341, %v2661
  %v2815 = vmul.f32 %v2343, %v2663
  %v2816 = vmul.f32 %v2345, %v2665
  %v2817 = vmul.f32 %v2347, %v2667
  %v2818 = vmul.f32 %v2349, %v2669
  %v2819 = vmul.f32 %v2351, %v2671
  %v2820 = vmul.f32 %v2353, %v2673
  %v2821 = vmul.f32 %v2355, %v2675
  %v2822 = vmul.f32 %v2357, %v2677
  %v2823 = vmul.f32 %v2359, %v2679
  %v2824 = vmul.f32 %v2361, %v2681
  %v2825 = vmul.f32 %v2363, %v2683
  %v2826 = vmul.f32 %v2365, %v2685
  %v2827 = vmul.f32 %v2367, %v2687
  %v2828 = vmul.f32 %v2369, %v2689
  %v2829 = vmul.f32 %v2371, %v2691
  %v2830 = vmul.f32 %v2373, %v2693
  %v2831 = vmul.f32 %v2375, %v2695
  %v2832 = vmul.f32 %v2377, %v2697
  %v2833 = vmul.f32 %v2379, %v2699
  %v2834 = vmul.f32 %v2381, %v2701
  %v2835 = vmul.f32 %v2383, %v2703
  %v2836 = vmul.f32 %v2385, %v2705
  %v2837 = vmul.f32 %v2387, %v2707
  %v2838 = vmul.f32 %v2389, %v2709
  %v2839 = vmul.f32 %v2391, %v2711
  %2904 = vrot.lane.b32.xlu0 %v2776, 32
  %v2905 = vpop.permute.xlu0 %2904
  %2906 = vrot.lane.b32.xlu0 %v2777, 32
  %v2907 = vpop.permute.xlu0 %2906
  %2908 = vrot.lane.b32.xlu0 %v2778, 32
  %v2909 = vpop.permute.xlu0 %2908
  %2910 = vrot.lane.b32.xlu0 %v2779, 32
  %v2911 = vpop.permute.xlu0 %2910
  %2912 = vrot.lane.b32.xlu0 %v2780, 32
  %v2913 = vpop.permute.xlu0 %2912
  %2914 = vrot.lane.b32.xlu0 %v2781, 32
  %v2915 = vpop.permute.xlu0 %2914
  %2916 = vrot.lane.b32.xlu0 %v2782, 32
  %v2917 = vpop.permute.xlu0 %2916
  %2918 = vrot.lane.b32.xlu0 %v2783, 32
  %v2919 = vpop.permute.xlu0 %2918
  %2920 = vrot.lane.b32.xlu0 %v2784, 32
  %v2921 = vpop.permute.xlu0 %2920
  %2922 = vrot.lane.b32.xlu0 %v2785, 32
  %v2923 = vpop.permute.xlu0 %2922
  %2924 = vrot.lane.b32.xlu0 %v2786, 32
  %v2925 = vpop.permute.xlu0 %2924
  %2926 = vrot.lane.b32.xlu0 %v2787, 32
  %v2927 = vpop.permute.xlu0 %2926
  %2928 = vrot.lane.b32.xlu0 %v2788, 32
  %v2929 = vpop.permute.xlu0 %2928
  %2930 = vrot.lane.b32.xlu0 %v2789, 32
  %v2931 = vpop.permute.xlu0 %2930
  %2932 = vrot.lane.b32.xlu0 %v2790, 32
  %v2933 = vpop.permute.xlu0 %2932
  %2934 = vrot.lane.b32.xlu0 %v2791, 32
  %v2935 = vpop.permute.xlu0 %2934
  %2936 = vrot.lane.b32.xlu0 %v2792, 32
  %v2937 = vpop.permute.xlu0 %2936
  %2938 = vrot.lane.b32.xlu0 %v2793, 32
  %v2939 = vpop.permute.xlu0 %2938
  %2940 = vrot.lane.b32.xlu0 %v2794, 32
  %v2941 = vpop.permute.xlu0 %2940
  %2942 = vrot.lane.b32.xlu0 %v2795, 32
  %v2943 = vpop.permute.xlu0 %2942
  %2944 = vrot.lane.b32.xlu0 %v2796, 32
  %v2945 = vpop.permute.xlu0 %2944
  %2946 = vrot.lane.b32.xlu0 %v2797, 32
  %v2947 = vpop.permute.xlu0 %2946
  %2948 = vrot.lane.b32.xlu0 %v2798, 32
  %v2949 = vpop.permute.xlu0 %2948
  %2950 = vrot.lane.b32.xlu0 %v2799, 32
  %v2951 = vpop.permute.xlu0 %2950
  %2952 = vrot.lane.b32.xlu0 %v2800, 32
  %v2953 = vpop.permute.xlu0 %2952
  %2954 = vrot.lane.b32.xlu0 %v2801, 32
  %v2955 = vpop.permute.xlu0 %2954
  %2956 = vrot.lane.b32.xlu0 %v2802, 32
  %v2957 = vpop.permute.xlu0 %2956
  %2958 = vrot.lane.b32.xlu0 %v2803, 32
  %v2959 = vpop.permute.xlu0 %2958
  %2960 = vrot.lane.b32.xlu0 %v2804, 32
  %v2961 = vpop.permute.xlu0 %2960
  %2962 = vrot.lane.b32.xlu0 %v2805, 32
  %v2963 = vpop.permute.xlu0 %2962
  %2964 = vrot.lane.b32.xlu0 %v2806, 32
  %v2965 = vpop.permute.xlu0 %2964
  %2966 = vrot.lane.b32.xlu0 %v2807, 32
  %v2967 = vpop.permute.xlu0 %2966
  %2968 = vrot.lane.b32.xlu0 %v2808, 32
  %v2969 = vpop.permute.xlu0 %2968
  %2970 = vrot.lane.b32.xlu0 %v2809, 32
  %v2971 = vpop.permute.xlu0 %2970
  %2972 = vrot.lane.b32.xlu0 %v2810, 32
  %v2973 = vpop.permute.xlu0 %2972
  %2974 = vrot.lane.b32.xlu0 %v2811, 32
  %v2975 = vpop.permute.xlu0 %2974
  %2976 = vrot.lane.b32.xlu0 %v2812, 32
  %v2977 = vpop.permute.xlu0 %2976
  %2978 = vrot.lane.b32.xlu0 %v2813, 32
  %v2979 = vpop.permute.xlu0 %2978
  %2980 = vrot.lane.b32.xlu0 %v2814, 32
  %v2981 = vpop.permute.xlu0 %2980
  %2982 = vrot.lane.b32.xlu0 %v2815, 32
  %v2983 = vpop.permute.xlu0 %2982
  %2984 = vrot.lane.b32.xlu0 %v2816, 32
  %v2985 = vpop.permute.xlu0 %2984
  %2986 = vrot.lane.b32.xlu0 %v2817, 32
  %v2987 = vpop.permute.xlu0 %2986
  %2988 = vrot.lane.b32.xlu0 %v2818, 32
  %v2989 = vpop.permute.xlu0 %2988
  %2990 = vrot.lane.b32.xlu0 %v2819, 32
  %v2991 = vpop.permute.xlu0 %2990
  %2992 = vrot.lane.b32.xlu0 %v2820, 32
  %v2993 = vpop.permute.xlu0 %2992
  %2994 = vrot.lane.b32.xlu0 %v2821, 32
  %v2995 = vpop.permute.xlu0 %2994
  %2996 = vrot.lane.b32.xlu0 %v2822, 32
  %v2997 = vpop.permute.xlu0 %2996
  %2998 = vrot.lane.b32.xlu0 %v2823, 32
  %v2999 = vpop.permute.xlu0 %2998
  %3000 = vrot.lane.b32.xlu0 %v2824, 32
  %v3001 = vpop.permute.xlu0 %3000
  %3002 = vrot.lane.b32.xlu0 %v2825, 32
  %v3003 = vpop.permute.xlu0 %3002
  %3004 = vrot.lane.b32.xlu0 %v2826, 32
  %v3005 = vpop.permute.xlu0 %3004
  %3006 = vrot.lane.b32.xlu0 %v2827, 32
  %v3007 = vpop.permute.xlu0 %3006
  %3008 = vrot.lane.b32.xlu0 %v2828, 32
  %v3009 = vpop.permute.xlu0 %3008
  %3010 = vrot.lane.b32.xlu0 %v2829, 32
  %v3011 = vpop.permute.xlu0 %3010
  %3012 = vrot.lane.b32.xlu0 %v2830, 32
  %v3013 = vpop.permute.xlu0 %3012
  %3014 = vrot.lane.b32.xlu0 %v2831, 32
  %v3015 = vpop.permute.xlu0 %3014
  %3016 = vrot.lane.b32.xlu0 %v2832, 32
  %v3017 = vpop.permute.xlu0 %3016
  %3018 = vrot.lane.b32.xlu0 %v2833, 32
  %v3019 = vpop.permute.xlu0 %3018
  %3020 = vrot.lane.b32.xlu0 %v2834, 32
  %v3021 = vpop.permute.xlu0 %3020
  %3022 = vrot.lane.b32.xlu0 %v2835, 32
  %v3023 = vpop.permute.xlu0 %3022
  %3024 = vrot.lane.b32.xlu0 %v2836, 32
  %v3025 = vpop.permute.xlu0 %3024
  %3026 = vrot.lane.b32.xlu0 %v2837, 32
  %v3027 = vpop.permute.xlu0 %3026
  %3028 = vrot.lane.b32.xlu0 %v2838, 32
  %v3029 = vpop.permute.xlu0 %3028
  %3030 = vrot.lane.b32.xlu0 %v2839, 32
  %v3031 = vpop.permute.xlu0 %3030
  %v3096 = vadd.f32 %v2392, %v2905
  %v3097 = vadd.f32 %v2393, %v2907
  %v3098 = vadd.f32 %v2394, %v2909
  %v3099 = vadd.f32 %v2395, %v2911
  %v3100 = vadd.f32 %v2396, %v2913
  %v3101 = vadd.f32 %v2397, %v2915
  %v3102 = vadd.f32 %v2398, %v2917
  %v3103 = vadd.f32 %v2399, %v2919
  %v3104 = vadd.f32 %v2400, %v2921
  %v3105 = vadd.f32 %v2401, %v2923
  %v3106 = vadd.f32 %v2402, %v2925
  %v3107 = vadd.f32 %v2403, %v2927
  %v3108 = vadd.f32 %v2404, %v2929
  %v3109 = vadd.f32 %v2405, %v2931
  %v3110 = vadd.f32 %v2406, %v2933
  %v3111 = vadd.f32 %v2407, %v2935
  %v3112 = vadd.f32 %v2408, %v2937
  %v3113 = vadd.f32 %v2409, %v2939
  %v3114 = vadd.f32 %v2410, %v2941
  %v3115 = vadd.f32 %v2411, %v2943
  %v3116 = vadd.f32 %v2412, %v2945
  %v3117 = vadd.f32 %v2413, %v2947
  %v3118 = vadd.f32 %v2414, %v2949
  %v3119 = vadd.f32 %v2415, %v2951
  %v3120 = vadd.f32 %v2416, %v2953
  %v3121 = vadd.f32 %v2417, %v2955
  %v3122 = vadd.f32 %v2418, %v2957
  %v3123 = vadd.f32 %v2419, %v2959
  %v3124 = vadd.f32 %v2420, %v2961
  %v3125 = vadd.f32 %v2421, %v2963
  %v3126 = vadd.f32 %v2422, %v2965
  %v3127 = vadd.f32 %v2423, %v2967
  %v3128 = vadd.f32 %v2424, %v2969
  %v3129 = vadd.f32 %v2425, %v2971
  %v3130 = vadd.f32 %v2426, %v2973
  %v3131 = vadd.f32 %v2427, %v2975
  %v3132 = vadd.f32 %v2428, %v2977
  %v3133 = vadd.f32 %v2429, %v2979
  %v3134 = vadd.f32 %v2430, %v2981
  %v3135 = vadd.f32 %v2431, %v2983
  %v3136 = vadd.f32 %v2432, %v2985
  %v3137 = vadd.f32 %v2433, %v2987
  %v3138 = vadd.f32 %v2434, %v2989
  %v3139 = vadd.f32 %v2435, %v2991
  %v3140 = vadd.f32 %v2436, %v2993
  %v3141 = vadd.f32 %v2437, %v2995
  %v3142 = vadd.f32 %v2438, %v2997
  %v3143 = vadd.f32 %v2439, %v2999
  %v3144 = vadd.f32 %v2440, %v3001
  %v3145 = vadd.f32 %v2441, %v3003
  %v3146 = vadd.f32 %v2442, %v3005
  %v3147 = vadd.f32 %v2443, %v3007
  %v3148 = vadd.f32 %v2444, %v3009
  %v3149 = vadd.f32 %v2445, %v3011
  %v3150 = vadd.f32 %v2446, %v3013
  %v3151 = vadd.f32 %v2447, %v3015
  %v3152 = vadd.f32 %v2448, %v3017
  %v3153 = vadd.f32 %v2449, %v3019
  %v3154 = vadd.f32 %v2450, %v3021
  %v3155 = vadd.f32 %v2451, %v3023
  %v3156 = vadd.f32 %v2452, %v3025
  %v3157 = vadd.f32 %v2453, %v3027
  %v3158 = vadd.f32 %v2454, %v3029
  %v3159 = vadd.f32 %v2455, %v3031
  %v3160 = vld [vmem:[%s4] sm:$0xff]
  %v3161 = vld [vmem:[%s4 + $0x8] sm:$0xff]
  %v3162 = vld [vmem:[%s4 + $0x10] sm:$0xff]
  %v3163 = vld [vmem:[%s4 + $0x18] sm:$0xff]
  %v3164 = vld [vmem:[%s4 + $0x20] sm:$0xff]
  %v3165 = vld [vmem:[%s4 + $0x28] sm:$0xff]
  %v3166 = vld [vmem:[%s4 + $0x30] sm:$0xff]
  %v3167 = vld [vmem:[%s4 + $0x38] sm:$0xff]
  %v3168 = vld [vmem:[%s4 + $0x40] sm:$0xff]
  %v3169 = vld [vmem:[%s4 + $0x48] sm:$0xff]
  %v3170 = vld [vmem:[%s4 + $0x50] sm:$0xff]
  %v3171 = vld [vmem:[%s4 + $0x58] sm:$0xff]
  %v3172 = vld [vmem:[%s4 + $0x60] sm:$0xff]
  %v3173 = vld [vmem:[%s4 + $0x68] sm:$0xff]
  %v3174 = vld [vmem:[%s4 + $0x70] sm:$0xff]
  %v3175 = vld [vmem:[%s4 + $0x78] sm:$0xff]
  %v3176 = vld [vmem:[%s4 + $0x80] sm:$0xff]
  %v3177 = vld [vmem:[%s4 + $0x88] sm:$0xff]
  %v3178 = vld [vmem:[%s4 + $0x90] sm:$0xff]
  %v3179 = vld [vmem:[%s4 + $0x98] sm:$0xff]
  %v3180 = vld [vmem:[%s4 + $0xa0] sm:$0xff]
  %v3181 = vld [vmem:[%s4 + $0xa8] sm:$0xff]
  %v3182 = vld [vmem:[%s4 + $0xb0] sm:$0xff]
  %v3183 = vld [vmem:[%s4 + $0xb8] sm:$0xff]
  %v3184 = vld [vmem:[%s4 + $0xc0] sm:$0xff]
  %v3185 = vld [vmem:[%s4 + $0xc8] sm:$0xff]
  %v3186 = vld [vmem:[%s4 + $0xd0] sm:$0xff]
  %v3187 = vld [vmem:[%s4 + $0xd8] sm:$0xff]
  %v3188 = vld [vmem:[%s4 + $0xe0] sm:$0xff]
  %v3189 = vld [vmem:[%s4 + $0xe8] sm:$0xff]
  %v3190 = vld [vmem:[%s4 + $0xf0] sm:$0xff]
  %v3191 = vld [vmem:[%s4 + $0xf8] sm:$0xff]
  %v3192 = vld [vmem:[%s4 + $0x100] sm:$0xff]
  %v3193 = vld [vmem:[%s4 + $0x108] sm:$0xff]
  %v3194 = vld [vmem:[%s4 + $0x110] sm:$0xff]
  %v3195 = vld [vmem:[%s4 + $0x118] sm:$0xff]
  %v3196 = vld [vmem:[%s4 + $0x120] sm:$0xff]
  %v3197 = vld [vmem:[%s4 + $0x128] sm:$0xff]
  %v3198 = vld [vmem:[%s4 + $0x130] sm:$0xff]
  %v3199 = vld [vmem:[%s4 + $0x138] sm:$0xff]
  %v3200 = vld [vmem:[%s4 + $0x140] sm:$0xff]
  %v3201 = vld [vmem:[%s4 + $0x148] sm:$0xff]
  %v3202 = vld [vmem:[%s4 + $0x150] sm:$0xff]
  %v3203 = vld [vmem:[%s4 + $0x158] sm:$0xff]
  %v3204 = vld [vmem:[%s4 + $0x160] sm:$0xff]
  %v3205 = vld [vmem:[%s4 + $0x168] sm:$0xff]
  %v3206 = vld [vmem:[%s4 + $0x170] sm:$0xff]
  %v3207 = vld [vmem:[%s4 + $0x178] sm:$0xff]
  %v3208 = vld [vmem:[%s4 + $0x180] sm:$0xff]
  %v3209 = vld [vmem:[%s4 + $0x188] sm:$0xff]
  %v3210 = vld [vmem:[%s4 + $0x190] sm:$0xff]
  %v3211 = vld [vmem:[%s4 + $0x198] sm:$0xff]
  %v3212 = vld [vmem:[%s4 + $0x1a0] sm:$0xff]
  %v3213 = vld [vmem:[%s4 + $0x1a8] sm:$0xff]
  %v3214 = vld [vmem:[%s4 + $0x1b0] sm:$0xff]
  %v3215 = vld [vmem:[%s4 + $0x1b8] sm:$0xff]
  %v3216 = vld [vmem:[%s4 + $0x1c0] sm:$0xff]
  %v3217 = vld [vmem:[%s4 + $0x1c8] sm:$0xff]
  %v3218 = vld [vmem:[%s4 + $0x1d0] sm:$0xff]
  %v3219 = vld [vmem:[%s4 + $0x1d8] sm:$0xff]
  %v3220 = vld [vmem:[%s4 + $0x1e0] sm:$0xff]
  %v3221 = vld [vmem:[%s4 + $0x1e8] sm:$0xff]
  %v3222 = vld [vmem:[%s4 + $0x1f0] sm:$0xff]
  %v3223 = vld [vmem:[%s4 + $0x1f8] sm:$0xff]
  %3288 = vrot.lane.b32.xlu0 %v3160, 32
  %v3289 = vpop.permute.xlu0 %3288
  %3290 = vrot.lane.b32.xlu0 %v3161, 32
  %v3291 = vpop.permute.xlu0 %3290
  %3292 = vrot.lane.b32.xlu0 %v3162, 32
  %v3293 = vpop.permute.xlu0 %3292
  %3294 = vrot.lane.b32.xlu0 %v3163, 32
  %v3295 = vpop.permute.xlu0 %3294
  %3296 = vrot.lane.b32.xlu0 %v3164, 32
  %v3297 = vpop.permute.xlu0 %3296
  %3298 = vrot.lane.b32.xlu0 %v3165, 32
  %v3299 = vpop.permute.xlu0 %3298
  %3300 = vrot.lane.b32.xlu0 %v3166, 32
  %v3301 = vpop.permute.xlu0 %3300
  %3302 = vrot.lane.b32.xlu0 %v3167, 32
  %v3303 = vpop.permute.xlu0 %3302
  %3304 = vrot.lane.b32.xlu0 %v3168, 32
  %v3305 = vpop.permute.xlu0 %3304
  %3306 = vrot.lane.b32.xlu0 %v3169, 32
  %v3307 = vpop.permute.xlu0 %3306
  %3308 = vrot.lane.b32.xlu0 %v3170, 32
  %v3309 = vpop.permute.xlu0 %3308
  %3310 = vrot.lane.b32.xlu0 %v3171, 32
  %v3311 = vpop.permute.xlu0 %3310
  %3312 = vrot.lane.b32.xlu0 %v3172, 32
  %v3313 = vpop.permute.xlu0 %3312
  %3314 = vrot.lane.b32.xlu0 %v3173, 32
  %v3315 = vpop.permute.xlu0 %3314
  %3316 = vrot.lane.b32.xlu0 %v3174, 32
  %v3317 = vpop.permute.xlu0 %3316
  %3318 = vrot.lane.b32.xlu0 %v3175, 32
  %v3319 = vpop.permute.xlu0 %3318
  %3320 = vrot.lane.b32.xlu0 %v3176, 32
  %v3321 = vpop.permute.xlu0 %3320
  %3322 = vrot.lane.b32.xlu0 %v3177, 32
  %v3323 = vpop.permute.xlu0 %3322
  %3324 = vrot.lane.b32.xlu0 %v3178, 32
  %v3325 = vpop.permute.xlu0 %3324
  %3326 = vrot.lane.b32.xlu0 %v3179, 32
  %v3327 = vpop.permute.xlu0 %3326
  %3328 = vrot.lane.b32.xlu0 %v3180, 32
  %v3329 = vpop.permute.xlu0 %3328
  %3330 = vrot.lane.b32.xlu0 %v3181, 32
  %v3331 = vpop.permute.xlu0 %3330
  %3332 = vrot.lane.b32.xlu0 %v3182, 32
  %v3333 = vpop.permute.xlu0 %3332
  %3334 = vrot.lane.b32.xlu0 %v3183, 32
  %v3335 = vpop.permute.xlu0 %3334
  %3336 = vrot.lane.b32.xlu0 %v3184, 32
  %v3337 = vpop.permute.xlu0 %3336
  %3338 = vrot.lane.b32.xlu0 %v3185, 32
  %v3339 = vpop.permute.xlu0 %3338
  %3340 = vrot.lane.b32.xlu0 %v3186, 32
  %v3341 = vpop.permute.xlu0 %3340
  %3342 = vrot.lane.b32.xlu0 %v3187, 32
  %v3343 = vpop.permute.xlu0 %3342
  %3344 = vrot.lane.b32.xlu0 %v3188, 32
  %v3345 = vpop.permute.xlu0 %3344
  %3346 = vrot.lane.b32.xlu0 %v3189, 32
  %v3347 = vpop.permute.xlu0 %3346
  %3348 = vrot.lane.b32.xlu0 %v3190, 32
  %v3349 = vpop.permute.xlu0 %3348
  %3350 = vrot.lane.b32.xlu0 %v3191, 32
  %v3351 = vpop.permute.xlu0 %3350
  %3352 = vrot.lane.b32.xlu0 %v3192, 32
  %v3353 = vpop.permute.xlu0 %3352
  %3354 = vrot.lane.b32.xlu0 %v3193, 32
  %v3355 = vpop.permute.xlu0 %3354
  %3356 = vrot.lane.b32.xlu0 %v3194, 32
  %v3357 = vpop.permute.xlu0 %3356
  %3358 = vrot.lane.b32.xlu0 %v3195, 32
  %v3359 = vpop.permute.xlu0 %3358
  %3360 = vrot.lane.b32.xlu0 %v3196, 32
  %v3361 = vpop.permute.xlu0 %3360
  %3362 = vrot.lane.b32.xlu0 %v3197, 32
  %v3363 = vpop.permute.xlu0 %3362
  %3364 = vrot.lane.b32.xlu0 %v3198, 32
  %v3365 = vpop.permute.xlu0 %3364
  %3366 = vrot.lane.b32.xlu0 %v3199, 32
  %v3367 = vpop.permute.xlu0 %3366
  %3368 = vrot.lane.b32.xlu0 %v3200, 32
  %v3369 = vpop.permute.xlu0 %3368
  %3370 = vrot.lane.b32.xlu0 %v3201, 32
  %v3371 = vpop.permute.xlu0 %3370
  %3372 = vrot.lane.b32.xlu0 %v3202, 32
  %v3373 = vpop.permute.xlu0 %3372
  %3374 = vrot.lane.b32.xlu0 %v3203, 32
  %v3375 = vpop.permute.xlu0 %3374
  %3376 = vrot.lane.b32.xlu0 %v3204, 32
  %v3377 = vpop.permute.xlu0 %3376
  %3378 = vrot.lane.b32.xlu0 %v3205, 32
  %v3379 = vpop.permute.xlu0 %3378
  %3380 = vrot.lane.b32.xlu0 %v3206, 32
  %v3381 = vpop.permute.xlu0 %3380
  %3382 = vrot.lane.b32.xlu0 %v3207, 32
  %v3383 = vpop.permute.xlu0 %3382
  %3384 = vrot.lane.b32.xlu0 %v3208, 32
  %v3385 = vpop.permute.xlu0 %3384
  %3386 = vrot.lane.b32.xlu0 %v3209, 32
  %v3387 = vpop.permute.xlu0 %3386
  %3388 = vrot.lane.b32.xlu0 %v3210, 32
  %v3389 = vpop.permute.xlu0 %3388
  %3390 = vrot.lane.b32.xlu0 %v3211, 32
  %v3391 = vpop.permute.xlu0 %3390
  %3392 = vrot.lane.b32.xlu0 %v3212, 32
  %v3393 = vpop.permute.xlu0 %3392
  %3394 = vrot.lane.b32.xlu0 %v3213, 32
  %v3395 = vpop.permute.xlu0 %3394
  %3396 = vrot.lane.b32.xlu0 %v3214, 32
  %v3397 = vpop.permute.xlu0 %3396
  %3398 = vrot.lane.b32.xlu0 %v3215, 32
  %v3399 = vpop.permute.xlu0 %3398
  %3400 = vrot.lane.b32.xlu0 %v3216, 32
  %v3401 = vpop.permute.xlu0 %3400
  %3402 = vrot.lane.b32.xlu0 %v3217, 32
  %v3403 = vpop.permute.xlu0 %3402
  %3404 = vrot.lane.b32.xlu0 %v3218, 32
  %v3405 = vpop.permute.xlu0 %3404
  %3406 = vrot.lane.b32.xlu0 %v3219, 32
  %v3407 = vpop.permute.xlu0 %3406
  %3408 = vrot.lane.b32.xlu0 %v3220, 32
  %v3409 = vpop.permute.xlu0 %3408
  %3410 = vrot.lane.b32.xlu0 %v3221, 32
  %v3411 = vpop.permute.xlu0 %3410
  %3412 = vrot.lane.b32.xlu0 %v3222, 32
  %v3413 = vpop.permute.xlu0 %3412
  %3414 = vrot.lane.b32.xlu0 %v3223, 32
  %v3415 = vpop.permute.xlu0 %3414
  %v3480 = vmul.f32 %v3096, %v3289
  %v3481 = vmul.f32 %v3097, %v3291
  %v3482 = vmul.f32 %v3098, %v3293
  %v3483 = vmul.f32 %v3099, %v3295
  %v3484 = vmul.f32 %v3100, %v3297
  %v3485 = vmul.f32 %v3101, %v3299
  %v3486 = vmul.f32 %v3102, %v3301
  %v3487 = vmul.f32 %v3103, %v3303
  %v3488 = vmul.f32 %v3104, %v3305
  %v3489 = vmul.f32 %v3105, %v3307
  %v3490 = vmul.f32 %v3106, %v3309
  %v3491 = vmul.f32 %v3107, %v3311
  %v3492 = vmul.f32 %v3108, %v3313
  %v3493 = vmul.f32 %v3109, %v3315
  %v3494 = vmul.f32 %v3110, %v3317
  %v3495 = vmul.f32 %v3111, %v3319
  %v3496 = vmul.f32 %v3112, %v3321
  %v3497 = vmul.f32 %v3113, %v3323
  %v3498 = vmul.f32 %v3114, %v3325
  %v3499 = vmul.f32 %v3115, %v3327
  %v3500 = vmul.f32 %v3116, %v3329
  %v3501 = vmul.f32 %v3117, %v3331
  %v3502 = vmul.f32 %v3118, %v3333
  %v3503 = vmul.f32 %v3119, %v3335
  %v3504 = vmul.f32 %v3120, %v3337
  %v3505 = vmul.f32 %v3121, %v3339
  %v3506 = vmul.f32 %v3122, %v3341
  %v3507 = vmul.f32 %v3123, %v3343
  %v3508 = vmul.f32 %v3124, %v3345
  %v3509 = vmul.f32 %v3125, %v3347
  %v3510 = vmul.f32 %v3126, %v3349
  %v3511 = vmul.f32 %v3127, %v3351
  %v3512 = vmul.f32 %v3128, %v3353
  %v3513 = vmul.f32 %v3129, %v3355
  %v3514 = vmul.f32 %v3130, %v3357
  %v3515 = vmul.f32 %v3131, %v3359
  %v3516 = vmul.f32 %v3132, %v3361
  %v3517 = vmul.f32 %v3133, %v3363
  %v3518 = vmul.f32 %v3134, %v3365
  %v3519 = vmul.f32 %v3135, %v3367
  %v3520 = vmul.f32 %v3136, %v3369
  %v3521 = vmul.f32 %v3137, %v3371
  %v3522 = vmul.f32 %v3138, %v3373
  %v3523 = vmul.f32 %v3139, %v3375
  %v3524 = vmul.f32 %v3140, %v3377
  %v3525 = vmul.f32 %v3141, %v3379
  %v3526 = vmul.f32 %v3142, %v3381
  %v3527 = vmul.f32 %v3143, %v3383
  %v3528 = vmul.f32 %v3144, %v3385
  %v3529 = vmul.f32 %v3145, %v3387
  %v3530 = vmul.f32 %v3146, %v3389
  %v3531 = vmul.f32 %v3147, %v3391
  %v3532 = vmul.f32 %v3148, %v3393
  %v3533 = vmul.f32 %v3149, %v3395
  %v3534 = vmul.f32 %v3150, %v3397
  %v3535 = vmul.f32 %v3151, %v3399
  %v3536 = vmul.f32 %v3152, %v3401
  %v3537 = vmul.f32 %v3153, %v3403
  %v3538 = vmul.f32 %v3154, %v3405
  %v3539 = vmul.f32 %v3155, %v3407
  %v3540 = vmul.f32 %v3156, %v3409
  %v3541 = vmul.f32 %v3157, %v3411
  %v3542 = vmul.f32 %v3158, %v3413
  %v3543 = vmul.f32 %v3159, %v3415
  %3608 = vrot.lane.b32.xlu0 %v3480, 64
  %v3609 = vpop.permute.xlu0 %3608
  %3610 = vrot.lane.b32.xlu0 %v3481, 64
  %v3611 = vpop.permute.xlu0 %3610
  %3612 = vrot.lane.b32.xlu0 %v3482, 64
  %v3613 = vpop.permute.xlu0 %3612
  %3614 = vrot.lane.b32.xlu0 %v3483, 64
  %v3615 = vpop.permute.xlu0 %3614
  %3616 = vrot.lane.b32.xlu0 %v3484, 64
  %v3617 = vpop.permute.xlu0 %3616
  %3618 = vrot.lane.b32.xlu0 %v3485, 64
  %v3619 = vpop.permute.xlu0 %3618
  %3620 = vrot.lane.b32.xlu0 %v3486, 64
  %v3621 = vpop.permute.xlu0 %3620
  %3622 = vrot.lane.b32.xlu0 %v3487, 64
  %v3623 = vpop.permute.xlu0 %3622
  %3624 = vrot.lane.b32.xlu0 %v3488, 64
  %v3625 = vpop.permute.xlu0 %3624
  %3626 = vrot.lane.b32.xlu0 %v3489, 64
  %v3627 = vpop.permute.xlu0 %3626
  %3628 = vrot.lane.b32.xlu0 %v3490, 64
  %v3629 = vpop.permute.xlu0 %3628
  %3630 = vrot.lane.b32.xlu0 %v3491, 64
  %v3631 = vpop.permute.xlu0 %3630
  %3632 = vrot.lane.b32.xlu0 %v3492, 64
  %v3633 = vpop.permute.xlu0 %3632
  %3634 = vrot.lane.b32.xlu0 %v3493, 64
  %v3635 = vpop.permute.xlu0 %3634
  %3636 = vrot.lane.b32.xlu0 %v3494, 64
  %v3637 = vpop.permute.xlu0 %3636
  %3638 = vrot.lane.b32.xlu0 %v3495, 64
  %v3639 = vpop.permute.xlu0 %3638
  %3640 = vrot.lane.b32.xlu0 %v3496, 64
  %v3641 = vpop.permute.xlu0 %3640
  %3642 = vrot.lane.b32.xlu0 %v3497, 64
  %v3643 = vpop.permute.xlu0 %3642
  %3644 = vrot.lane.b32.xlu0 %v3498, 64
  %v3645 = vpop.permute.xlu0 %3644
  %3646 = vrot.lane.b32.xlu0 %v3499, 64
  %v3647 = vpop.permute.xlu0 %3646
  %3648 = vrot.lane.b32.xlu0 %v3500, 64
  %v3649 = vpop.permute.xlu0 %3648
  %3650 = vrot.lane.b32.xlu0 %v3501, 64
  %v3651 = vpop.permute.xlu0 %3650
  %3652 = vrot.lane.b32.xlu0 %v3502, 64
  %v3653 = vpop.permute.xlu0 %3652
  %3654 = vrot.lane.b32.xlu0 %v3503, 64
  %v3655 = vpop.permute.xlu0 %3654
  %3656 = vrot.lane.b32.xlu0 %v3504, 64
  %v3657 = vpop.permute.xlu0 %3656
  %3658 = vrot.lane.b32.xlu0 %v3505, 64
  %v3659 = vpop.permute.xlu0 %3658
  %3660 = vrot.lane.b32.xlu0 %v3506, 64
  %v3661 = vpop.permute.xlu0 %3660
  %3662 = vrot.lane.b32.xlu0 %v3507, 64
  %v3663 = vpop.permute.xlu0 %3662
  %3664 = vrot.lane.b32.xlu0 %v3508, 64
  %v3665 = vpop.permute.xlu0 %3664
  %3666 = vrot.lane.b32.xlu0 %v3509, 64
  %v3667 = vpop.permute.xlu0 %3666
  %3668 = vrot.lane.b32.xlu0 %v3510, 64
  %v3669 = vpop.permute.xlu0 %3668
  %3670 = vrot.lane.b32.xlu0 %v3511, 64
  %v3671 = vpop.permute.xlu0 %3670
  %3672 = vrot.lane.b32.xlu0 %v3512, 64
  %v3673 = vpop.permute.xlu0 %3672
  %3674 = vrot.lane.b32.xlu0 %v3513, 64
  %v3675 = vpop.permute.xlu0 %3674
  %3676 = vrot.lane.b32.xlu0 %v3514, 64
  %v3677 = vpop.permute.xlu0 %3676
  %3678 = vrot.lane.b32.xlu0 %v3515, 64
  %v3679 = vpop.permute.xlu0 %3678
  %3680 = vrot.lane.b32.xlu0 %v3516, 64
  %v3681 = vpop.permute.xlu0 %3680
  %3682 = vrot.lane.b32.xlu0 %v3517, 64
  %v3683 = vpop.permute.xlu0 %3682
  %3684 = vrot.lane.b32.xlu0 %v3518, 64
  %v3685 = vpop.permute.xlu0 %3684
  %3686 = vrot.lane.b32.xlu0 %v3519, 64
  %v3687 = vpop.permute.xlu0 %3686
  %3688 = vrot.lane.b32.xlu0 %v3520, 64
  %v3689 = vpop.permute.xlu0 %3688
  %3690 = vrot.lane.b32.xlu0 %v3521, 64
  %v3691 = vpop.permute.xlu0 %3690
  %3692 = vrot.lane.b32.xlu0 %v3522, 64
  %v3693 = vpop.permute.xlu0 %3692
  %3694 = vrot.lane.b32.xlu0 %v3523, 64
  %v3695 = vpop.permute.xlu0 %3694
  %3696 = vrot.lane.b32.xlu0 %v3524, 64
  %v3697 = vpop.permute.xlu0 %3696
  %3698 = vrot.lane.b32.xlu0 %v3525, 64
  %v3699 = vpop.permute.xlu0 %3698
  %3700 = vrot.lane.b32.xlu0 %v3526, 64
  %v3701 = vpop.permute.xlu0 %3700
  %3702 = vrot.lane.b32.xlu0 %v3527, 64
  %v3703 = vpop.permute.xlu0 %3702
  %3704 = vrot.lane.b32.xlu0 %v3528, 64
  %v3705 = vpop.permute.xlu0 %3704
  %3706 = vrot.lane.b32.xlu0 %v3529, 64
  %v3707 = vpop.permute.xlu0 %3706
  %3708 = vrot.lane.b32.xlu0 %v3530, 64
  %v3709 = vpop.permute.xlu0 %3708
  %3710 = vrot.lane.b32.xlu0 %v3531, 64
  %v3711 = vpop.permute.xlu0 %3710
  %3712 = vrot.lane.b32.xlu0 %v3532, 64
  %v3713 = vpop.permute.xlu0 %3712
  %3714 = vrot.lane.b32.xlu0 %v3533, 64
  %v3715 = vpop.permute.xlu0 %3714
  %3716 = vrot.lane.b32.xlu0 %v3534, 64
  %v3717 = vpop.permute.xlu0 %3716
  %3718 = vrot.lane.b32.xlu0 %v3535, 64
  %v3719 = vpop.permute.xlu0 %3718
  %3720 = vrot.lane.b32.xlu0 %v3536, 64
  %v3721 = vpop.permute.xlu0 %3720
  %3722 = vrot.lane.b32.xlu0 %v3537, 64
  %v3723 = vpop.permute.xlu0 %3722
  %3724 = vrot.lane.b32.xlu0 %v3538, 64
  %v3725 = vpop.permute.xlu0 %3724
  %3726 = vrot.lane.b32.xlu0 %v3539, 64
  %v3727 = vpop.permute.xlu0 %3726
  %3728 = vrot.lane.b32.xlu0 %v3540, 64
  %v3729 = vpop.permute.xlu0 %3728
  %3730 = vrot.lane.b32.xlu0 %v3541, 64
  %v3731 = vpop.permute.xlu0 %3730
  %3732 = vrot.lane.b32.xlu0 %v3542, 64
  %v3733 = vpop.permute.xlu0 %3732
  %3734 = vrot.lane.b32.xlu0 %v3543, 64
  %v3735 = vpop.permute.xlu0 %3734
  %v3800 = vadd.f32 %v1177, %v3609
  %v3801 = vadd.f32 %v1180, %v3611
  %v3802 = vadd.f32 %v1185, %v3613
  %v3803 = vadd.f32 %v1188, %v3615
  %v3804 = vadd.f32 %v1193, %v3617
  %v3805 = vadd.f32 %v1196, %v3619
  %v3806 = vadd.f32 %v1201, %v3621
  %v3807 = vadd.f32 %v1204, %v3623
  %v3808 = vadd.f32 %v1209, %v3625
  %v3809 = vadd.f32 %v1212, %v3627
  %v3810 = vadd.f32 %v1217, %v3629
  %v3811 = vadd.f32 %v1220, %v3631
  %v3812 = vadd.f32 %v1225, %v3633
  %v3813 = vadd.f32 %v1228, %v3635
  %v3814 = vadd.f32 %v1233, %v3637
  %v3815 = vadd.f32 %v1236, %v3639
  %v3816 = vadd.f32 %v1241, %v3641
  %v3817 = vadd.f32 %v1244, %v3643
  %v3818 = vadd.f32 %v1249, %v3645
  %v3819 = vadd.f32 %v1252, %v3647
  %v3820 = vadd.f32 %v1257, %v3649
  %v3821 = vadd.f32 %v1260, %v3651
  %v3822 = vadd.f32 %v1265, %v3653
  %v3823 = vadd.f32 %v1268, %v3655
  %v3824 = vadd.f32 %v1273, %v3657
  %v3825 = vadd.f32 %v1276, %v3659
  %v3826 = vadd.f32 %v1281, %v3661
  %v3827 = vadd.f32 %v1284, %v3663
  %v3828 = vadd.f32 %v1289, %v3665
  %v3829 = vadd.f32 %v1292, %v3667
  %v3830 = vadd.f32 %v1297, %v3669
  %v3831 = vadd.f32 %v1300, %v3671
  %v3832 = vadd.f32 %v1305, %v3673
  %v3833 = vadd.f32 %v1308, %v3675
  %v3834 = vadd.f32 %v1313, %v3677
  %v3835 = vadd.f32 %v1316, %v3679
  %v3836 = vadd.f32 %v1321, %v3681
  %v3837 = vadd.f32 %v1324, %v3683
  %v3838 = vadd.f32 %v1329, %v3685
  %v3839 = vadd.f32 %v1332, %v3687
  %v3840 = vadd.f32 %v1337, %v3689
  %v3841 = vadd.f32 %v1340, %v3691
  %v3842 = vadd.f32 %v1345, %v3693
  %v3843 = vadd.f32 %v1348, %v3695
  %v3844 = vadd.f32 %v1353, %v3697
  %v3845 = vadd.f32 %v1356, %v3699
  %v3846 = vadd.f32 %v1361, %v3701
  %v3847 = vadd.f32 %v1364, %v3703
  %v3848 = vadd.f32 %v1369, %v3705
  %v3849 = vadd.f32 %v1372, %v3707
  %v3850 = vadd.f32 %v1377, %v3709
  %v3851 = vadd.f32 %v1380, %v3711
  %v3852 = vadd.f32 %v1385, %v3713
  %v3853 = vadd.f32 %v1388, %v3715
  %v3854 = vadd.f32 %v1393, %v3717
  %v3855 = vadd.f32 %v1396, %v3719
  %v3856 = vadd.f32 %v1401, %v3721
  %v3857 = vadd.f32 %v1404, %v3723
  %v3858 = vadd.f32 %v1409, %v3725
  %v3859 = vadd.f32 %v1412, %v3727
  %v3860 = vadd.f32 %v1417, %v3729
  %v3861 = vadd.f32 %v1420, %v3731
  %v3862 = vadd.f32 %v1425, %v3733
  %v3863 = vadd.f32 %v1428, %v3735
  %v3864 = vxor.u32 %v3800, 2147483648
  %v3865 = vxor.u32 %v3801, 2147483648
  %v3866 = vxor.u32 %v3802, 2147483648
  %v3867 = vxor.u32 %v3803, 2147483648
  %v3868 = vxor.u32 %v3804, 2147483648
  %v3869 = vxor.u32 %v3805, 2147483648
  %v3870 = vxor.u32 %v3806, 2147483648
  %v3871 = vxor.u32 %v3807, 2147483648
  %v3872 = vxor.u32 %v3808, 2147483648
  %v3873 = vxor.u32 %v3809, 2147483648
  %v3874 = vxor.u32 %v3810, 2147483648
  %v3875 = vxor.u32 %v3811, 2147483648
  %v3876 = vxor.u32 %v3812, 2147483648
  %v3877 = vxor.u32 %v3813, 2147483648
  %v3878 = vxor.u32 %v3814, 2147483648
  %v3879 = vxor.u32 %v3815, 2147483648
  %v3880 = vxor.u32 %v3816, 2147483648
  %v3881 = vxor.u32 %v3817, 2147483648
  %v3882 = vxor.u32 %v3818, 2147483648
  %v3883 = vxor.u32 %v3819, 2147483648
  %v3884 = vxor.u32 %v3820, 2147483648
  %v3885 = vxor.u32 %v3821, 2147483648
  %v3886 = vxor.u32 %v3822, 2147483648
  %v3887 = vxor.u32 %v3823, 2147483648
  %v3888 = vxor.u32 %v3824, 2147483648
  %v3889 = vxor.u32 %v3825, 2147483648
  %v3890 = vxor.u32 %v3826, 2147483648
  %v3891 = vxor.u32 %v3827, 2147483648
  %v3892 = vxor.u32 %v3828, 2147483648
  %v3893 = vxor.u32 %v3829, 2147483648
  %v3894 = vxor.u32 %v3830, 2147483648
  %v3895 = vxor.u32 %v3831, 2147483648
  %v3896 = vxor.u32 %v3832, 2147483648
  %v3897 = vxor.u32 %v3833, 2147483648
  %v3898 = vxor.u32 %v3834, 2147483648
  %v3899 = vxor.u32 %v3835, 2147483648
  %v3900 = vxor.u32 %v3836, 2147483648
  %v3901 = vxor.u32 %v3837, 2147483648
  %v3902 = vxor.u32 %v3838, 2147483648
  %v3903 = vxor.u32 %v3839, 2147483648
  %v3904 = vxor.u32 %v3840, 2147483648
  %v3905 = vxor.u32 %v3841, 2147483648
  %v3906 = vxor.u32 %v3842, 2147483648
  %v3907 = vxor.u32 %v3843, 2147483648
  %v3908 = vxor.u32 %v3844, 2147483648
  %v3909 = vxor.u32 %v3845, 2147483648
  %v3910 = vxor.u32 %v3846, 2147483648
  %v3911 = vxor.u32 %v3847, 2147483648
  %v3912 = vxor.u32 %v3848, 2147483648
  %v3913 = vxor.u32 %v3849, 2147483648
  %v3914 = vxor.u32 %v3850, 2147483648
  %v3915 = vxor.u32 %v3851, 2147483648
  %v3916 = vxor.u32 %v3852, 2147483648
  %v3917 = vxor.u32 %v3853, 2147483648
  %v3918 = vxor.u32 %v3854, 2147483648
  %v3919 = vxor.u32 %v3855, 2147483648
  %v3920 = vxor.u32 %v3856, 2147483648
  %v3921 = vxor.u32 %v3857, 2147483648
  %v3922 = vxor.u32 %v3858, 2147483648
  %v3923 = vxor.u32 %v3859, 2147483648
  %v3924 = vxor.u32 %v3860, 2147483648
  %v3925 = vxor.u32 %v3861, 2147483648
  %v3926 = vxor.u32 %v3862, 2147483648
  %v3927 = vxor.u32 %v3863, 2147483648
  %v3928 = vmul.f32 %v3864, 1.442695
  %v3929 = vpow.pop %v3928
  %v3930 = vmul.f32 %v3865, 1.442695
  %v3931 = vpow.pop %v3930
  %v3932 = vmul.f32 %v3866, 1.442695
  %v3933 = vpow.pop %v3932
  %v3934 = vmul.f32 %v3867, 1.442695
  %v3935 = vpow.pop %v3934
  %v3936 = vmul.f32 %v3868, 1.442695
  %v3937 = vpow.pop %v3936
  %v3938 = vmul.f32 %v3869, 1.442695
  %v3939 = vpow.pop %v3938
  %v3940 = vmul.f32 %v3870, 1.442695
  %v3941 = vpow.pop %v3940
  %v3942 = vmul.f32 %v3871, 1.442695
  %v3943 = vpow.pop %v3942
  %v3944 = vmul.f32 %v3872, 1.442695
  %v3945 = vpow.pop %v3944
  %v3946 = vmul.f32 %v3873, 1.442695
  %v3947 = vpow.pop %v3946
  %v3948 = vmul.f32 %v3874, 1.442695
  %v3949 = vpow.pop %v3948
  %v3950 = vmul.f32 %v3875, 1.442695
  %v3951 = vpow.pop %v3950
  %v3952 = vmul.f32 %v3876, 1.442695
  %v3953 = vpow.pop %v3952
  %v3954 = vmul.f32 %v3877, 1.442695
  %v3955 = vpow.pop %v3954
  %v3956 = vmul.f32 %v3878, 1.442695
  %v3957 = vpow.pop %v3956
  %v3958 = vmul.f32 %v3879, 1.442695
  %v3959 = vpow.pop %v3958
  %v3960 = vmul.f32 %v3880, 1.442695
  %v3961 = vpow.pop %v3960
  %v3962 = vmul.f32 %v3881, 1.442695
  %v3963 = vpow.pop %v3962
  %v3964 = vmul.f32 %v3882, 1.442695
  %v3965 = vpow.pop %v3964
  %v3966 = vmul.f32 %v3883, 1.442695
  %v3967 = vpow.pop %v3966
  %v3968 = vmul.f32 %v3884, 1.442695
  %v3969 = vpow.pop %v3968
  %v3970 = vmul.f32 %v3885, 1.442695
  %v3971 = vpow.pop %v3970
  %v3972 = vmul.f32 %v3886, 1.442695
  %v3973 = vpow.pop %v3972
  %v3974 = vmul.f32 %v3887, 1.442695
  %v3975 = vpow.pop %v3974
  %v3976 = vmul.f32 %v3888, 1.442695
  %v3977 = vpow.pop %v3976
  %v3978 = vmul.f32 %v3889, 1.442695
  %v3979 = vpow.pop %v3978
  %v3980 = vmul.f32 %v3890, 1.442695
  %v3981 = vpow.pop %v3980
  %v3982 = vmul.f32 %v3891, 1.442695
  %v3983 = vpow.pop %v3982
  %v3984 = vmul.f32 %v3892, 1.442695
  %v3985 = vpow.pop %v3984
  %v3986 = vmul.f32 %v3893, 1.442695
  %v3987 = vpow.pop %v3986
  %v3988 = vmul.f32 %v3894, 1.442695
  %v3989 = vpow.pop %v3988
  %v3990 = vmul.f32 %v3895, 1.442695
  %v3991 = vpow.pop %v3990
  %v3992 = vmul.f32 %v3896, 1.442695
  %v3993 = vpow.pop %v3992
  %v3994 = vmul.f32 %v3897, 1.442695
  %v3995 = vpow.pop %v3994
  %v3996 = vmul.f32 %v3898, 1.442695
  %v3997 = vpow.pop %v3996
  %v3998 = vmul.f32 %v3899, 1.442695
  %v3999 = vpow.pop %v3998
  %v4000 = vmul.f32 %v3900, 1.442695
  %v4001 = vpow.pop %v4000
  %v4002 = vmul.f32 %v3901, 1.442695
  %v4003 = vpow.pop %v4002
  %v4004 = vmul.f32 %v3902, 1.442695
  %v4005 = vpow.pop %v4004
  %v4006 = vmul.f32 %v3903, 1.442695
  %v4007 = vpow.pop %v4006
  %v4008 = vmul.f32 %v3904, 1.442695
  %v4009 = vpow.pop %v4008
  %v4010 = vmul.f32 %v3905, 1.442695
  %v4011 = vpow.pop %v4010
  %v4012 = vmul.f32 %v3906, 1.442695
  %v4013 = vpow.pop %v4012
  %v4014 = vmul.f32 %v3907, 1.442695
  %v4015 = vpow.pop %v4014
  %v4016 = vmul.f32 %v3908, 1.442695
  %v4017 = vpow.pop %v4016
  %v4018 = vmul.f32 %v3909, 1.442695
  %v4019 = vpow.pop %v4018
  %v4020 = vmul.f32 %v3910, 1.442695
  %v4021 = vpow.pop %v4020
  %v4022 = vmul.f32 %v3911, 1.442695
  %v4023 = vpow.pop %v4022
  %v4024 = vmul.f32 %v3912, 1.442695
  %v4025 = vpow.pop %v4024
  %v4026 = vmul.f32 %v3913, 1.442695
  %v4027 = vpow.pop %v4026
  %v4028 = vmul.f32 %v3914, 1.442695
  %v4029 = vpow.pop %v4028
  %v4030 = vmul.f32 %v3915, 1.442695
  %v4031 = vpow.pop %v4030
  %v4032 = vmul.f32 %v3916, 1.442695
  %v4033 = vpow.pop %v4032
  %v4034 = vmul.f32 %v3917, 1.442695
  %v4035 = vpow.pop %v4034
  %v4036 = vmul.f32 %v3918, 1.442695
  %v4037 = vpow.pop %v4036
  %v4038 = vmul.f32 %v3919, 1.442695
  %v4039 = vpow.pop %v4038
  %v4040 = vmul.f32 %v3920, 1.442695
  %v4041 = vpow.pop %v4040
  %v4042 = vmul.f32 %v3921, 1.442695
  %v4043 = vpow.pop %v4042
  %v4044 = vmul.f32 %v3922, 1.442695
  %v4045 = vpow.pop %v4044
  %v4046 = vmul.f32 %v3923, 1.442695
  %v4047 = vpow.pop %v4046
  %v4048 = vmul.f32 %v3924, 1.442695
  %v4049 = vpow.pop %v4048
  %v4050 = vmul.f32 %v3925, 1.442695
  %v4051 = vpow.pop %v4050
  %v4052 = vmul.f32 %v3926, 1.442695
  %v4053 = vpow.pop %v4052
  %v4054 = vmul.f32 %v3927, 1.442695
  %v4055 = vpow.pop %v4054
  %v4056 = vadd.f32 %v3929, 1.0
  %v4057 = vadd.f32 %v3931, 1.0
  %v4058 = vadd.f32 %v3933, 1.0
  %v4059 = vadd.f32 %v3935, 1.0
  %v4060 = vadd.f32 %v3937, 1.0
  %v4061 = vadd.f32 %v3939, 1.0
  %v4062 = vadd.f32 %v3941, 1.0
  %v4063 = vadd.f32 %v3943, 1.0
  %v4064 = vadd.f32 %v3945, 1.0
  %v4065 = vadd.f32 %v3947, 1.0
  %v4066 = vadd.f32 %v3949, 1.0
  %v4067 = vadd.f32 %v3951, 1.0
  %v4068 = vadd.f32 %v3953, 1.0
  %v4069 = vadd.f32 %v3955, 1.0
  %v4070 = vadd.f32 %v3957, 1.0
  %v4071 = vadd.f32 %v3959, 1.0
  %v4072 = vadd.f32 %v3961, 1.0
  %v4073 = vadd.f32 %v3963, 1.0
  %v4074 = vadd.f32 %v3965, 1.0
  %v4075 = vadd.f32 %v3967, 1.0
  %v4076 = vadd.f32 %v3969, 1.0
  %v4077 = vadd.f32 %v3971, 1.0
  %v4078 = vadd.f32 %v3973, 1.0
  %v4079 = vadd.f32 %v3975, 1.0
  %v4080 = vadd.f32 %v3977, 1.0
  %v4081 = vadd.f32 %v3979, 1.0
  %v4082 = vadd.f32 %v3981, 1.0
  %v4083 = vadd.f32 %v3983, 1.0
  %v4084 = vadd.f32 %v3985, 1.0
  %v4085 = vadd.f32 %v3987, 1.0
  %v4086 = vadd.f32 %v3989, 1.0
  %v4087 = vadd.f32 %v3991, 1.0
  %v4088 = vadd.f32 %v3993, 1.0
  %v4089 = vadd.f32 %v3995, 1.0
  %v4090 = vadd.f32 %v3997, 1.0
  %v4091 = vadd.f32 %v3999, 1.0
  %v4092 = vadd.f32 %v4001, 1.0
  %v4093 = vadd.f32 %v4003, 1.0
  %v4094 = vadd.f32 %v4005, 1.0
  %v4095 = vadd.f32 %v4007, 1.0
  %v4096 = vadd.f32 %v4009, 1.0
  %v4097 = vadd.f32 %v4011, 1.0
  %v4098 = vadd.f32 %v4013, 1.0
  %v4099 = vadd.f32 %v4015, 1.0
  %v4100 = vadd.f32 %v4017, 1.0
  %v4101 = vadd.f32 %v4019, 1.0
  %v4102 = vadd.f32 %v4021, 1.0
  %v4103 = vadd.f32 %v4023, 1.0
  %v4104 = vadd.f32 %v4025, 1.0
  %v4105 = vadd.f32 %v4027, 1.0
  %v4106 = vadd.f32 %v4029, 1.0
  %v4107 = vadd.f32 %v4031, 1.0
  %v4108 = vadd.f32 %v4033, 1.0
  %v4109 = vadd.f32 %v4035, 1.0
  %v4110 = vadd.f32 %v4037, 1.0
  %v4111 = vadd.f32 %v4039, 1.0
  %v4112 = vadd.f32 %v4041, 1.0
  %v4113 = vadd.f32 %v4043, 1.0
  %v4114 = vadd.f32 %v4045, 1.0
  %v4115 = vadd.f32 %v4047, 1.0
  %v4116 = vadd.f32 %v4049, 1.0
  %v4117 = vadd.f32 %v4051, 1.0
  %v4118 = vadd.f32 %v4053, 1.0
  %v4119 = vadd.f32 %v4055, 1.0
  %v4120 = vrcp.pop %v4056
  %v4121 = vmul.f32 1.0, %v4120
  %v4122 = vrcp.pop %v4057
  %v4123 = vmul.f32 1.0, %v4122
  %v4124 = vrcp.pop %v4058
  %v4125 = vmul.f32 1.0, %v4124
  %v4126 = vrcp.pop %v4059
  %v4127 = vmul.f32 1.0, %v4126
  %v4128 = vrcp.pop %v4060
  %v4129 = vmul.f32 1.0, %v4128
  %v4130 = vrcp.pop %v4061
  %v4131 = vmul.f32 1.0, %v4130
  %v4132 = vrcp.pop %v4062
  %v4133 = vmul.f32 1.0, %v4132
  %v4134 = vrcp.pop %v4063
  %v4135 = vmul.f32 1.0, %v4134
  %v4136 = vrcp.pop %v4064
  %v4137 = vmul.f32 1.0, %v4136
  %v4138 = vrcp.pop %v4065
  %v4139 = vmul.f32 1.0, %v4138
  %v4140 = vrcp.pop %v4066
  %v4141 = vmul.f32 1.0, %v4140
  %v4142 = vrcp.pop %v4067
  %v4143 = vmul.f32 1.0, %v4142
  %v4144 = vrcp.pop %v4068
  %v4145 = vmul.f32 1.0, %v4144
  %v4146 = vrcp.pop %v4069
  %v4147 = vmul.f32 1.0, %v4146
  %v4148 = vrcp.pop %v4070
  %v4149 = vmul.f32 1.0, %v4148
  %v4150 = vrcp.pop %v4071
  %v4151 = vmul.f32 1.0, %v4150
  %v4152 = vrcp.pop %v4072
  %v4153 = vmul.f32 1.0, %v4152
  %v4154 = vrcp.pop %v4073
  %v4155 = vmul.f32 1.0, %v4154
  %v4156 = vrcp.pop %v4074
  %v4157 = vmul.f32 1.0, %v4156
  %v4158 = vrcp.pop %v4075
  %v4159 = vmul.f32 1.0, %v4158
  %v4160 = vrcp.pop %v4076
  %v4161 = vmul.f32 1.0, %v4160
  %v4162 = vrcp.pop %v4077
  %v4163 = vmul.f32 1.0, %v4162
  %v4164 = vrcp.pop %v4078
  %v4165 = vmul.f32 1.0, %v4164
  %v4166 = vrcp.pop %v4079
  %v4167 = vmul.f32 1.0, %v4166
  %v4168 = vrcp.pop %v4080
  %v4169 = vmul.f32 1.0, %v4168
  %v4170 = vrcp.pop %v4081
  %v4171 = vmul.f32 1.0, %v4170
  %v4172 = vrcp.pop %v4082
  %v4173 = vmul.f32 1.0, %v4172
  %v4174 = vrcp.pop %v4083
  %v4175 = vmul.f32 1.0, %v4174
  %v4176 = vrcp.pop %v4084
  %v4177 = vmul.f32 1.0, %v4176
  %v4178 = vrcp.pop %v4085
  %v4179 = vmul.f32 1.0, %v4178
  %v4180 = vrcp.pop %v4086
  %v4181 = vmul.f32 1.0, %v4180
  %v4182 = vrcp.pop %v4087
  %v4183 = vmul.f32 1.0, %v4182
  %v4184 = vrcp.pop %v4088
  %v4185 = vmul.f32 1.0, %v4184
  %v4186 = vrcp.pop %v4089
  %v4187 = vmul.f32 1.0, %v4186
  %v4188 = vrcp.pop %v4090
  %v4189 = vmul.f32 1.0, %v4188
  %v4190 = vrcp.pop %v4091
  %v4191 = vmul.f32 1.0, %v4190
  %v4192 = vrcp.pop %v4092
  %v4193 = vmul.f32 1.0, %v4192
  %v4194 = vrcp.pop %v4093
  %v4195 = vmul.f32 1.0, %v4194
  %v4196 = vrcp.pop %v4094
  %v4197 = vmul.f32 1.0, %v4196
  %v4198 = vrcp.pop %v4095
  %v4199 = vmul.f32 1.0, %v4198
  %v4200 = vrcp.pop %v4096
  %v4201 = vmul.f32 1.0, %v4200
  %v4202 = vrcp.pop %v4097
  %v4203 = vmul.f32 1.0, %v4202
  %v4204 = vrcp.pop %v4098
  %v4205 = vmul.f32 1.0, %v4204
  %v4206 = vrcp.pop %v4099
  %v4207 = vmul.f32 1.0, %v4206
  %v4208 = vrcp.pop %v4100
  %v4209 = vmul.f32 1.0, %v4208
  %v4210 = vrcp.pop %v4101
  %v4211 = vmul.f32 1.0, %v4210
  %v4212 = vrcp.pop %v4102
  %v4213 = vmul.f32 1.0, %v4212
  %v4214 = vrcp.pop %v4103
  %v4215 = vmul.f32 1.0, %v4214
  %v4216 = vrcp.pop %v4104
  %v4217 = vmul.f32 1.0, %v4216
  %v4218 = vrcp.pop %v4105
  %v4219 = vmul.f32 1.0, %v4218
  %v4220 = vrcp.pop %v4106
  %v4221 = vmul.f32 1.0, %v4220
  %v4222 = vrcp.pop %v4107
  %v4223 = vmul.f32 1.0, %v4222
  %v4224 = vrcp.pop %v4108
  %v4225 = vmul.f32 1.0, %v4224
  %v4226 = vrcp.pop %v4109
  %v4227 = vmul.f32 1.0, %v4226
  %v4228 = vrcp.pop %v4110
  %v4229 = vmul.f32 1.0, %v4228
  %v4230 = vrcp.pop %v4111
  %v4231 = vmul.f32 1.0, %v4230
  %v4232 = vrcp.pop %v4112
  %v4233 = vmul.f32 1.0, %v4232
  %v4234 = vrcp.pop %v4113
  %v4235 = vmul.f32 1.0, %v4234
  %v4236 = vrcp.pop %v4114
  %v4237 = vmul.f32 1.0, %v4236
  %v4238 = vrcp.pop %v4115
  %v4239 = vmul.f32 1.0, %v4238
  %v4240 = vrcp.pop %v4116
  %v4241 = vmul.f32 1.0, %v4240
  %v4242 = vrcp.pop %v4117
  %v4243 = vmul.f32 1.0, %v4242
  %v4244 = vrcp.pop %v4118
  %v4245 = vmul.f32 1.0, %v4244
  %v4246 = vrcp.pop %v4119
  %v4247 = vmul.f32 1.0, %v4246
  %v4248 = vtanh.pop %v3096
  %v4249 = vtanh.pop %v3097
  %v4250 = vtanh.pop %v3098
  %v4251 = vtanh.pop %v3099
  %v4252 = vtanh.pop %v3100
  %v4253 = vtanh.pop %v3101
  %v4254 = vtanh.pop %v3102
  %v4255 = vtanh.pop %v3103
  %v4256 = vtanh.pop %v3104
  %v4257 = vtanh.pop %v3105
  %v4258 = vtanh.pop %v3106
  %v4259 = vtanh.pop %v3107
  %v4260 = vtanh.pop %v3108
  %v4261 = vtanh.pop %v3109
  %v4262 = vtanh.pop %v3110
  %v4263 = vtanh.pop %v3111
  %v4264 = vtanh.pop %v3112
  %v4265 = vtanh.pop %v3113
  %v4266 = vtanh.pop %v3114
  %v4267 = vtanh.pop %v3115
  %v4268 = vtanh.pop %v3116
  %v4269 = vtanh.pop %v3117
  %v4270 = vtanh.pop %v3118
  %v4271 = vtanh.pop %v3119
  %v4272 = vtanh.pop %v3120
  %v4273 = vtanh.pop %v3121
  %v4274 = vtanh.pop %v3122
  %v4275 = vtanh.pop %v3123
  %v4276 = vtanh.pop %v3124
  %v4277 = vtanh.pop %v3125
  %v4278 = vtanh.pop %v3126
  %v4279 = vtanh.pop %v3127
  %v4280 = vtanh.pop %v3128
  %v4281 = vtanh.pop %v3129
  %v4282 = vtanh.pop %v3130
  %v4283 = vtanh.pop %v3131
  %v4284 = vtanh.pop %v3132
  %v4285 = vtanh.pop %v3133
  %v4286 = vtanh.pop %v3134
  %v4287 = vtanh.pop %v3135
  %v4288 = vtanh.pop %v3136
  %v4289 = vtanh.pop %v3137
  %v4290 = vtanh.pop %v3138
  %v4291 = vtanh.pop %v3139
  %v4292 = vtanh.pop %v3140
  %v4293 = vtanh.pop %v3141
  %v4294 = vtanh.pop %v3142
  %v4295 = vtanh.pop %v3143
  %v4296 = vtanh.pop %v3144
  %v4297 = vtanh.pop %v3145
  %v4298 = vtanh.pop %v3146
  %v4299 = vtanh.pop %v3147
  %v4300 = vtanh.pop %v3148
  %v4301 = vtanh.pop %v3149
  %v4302 = vtanh.pop %v3150
  %v4303 = vtanh.pop %v3151
  %v4304 = vtanh.pop %v3152
  %v4305 = vtanh.pop %v3153
  %v4306 = vtanh.pop %v3154
  %v4307 = vtanh.pop %v3155
  %v4308 = vtanh.pop %v3156
  %v4309 = vtanh.pop %v3157
  %v4310 = vtanh.pop %v3158
  %v4311 = vtanh.pop %v3159
  %4376 = vrot.lane.b32.xlu0 %v4248, 64
  %v4377 = vpop.permute.xlu0 %4376
  %4378 = vrot.lane.b32.xlu0 %v4249, 64
  %v4379 = vpop.permute.xlu0 %4378
  %4380 = vrot.lane.b32.xlu0 %v4250, 64
  %v4381 = vpop.permute.xlu0 %4380
  %4382 = vrot.lane.b32.xlu0 %v4251, 64
  %v4383 = vpop.permute.xlu0 %4382
  %4384 = vrot.lane.b32.xlu0 %v4252, 64
  %v4385 = vpop.permute.xlu0 %4384
  %4386 = vrot.lane.b32.xlu0 %v4253, 64
  %v4387 = vpop.permute.xlu0 %4386
  %4388 = vrot.lane.b32.xlu0 %v4254, 64
  %v4389 = vpop.permute.xlu0 %4388
  %4390 = vrot.lane.b32.xlu0 %v4255, 64
  %v4391 = vpop.permute.xlu0 %4390
  %4392 = vrot.lane.b32.xlu0 %v4256, 64
  %v4393 = vpop.permute.xlu0 %4392
  %4394 = vrot.lane.b32.xlu0 %v4257, 64
  %v4395 = vpop.permute.xlu0 %4394
  %4396 = vrot.lane.b32.xlu0 %v4258, 64
  %v4397 = vpop.permute.xlu0 %4396
  %4398 = vrot.lane.b32.xlu0 %v4259, 64
  %v4399 = vpop.permute.xlu0 %4398
  %4400 = vrot.lane.b32.xlu0 %v4260, 64
  %v4401 = vpop.permute.xlu0 %4400
  %4402 = vrot.lane.b32.xlu0 %v4261, 64
  %v4403 = vpop.permute.xlu0 %4402
  %4404 = vrot.lane.b32.xlu0 %v4262, 64
  %v4405 = vpop.permute.xlu0 %4404
  %4406 = vrot.lane.b32.xlu0 %v4263, 64
  %v4407 = vpop.permute.xlu0 %4406
  %4408 = vrot.lane.b32.xlu0 %v4264, 64
  %v4409 = vpop.permute.xlu0 %4408
  %4410 = vrot.lane.b32.xlu0 %v4265, 64
  %v4411 = vpop.permute.xlu0 %4410
  %4412 = vrot.lane.b32.xlu0 %v4266, 64
  %v4413 = vpop.permute.xlu0 %4412
  %4414 = vrot.lane.b32.xlu0 %v4267, 64
  %v4415 = vpop.permute.xlu0 %4414
  %4416 = vrot.lane.b32.xlu0 %v4268, 64
  %v4417 = vpop.permute.xlu0 %4416
  %4418 = vrot.lane.b32.xlu0 %v4269, 64
  %v4419 = vpop.permute.xlu0 %4418
  %4420 = vrot.lane.b32.xlu0 %v4270, 64
  %v4421 = vpop.permute.xlu0 %4420
  %4422 = vrot.lane.b32.xlu0 %v4271, 64
  %v4423 = vpop.permute.xlu0 %4422
  %4424 = vrot.lane.b32.xlu0 %v4272, 64
  %v4425 = vpop.permute.xlu0 %4424
  %4426 = vrot.lane.b32.xlu0 %v4273, 64
  %v4427 = vpop.permute.xlu0 %4426
  %4428 = vrot.lane.b32.xlu0 %v4274, 64
  %v4429 = vpop.permute.xlu0 %4428
  %4430 = vrot.lane.b32.xlu0 %v4275, 64
  %v4431 = vpop.permute.xlu0 %4430
  %4432 = vrot.lane.b32.xlu0 %v4276, 64
  %v4433 = vpop.permute.xlu0 %4432
  %4434 = vrot.lane.b32.xlu0 %v4277, 64
  %v4435 = vpop.permute.xlu0 %4434
  %4436 = vrot.lane.b32.xlu0 %v4278, 64
  %v4437 = vpop.permute.xlu0 %4436
  %4438 = vrot.lane.b32.xlu0 %v4279, 64
  %v4439 = vpop.permute.xlu0 %4438
  %4440 = vrot.lane.b32.xlu0 %v4280, 64
  %v4441 = vpop.permute.xlu0 %4440
  %4442 = vrot.lane.b32.xlu0 %v4281, 64
  %v4443 = vpop.permute.xlu0 %4442
  %4444 = vrot.lane.b32.xlu0 %v4282, 64
  %v4445 = vpop.permute.xlu0 %4444
  %4446 = vrot.lane.b32.xlu0 %v4283, 64
  %v4447 = vpop.permute.xlu0 %4446
  %4448 = vrot.lane.b32.xlu0 %v4284, 64
  %v4449 = vpop.permute.xlu0 %4448
  %4450 = vrot.lane.b32.xlu0 %v4285, 64
  %v4451 = vpop.permute.xlu0 %4450
  %4452 = vrot.lane.b32.xlu0 %v4286, 64
  %v4453 = vpop.permute.xlu0 %4452
  %4454 = vrot.lane.b32.xlu0 %v4287, 64
  %v4455 = vpop.permute.xlu0 %4454
  %4456 = vrot.lane.b32.xlu0 %v4288, 64
  %v4457 = vpop.permute.xlu0 %4456
  %4458 = vrot.lane.b32.xlu0 %v4289, 64
  %v4459 = vpop.permute.xlu0 %4458
  %4460 = vrot.lane.b32.xlu0 %v4290, 64
  %v4461 = vpop.permute.xlu0 %4460
  %4462 = vrot.lane.b32.xlu0 %v4291, 64
  %v4463 = vpop.permute.xlu0 %4462
  %4464 = vrot.lane.b32.xlu0 %v4292, 64
  %v4465 = vpop.permute.xlu0 %4464
  %4466 = vrot.lane.b32.xlu0 %v4293, 64
  %v4467 = vpop.permute.xlu0 %4466
  %4468 = vrot.lane.b32.xlu0 %v4294, 64
  %v4469 = vpop.permute.xlu0 %4468
  %4470 = vrot.lane.b32.xlu0 %v4295, 64
  %v4471 = vpop.permute.xlu0 %4470
  %4472 = vrot.lane.b32.xlu0 %v4296, 64
  %v4473 = vpop.permute.xlu0 %4472
  %4474 = vrot.lane.b32.xlu0 %v4297, 64
  %v4475 = vpop.permute.xlu0 %4474
  %4476 = vrot.lane.b32.xlu0 %v4298, 64
  %v4477 = vpop.permute.xlu0 %4476
  %4478 = vrot.lane.b32.xlu0 %v4299, 64
  %v4479 = vpop.permute.xlu0 %4478
  %4480 = vrot.lane.b32.xlu0 %v4300, 64
  %v4481 = vpop.permute.xlu0 %4480
  %4482 = vrot.lane.b32.xlu0 %v4301, 64
  %v4483 = vpop.permute.xlu0 %4482
  %4484 = vrot.lane.b32.xlu0 %v4302, 64
  %v4485 = vpop.permute.xlu0 %4484
  %4486 = vrot.lane.b32.xlu0 %v4303, 64
  %v4487 = vpop.permute.xlu0 %4486
  %4488 = vrot.lane.b32.xlu0 %v4304, 64
  %v4489 = vpop.permute.xlu0 %4488
  %4490 = vrot.lane.b32.xlu0 %v4305, 64
  %v4491 = vpop.permute.xlu0 %4490
  %4492 = vrot.lane.b32.xlu0 %v4306, 64
  %v4493 = vpop.permute.xlu0 %4492
  %4494 = vrot.lane.b32.xlu0 %v4307, 64
  %v4495 = vpop.permute.xlu0 %4494
  %4496 = vrot.lane.b32.xlu0 %v4308, 64
  %v4497 = vpop.permute.xlu0 %4496
  %4498 = vrot.lane.b32.xlu0 %v4309, 64
  %v4499 = vpop.permute.xlu0 %4498
  %4500 = vrot.lane.b32.xlu0 %v4310, 64
  %v4501 = vpop.permute.xlu0 %4500
  %4502 = vrot.lane.b32.xlu0 %v4311, 64
  %v4503 = vpop.permute.xlu0 %4502
  %v4568 = vmul.f32 %v4121, %v4377
  %v4569 = vmul.f32 %v4123, %v4379
  %v4570 = vmul.f32 %v4125, %v4381
  %v4571 = vmul.f32 %v4127, %v4383
  %v4572 = vmul.f32 %v4129, %v4385
  %v4573 = vmul.f32 %v4131, %v4387
  %v4574 = vmul.f32 %v4133, %v4389
  %v4575 = vmul.f32 %v4135, %v4391
  %v4576 = vmul.f32 %v4137, %v4393
  %v4577 = vmul.f32 %v4139, %v4395
  %v4578 = vmul.f32 %v4141, %v4397
  %v4579 = vmul.f32 %v4143, %v4399
  %v4580 = vmul.f32 %v4145, %v4401
  %v4581 = vmul.f32 %v4147, %v4403
  %v4582 = vmul.f32 %v4149, %v4405
  %v4583 = vmul.f32 %v4151, %v4407
  %v4584 = vmul.f32 %v4153, %v4409
  %v4585 = vmul.f32 %v4155, %v4411
  %v4586 = vmul.f32 %v4157, %v4413
  %v4587 = vmul.f32 %v4159, %v4415
  %v4588 = vmul.f32 %v4161, %v4417
  %v4589 = vmul.f32 %v4163, %v4419
  %v4590 = vmul.f32 %v4165, %v4421
  %v4591 = vmul.f32 %v4167, %v4423
  %v4592 = vmul.f32 %v4169, %v4425
  %v4593 = vmul.f32 %v4171, %v4427
  %v4594 = vmul.f32 %v4173, %v4429
  %v4595 = vmul.f32 %v4175, %v4431
  %v4596 = vmul.f32 %v4177, %v4433
  %v4597 = vmul.f32 %v4179, %v4435
  %v4598 = vmul.f32 %v4181, %v4437
  %v4599 = vmul.f32 %v4183, %v4439
  %v4600 = vmul.f32 %v4185, %v4441
  %v4601 = vmul.f32 %v4187, %v4443
  %v4602 = vmul.f32 %v4189, %v4445
  %v4603 = vmul.f32 %v4191, %v4447
  %v4604 = vmul.f32 %v4193, %v4449
  %v4605 = vmul.f32 %v4195, %v4451
  %v4606 = vmul.f32 %v4197, %v4453
  %v4607 = vmul.f32 %v4199, %v4455
  %v4608 = vmul.f32 %v4201, %v4457
  %v4609 = vmul.f32 %v4203, %v4459
  %v4610 = vmul.f32 %v4205, %v4461
  %v4611 = vmul.f32 %v4207, %v4463
  %v4612 = vmul.f32 %v4209, %v4465
  %v4613 = vmul.f32 %v4211, %v4467
  %v4614 = vmul.f32 %v4213, %v4469
  %v4615 = vmul.f32 %v4215, %v4471
  %v4616 = vmul.f32 %v4217, %v4473
  %v4617 = vmul.f32 %v4219, %v4475
  %v4618 = vmul.f32 %v4221, %v4477
  %v4619 = vmul.f32 %v4223, %v4479
  %v4620 = vmul.f32 %v4225, %v4481
  %v4621 = vmul.f32 %v4227, %v4483
  %v4622 = vmul.f32 %v4229, %v4485
  %v4623 = vmul.f32 %v4231, %v4487
  %v4624 = vmul.f32 %v4233, %v4489
  %v4625 = vmul.f32 %v4235, %v4491
  %v4626 = vmul.f32 %v4237, %v4493
  %v4627 = vmul.f32 %v4239, %v4495
  %v4628 = vmul.f32 %v4241, %v4497
  %v4629 = vmul.f32 %v4243, %v4499
  %v4630 = vmul.f32 %v4245, %v4501
  %v4631 = vmul.f32 %v4247, %v4503
  %4696 = vrot.lane.b32.xlu0 %v4568, 32
  %v4697 = vpop.permute.xlu0 %4696
  %4698 = vrot.lane.b32.xlu0 %v4569, 32
  %v4699 = vpop.permute.xlu0 %4698
  %4700 = vrot.lane.b32.xlu0 %v4570, 32
  %v4701 = vpop.permute.xlu0 %4700
  %4702 = vrot.lane.b32.xlu0 %v4571, 32
  %v4703 = vpop.permute.xlu0 %4702
  %4704 = vrot.lane.b32.xlu0 %v4572, 32
  %v4705 = vpop.permute.xlu0 %4704
  %4706 = vrot.lane.b32.xlu0 %v4573, 32
  %v4707 = vpop.permute.xlu0 %4706
  %4708 = vrot.lane.b32.xlu0 %v4574, 32
  %v4709 = vpop.permute.xlu0 %4708
  %4710 = vrot.lane.b32.xlu0 %v4575, 32
  %v4711 = vpop.permute.xlu0 %4710
  %4712 = vrot.lane.b32.xlu0 %v4576, 32
  %v4713 = vpop.permute.xlu0 %4712
  %4714 = vrot.lane.b32.xlu0 %v4577, 32
  %v4715 = vpop.permute.xlu0 %4714
  %4716 = vrot.lane.b32.xlu0 %v4578, 32
  %v4717 = vpop.permute.xlu0 %4716
  %4718 = vrot.lane.b32.xlu0 %v4579, 32
  %v4719 = vpop.permute.xlu0 %4718
  %4720 = vrot.lane.b32.xlu0 %v4580, 32
  %v4721 = vpop.permute.xlu0 %4720
  %4722 = vrot.lane.b32.xlu0 %v4581, 32
  %v4723 = vpop.permute.xlu0 %4722
  %4724 = vrot.lane.b32.xlu0 %v4582, 32
  %v4725 = vpop.permute.xlu0 %4724
  %4726 = vrot.lane.b32.xlu0 %v4583, 32
  %v4727 = vpop.permute.xlu0 %4726
  %4728 = vrot.lane.b32.xlu0 %v4584, 32
  %v4729 = vpop.permute.xlu0 %4728
  %4730 = vrot.lane.b32.xlu0 %v4585, 32
  %v4731 = vpop.permute.xlu0 %4730
  %4732 = vrot.lane.b32.xlu0 %v4586, 32
  %v4733 = vpop.permute.xlu0 %4732
  %4734 = vrot.lane.b32.xlu0 %v4587, 32
  %v4735 = vpop.permute.xlu0 %4734
  %4736 = vrot.lane.b32.xlu0 %v4588, 32
  %v4737 = vpop.permute.xlu0 %4736
  %4738 = vrot.lane.b32.xlu0 %v4589, 32
  %v4739 = vpop.permute.xlu0 %4738
  %4740 = vrot.lane.b32.xlu0 %v4590, 32
  %v4741 = vpop.permute.xlu0 %4740
  %4742 = vrot.lane.b32.xlu0 %v4591, 32
  %v4743 = vpop.permute.xlu0 %4742
  %4744 = vrot.lane.b32.xlu0 %v4592, 32
  %v4745 = vpop.permute.xlu0 %4744
  %4746 = vrot.lane.b32.xlu0 %v4593, 32
  %v4747 = vpop.permute.xlu0 %4746
  %4748 = vrot.lane.b32.xlu0 %v4594, 32
  %v4749 = vpop.permute.xlu0 %4748
  %4750 = vrot.lane.b32.xlu0 %v4595, 32
  %v4751 = vpop.permute.xlu0 %4750
  %4752 = vrot.lane.b32.xlu0 %v4596, 32
  %v4753 = vpop.permute.xlu0 %4752
  %4754 = vrot.lane.b32.xlu0 %v4597, 32
  %v4755 = vpop.permute.xlu0 %4754
  %4756 = vrot.lane.b32.xlu0 %v4598, 32
  %v4757 = vpop.permute.xlu0 %4756
  %4758 = vrot.lane.b32.xlu0 %v4599, 32
  %v4759 = vpop.permute.xlu0 %4758
  %4760 = vrot.lane.b32.xlu0 %v4600, 32
  %v4761 = vpop.permute.xlu0 %4760
  %4762 = vrot.lane.b32.xlu0 %v4601, 32
  %v4763 = vpop.permute.xlu0 %4762
  %4764 = vrot.lane.b32.xlu0 %v4602, 32
  %v4765 = vpop.permute.xlu0 %4764
  %4766 = vrot.lane.b32.xlu0 %v4603, 32
  %v4767 = vpop.permute.xlu0 %4766
  %4768 = vrot.lane.b32.xlu0 %v4604, 32
  %v4769 = vpop.permute.xlu0 %4768
  %4770 = vrot.lane.b32.xlu0 %v4605, 32
  %v4771 = vpop.permute.xlu0 %4770
  %4772 = vrot.lane.b32.xlu0 %v4606, 32
  %v4773 = vpop.permute.xlu0 %4772
  %4774 = vrot.lane.b32.xlu0 %v4607, 32
  %v4775 = vpop.permute.xlu0 %4774
  %4776 = vrot.lane.b32.xlu0 %v4608, 32
  %v4777 = vpop.permute.xlu0 %4776
  %4778 = vrot.lane.b32.xlu0 %v4609, 32
  %v4779 = vpop.permute.xlu0 %4778
  %4780 = vrot.lane.b32.xlu0 %v4610, 32
  %v4781 = vpop.permute.xlu0 %4780
  %4782 = vrot.lane.b32.xlu0 %v4611, 32
  %v4783 = vpop.permute.xlu0 %4782
  %4784 = vrot.lane.b32.xlu0 %v4612, 32
  %v4785 = vpop.permute.xlu0 %4784
  %4786 = vrot.lane.b32.xlu0 %v4613, 32
  %v4787 = vpop.permute.xlu0 %4786
  %4788 = vrot.lane.b32.xlu0 %v4614, 32
  %v4789 = vpop.permute.xlu0 %4788
  %4790 = vrot.lane.b32.xlu0 %v4615, 32
  %v4791 = vpop.permute.xlu0 %4790
  %4792 = vrot.lane.b32.xlu0 %v4616, 32
  %v4793 = vpop.permute.xlu0 %4792
  %4794 = vrot.lane.b32.xlu0 %v4617, 32
  %v4795 = vpop.permute.xlu0 %4794
  %4796 = vrot.lane.b32.xlu0 %v4618, 32
  %v4797 = vpop.permute.xlu0 %4796
  %4798 = vrot.lane.b32.xlu0 %v4619, 32
  %v4799 = vpop.permute.xlu0 %4798
  %4800 = vrot.lane.b32.xlu0 %v4620, 32
  %v4801 = vpop.permute.xlu0 %4800
  %4802 = vrot.lane.b32.xlu0 %v4621, 32
  %v4803 = vpop.permute.xlu0 %4802
  %4804 = vrot.lane.b32.xlu0 %v4622, 32
  %v4805 = vpop.permute.xlu0 %4804
  %4806 = vrot.lane.b32.xlu0 %v4623, 32
  %v4807 = vpop.permute.xlu0 %4806
  %4808 = vrot.lane.b32.xlu0 %v4624, 32
  %v4809 = vpop.permute.xlu0 %4808
  %4810 = vrot.lane.b32.xlu0 %v4625, 32
  %v4811 = vpop.permute.xlu0 %4810
  %4812 = vrot.lane.b32.xlu0 %v4626, 32
  %v4813 = vpop.permute.xlu0 %4812
  %4814 = vrot.lane.b32.xlu0 %v4627, 32
  %v4815 = vpop.permute.xlu0 %4814
  %4816 = vrot.lane.b32.xlu0 %v4628, 32
  %v4817 = vpop.permute.xlu0 %4816
  %4818 = vrot.lane.b32.xlu0 %v4629, 32
  %v4819 = vpop.permute.xlu0 %4818
  %4820 = vrot.lane.b32.xlu0 %v4630, 32
  %v4821 = vpop.permute.xlu0 %4820
  %4822 = vrot.lane.b32.xlu0 %v4631, 32
  %v4823 = vpop.permute.xlu0 %4822
  %v4888 = vsel %vm1751, %v4697, %v3096
  %v4889 = vsel %vm1751, %v4699, %v3097
  %v4890 = vsel %vm1751, %v4701, %v3098
  %v4891 = vsel %vm1751, %v4703, %v3099
  %v4892 = vsel %vm1751, %v4705, %v3100
  %v4893 = vsel %vm1751, %v4707, %v3101
  %v4894 = vsel %vm1751, %v4709, %v3102
  %v4895 = vsel %vm1751, %v4711, %v3103
  %v4896 = vsel %vm1751, %v4713, %v3104
  %v4897 = vsel %vm1751, %v4715, %v3105
  %v4898 = vsel %vm1751, %v4717, %v3106
  %v4899 = vsel %vm1751, %v4719, %v3107
  %v4900 = vsel %vm1751, %v4721, %v3108
  %v4901 = vsel %vm1751, %v4723, %v3109
  %v4902 = vsel %vm1751, %v4725, %v3110
  %v4903 = vsel %vm1751, %v4727, %v3111
  %v4904 = vsel %vm1751, %v4729, %v3112
  %v4905 = vsel %vm1751, %v4731, %v3113
  %v4906 = vsel %vm1751, %v4733, %v3114
  %v4907 = vsel %vm1751, %v4735, %v3115
  %v4908 = vsel %vm1751, %v4737, %v3116
  %v4909 = vsel %vm1751, %v4739, %v3117
  %v4910 = vsel %vm1751, %v4741, %v3118
  %v4911 = vsel %vm1751, %v4743, %v3119
  %v4912 = vsel %vm1751, %v4745, %v3120
  %v4913 = vsel %vm1751, %v4747, %v3121
  %v4914 = vsel %vm1751, %v4749, %v3122
  %v4915 = vsel %vm1751, %v4751, %v3123
  %v4916 = vsel %vm1751, %v4753, %v3124
  %v4917 = vsel %vm1751, %v4755, %v3125
  %v4918 = vsel %vm1751, %v4757, %v3126
  %v4919 = vsel %vm1751, %v4759, %v3127
  %v4920 = vsel %vm1751, %v4761, %v3128
  %v4921 = vsel %vm1751, %v4763, %v3129
  %v4922 = vsel %vm1751, %v4765, %v3130
  %v4923 = vsel %vm1751, %v4767, %v3131
  %v4924 = vsel %vm1751, %v4769, %v3132
  %v4925 = vsel %vm1751, %v4771, %v3133
  %v4926 = vsel %vm1751, %v4773, %v3134
  %v4927 = vsel %vm1751, %v4775, %v3135
  %v4928 = vsel %vm1751, %v4777, %v3136
  %v4929 = vsel %vm1751, %v4779, %v3137
  %v4930 = vsel %vm1751, %v4781, %v3138
  %v4931 = vsel %vm1751, %v4783, %v3139
  %v4932 = vsel %vm1751, %v4785, %v3140
  %v4933 = vsel %vm1751, %v4787, %v3141
  %v4934 = vsel %vm1751, %v4789, %v3142
  %v4935 = vsel %vm1751, %v4791, %v3143
  %v4936 = vsel %vm1751, %v4793, %v3144
  %v4937 = vsel %vm1751, %v4795, %v3145
  %v4938 = vsel %vm1751, %v4797, %v3146
  %v4939 = vsel %vm1751, %v4799, %v3147
  %v4940 = vsel %vm1751, %v4801, %v3148
  %v4941 = vsel %vm1751, %v4803, %v3149
  %v4942 = vsel %vm1751, %v4805, %v3150
  %v4943 = vsel %vm1751, %v4807, %v3151
  %v4944 = vsel %vm1751, %v4809, %v3152
  %v4945 = vsel %vm1751, %v4811, %v3153
  %v4946 = vsel %vm1751, %v4813, %v3154
  %v4947 = vsel %vm1751, %v4815, %v3155
  %v4948 = vsel %vm1751, %v4817, %v3156
  %v4949 = vsel %vm1751, %v4819, %v3157
  %v4950 = vsel %vm1751, %v4821, %v3158
  %v4951 = vsel %vm1751, %v4823, %v3159
  %vm4952 = vcmask 523264
  %4953 = vst.msk [vmem:[%s5] sm:$0xff] %vm4952, %v4888
  %4954 = vst.msk [vmem:[%s5 + $0x8] sm:$0xff] %vm4952, %v4889
  %4955 = vst.msk [vmem:[%s5 + $0x10] sm:$0xff] %vm4952, %v4890
  %4956 = vst.msk [vmem:[%s5 + $0x18] sm:$0xff] %vm4952, %v4891
  %4957 = vst.msk [vmem:[%s5 + $0x20] sm:$0xff] %vm4952, %v4892
  %4958 = vst.msk [vmem:[%s5 + $0x28] sm:$0xff] %vm4952, %v4893
  %4959 = vst.msk [vmem:[%s5 + $0x30] sm:$0xff] %vm4952, %v4894
  %4960 = vst.msk [vmem:[%s5 + $0x38] sm:$0xff] %vm4952, %v4895
  %4961 = vst.msk [vmem:[%s5 + $0x40] sm:$0xff] %vm4952, %v4896
  %4962 = vst.msk [vmem:[%s5 + $0x48] sm:$0xff] %vm4952, %v4897
  %4963 = vst.msk [vmem:[%s5 + $0x50] sm:$0xff] %vm4952, %v4898
  %4964 = vst.msk [vmem:[%s5 + $0x58] sm:$0xff] %vm4952, %v4899
  %4965 = vst.msk [vmem:[%s5 + $0x60] sm:$0xff] %vm4952, %v4900
  %4966 = vst.msk [vmem:[%s5 + $0x68] sm:$0xff] %vm4952, %v4901
  %4967 = vst.msk [vmem:[%s5 + $0x70] sm:$0xff] %vm4952, %v4902
  %4968 = vst.msk [vmem:[%s5 + $0x78] sm:$0xff] %vm4952, %v4903
  %4969 = vst.msk [vmem:[%s5 + $0x80] sm:$0xff] %vm4952, %v4904
  %4970 = vst.msk [vmem:[%s5 + $0x88] sm:$0xff] %vm4952, %v4905
  %4971 = vst.msk [vmem:[%s5 + $0x90] sm:$0xff] %vm4952, %v4906
  %4972 = vst.msk [vmem:[%s5 + $0x98] sm:$0xff] %vm4952, %v4907
  %4973 = vst.msk [vmem:[%s5 + $0xa0] sm:$0xff] %vm4952, %v4908
  %4974 = vst.msk [vmem:[%s5 + $0xa8] sm:$0xff] %vm4952, %v4909
  %4975 = vst.msk [vmem:[%s5 + $0xb0] sm:$0xff] %vm4952, %v4910
  %4976 = vst.msk [vmem:[%s5 + $0xb8] sm:$0xff] %vm4952, %v4911
  %4977 = vst.msk [vmem:[%s5 + $0xc0] sm:$0xff] %vm4952, %v4912
  %4978 = vst.msk [vmem:[%s5 + $0xc8] sm:$0xff] %vm4952, %v4913
  %4979 = vst.msk [vmem:[%s5 + $0xd0] sm:$0xff] %vm4952, %v4914
  %4980 = vst.msk [vmem:[%s5 + $0xd8] sm:$0xff] %vm4952, %v4915
  %4981 = vst.msk [vmem:[%s5 + $0xe0] sm:$0xff] %vm4952, %v4916
  %4982 = vst.msk [vmem:[%s5 + $0xe8] sm:$0xff] %vm4952, %v4917
  %4983 = vst.msk [vmem:[%s5 + $0xf0] sm:$0xff] %vm4952, %v4918
  %4984 = vst.msk [vmem:[%s5 + $0xf8] sm:$0xff] %vm4952, %v4919
  %4985 = vst.msk [vmem:[%s5 + $0x100] sm:$0xff] %vm4952, %v4920
  %4986 = vst.msk [vmem:[%s5 + $0x108] sm:$0xff] %vm4952, %v4921
  %4987 = vst.msk [vmem:[%s5 + $0x110] sm:$0xff] %vm4952, %v4922
  %4988 = vst.msk [vmem:[%s5 + $0x118] sm:$0xff] %vm4952, %v4923
  %4989 = vst.msk [vmem:[%s5 + $0x120] sm:$0xff] %vm4952, %v4924
  %4990 = vst.msk [vmem:[%s5 + $0x128] sm:$0xff] %vm4952, %v4925
  %4991 = vst.msk [vmem:[%s5 + $0x130] sm:$0xff] %vm4952, %v4926
  %4992 = vst.msk [vmem:[%s5 + $0x138] sm:$0xff] %vm4952, %v4927
  %4993 = vst.msk [vmem:[%s5 + $0x140] sm:$0xff] %vm4952, %v4928
  %4994 = vst.msk [vmem:[%s5 + $0x148] sm:$0xff] %vm4952, %v4929
  %4995 = vst.msk [vmem:[%s5 + $0x150] sm:$0xff] %vm4952, %v4930
  %4996 = vst.msk [vmem:[%s5 + $0x158] sm:$0xff] %vm4952, %v4931
  %4997 = vst.msk [vmem:[%s5 + $0x160] sm:$0xff] %vm4952, %v4932
  %4998 = vst.msk [vmem:[%s5 + $0x168] sm:$0xff] %vm4952, %v4933
  %4999 = vst.msk [vmem:[%s5 + $0x170] sm:$0xff] %vm4952, %v4934
  %5000 = vst.msk [vmem:[%s5 + $0x178] sm:$0xff] %vm4952, %v4935
  %5001 = vst.msk [vmem:[%s5 + $0x180] sm:$0xff] %vm4952, %v4936
  %5002 = vst.msk [vmem:[%s5 + $0x188] sm:$0xff] %vm4952, %v4937
  %5003 = vst.msk [vmem:[%s5 + $0x190] sm:$0xff] %vm4952, %v4938
  %5004 = vst.msk [vmem:[%s5 + $0x198] sm:$0xff] %vm4952, %v4939
  %5005 = vst.msk [vmem:[%s5 + $0x1a0] sm:$0xff] %vm4952, %v4940
  %5006 = vst.msk [vmem:[%s5 + $0x1a8] sm:$0xff] %vm4952, %v4941
  %5007 = vst.msk [vmem:[%s5 + $0x1b0] sm:$0xff] %vm4952, %v4942
  %5008 = vst.msk [vmem:[%s5 + $0x1b8] sm:$0xff] %vm4952, %v4943
  %5009 = vst.msk [vmem:[%s5 + $0x1c0] sm:$0xff] %vm4952, %v4944
  %5010 = vst.msk [vmem:[%s5 + $0x1c8] sm:$0xff] %vm4952, %v4945
  %5011 = vst.msk [vmem:[%s5 + $0x1d0] sm:$0xff] %vm4952, %v4946
  %5012 = vst.msk [vmem:[%s5 + $0x1d8] sm:$0xff] %vm4952, %v4947
  %5013 = vst.msk [vmem:[%s5 + $0x1e0] sm:$0xff] %vm4952, %v4948
  %5014 = vst.msk [vmem:[%s5 + $0x1e8] sm:$0xff] %vm4952, %v4949
  %5015 = vst.msk [vmem:[%s5 + $0x1f0] sm:$0xff] %vm4952, %v4950
  %5016 = vst.msk [vmem:[%s5 + $0x1f8] sm:$0xff] %vm4952, %v4951
  // Predicated region
  $region22: #{conv_lstm_cell_forward.1} parent=0 // pred_check
    _
  $region23: #{conv_lstm_cell_forward.1} parent=0 // pred_check_branch
    %5018 = sbr.rel (0) target = $region25
  $region24: #{conv_lstm_cell_forward.1} parent=0 // pred_region
    _
  $region25: #{conv_lstm_cell_forward.1} parent=0 // pred_fallthru
    _
  // Predicated region
  $region26: #{conv_lstm_cell_forward.1} parent=0 // pred_check
    _
  $region27: #{conv_lstm_cell_forward.1} parent=0 // pred_check_branch
    %5020 = sbr.rel (0) target = $region29
  $region28: #{conv_lstm_cell_forward.1} parent=0 // pred_region
    _
  $region29: #{conv_lstm_cell_forward.1} parent=0 // pred_fallthru
    _

</llo_original>
